<compile_context>
chip_gen: v7x
topology: tpu7x:2x2x1
jax: 0.10.0
libtpu: 0.0.40
codegen_flags: <defaults>
</compile_context>

<pallas_src>
import functools
import math

import jax
import jax.numpy as jnp
from jax.experimental import pallas as pl
from jax.experimental.pallas import tpu as pltpu

# ----------------------------- config -------------------------------------
B_DEF      = 2     # batch
S_DEF      = 8     # sequence length
D_MODEL    = 32
D_FF       = 64
N_HEAD     = 4
N_LAYERS   = 2
LN_EPS     = 1e-5
NEG_INF    = -1e9
APPROX_RECIP = True


# ----------------------------- kernel --------------------------------------
def encoder_kernel(x_ref, mask_ref, wqkv_ref, wo_ref, w1_ref, w2_ref, vec_ref,
                   out_ref, *, n_layers: int, n_head: int):
    # x_ref    : (Bblk, S, D)   Bblk = 1 (v7x batch grid) or B (fused batch)
    # mask_ref : (Bblk, 1, S)
    # wqkv_ref : (L, D, 3D)  fused [Q*scale | K | V] weights
    # wo_ref   : (L, D, D)
    # w1_ref   : (L, D, Dff)
    # w2_ref   : (L, Dff, D)
    # vec_ref  : (L, 8, W)   rows: bqkv | b1 | bo | ln1_g | ln1_b | b2 | ln2_g | ln2_b
    Bblk, S, D = x_ref.shape
    d_ff = w1_ref.shape[2]
    dh = D // n_head
    M = Bblk * S

    # All B*S rows flattened: projections / FFN use the full sublane height.
    x = x_ref[...].reshape(M, D)

    # Mask bias built ONCE per batch element; explicit (1,S)->(S,S) broadcast
    # hoisted out of the layer/head loops (no re-emitted broadcast_in_dim).
    bias = [jnp.broadcast_to((1.0 - mask_ref[b]) * NEG_INF, (S, S))
            for b in range(Bblk)]

    for l in range(n_layers):                          # static unroll (tiny L)
        wqkv = wqkv_ref[l]                             # (D, 3D)
        wo = wo_ref[l]                                 # (D, D)
        w1 = w1_ref[l]                                 # (D, Dff)
        w2 = w2_ref[l]                                 # (Dff, D)
        vec = vec_ref[l]                               # (8, W)
        bqkv = vec[0:1, :3 * D]
        b1   = vec[1:2, :d_ff]
        bo   = vec[2:3, :D]
        g1   = vec[3:4, :D]
        be1  = vec[4:5, :D]
        b2   = vec[5:6, :D]
        g2   = vec[6:7, :D]
        be2  = vec[7:8, :D]

        # Fused QKV projection on all M rows; 1/sqrt(dh) already folded into
        # the Q columns of wqkv/bqkv host-side.
        qkv = jnp.dot(x, wqkv, preferred_element_type=jnp.float32) + bqkv
        q = qkv[:, 0:D]
        k = qkv[:, D:2 * D]
        v = qkv[:, 2 * D:3 * D]

        attn_parts = []
        for b in range(Bblk):                          # static per-batch loop
            r0 = b * S
            qb = q[r0:r0 + S, :]
            kb = k[r0:r0 + S, :]
            vb = v[r0:r0 + S, :]
            acc = jnp.zeros((S, D), jnp.float32)
            for h in range(n_head):                    # static small head loop
                c0 = h * dh
                qh = qb[:, c0:c0 + dh]                 # (S, dh)
                kh = kb[:, c0:c0 + dh]
                vh = vb[:, c0:c0 + dh]
                # Contract on kh's last dim directly: no materialized kh.T.
                s = jax.lax.dot_general(
                    qh, kh, (((1,), (1,)), ((), ())),
                    preferred_element_type=jnp.float32)        # (S, S)
                s = s + bias[b]
                s = s - jnp.max(s, axis=-1, keepdims=True)
                p = jnp.exp(s)
                denom = jnp.sum(p, axis=-1, keepdims=True)
                if APPROX_RECIP:
                    p = p * pl.reciprocal(denom, approx=True)   # EUP slot
                else:
                    p = p / denom
                oh = jnp.dot(p, vh, preferred_element_type=jnp.float32)  # (S, dh)
                # Per-head accumulation through wo's sublane-aligned row
                # slice: no lane-dim concatenate of head outputs.
                acc = acc + jnp.dot(oh, wo[c0:c0 + dh, :],
                                    preferred_element_type=jnp.float32)
            attn_parts.append(acc)
        attn = attn_parts[0] if Bblk == 1 else jnp.concatenate(attn_parts, axis=0)
        attn = attn + bo                                # (M, D)

        # residual + LayerNorm 1
        y = x + attn
        mu = jnp.mean(y, axis=-1, keepdims=True)
        var = jnp.mean((y - mu) ** 2, axis=-1, keepdims=True)
        y = (y - mu) * jax.lax.rsqrt(var + LN_EPS) * g1 + be1

        # FFN
        ff = jnp.maximum(
            jnp.dot(y, w1, preferred_element_type=jnp.float32) + b1, 0.0)
        ff = jnp.dot(ff, w2, preferred_element_type=jnp.float32) + b2

        # residual + LayerNorm 2
        z = y + ff
        mu2 = jnp.mean(z, axis=-1, keepdims=True)
        var2 = jnp.mean((z - mu2) ** 2, axis=-1, keepdims=True)
        x = (z - mu2) * jax.lax.rsqrt(var2 + LN_EPS) * g2 + be2

    out_ref[...] = x.reshape(Bblk, S, D)


# ----------------------------- host-side param packing ----------------------
def pack_layer_params(layer_params, d_model, d_ff, n_head):
    """Stack per-layer params into a few contiguous arrays (fewer, larger DMAs).

    The attention scale 1/sqrt(dh) is folded into the Q columns of the fused
    QKV weight/bias so the kernel never multiplies by it.
    """
    width = max(3 * d_model, d_ff)
    scale = 1.0 / math.sqrt(d_model // n_head)

    def pad_row(v):  # (1, n) -> (1, width)
        return jnp.pad(v, ((0, 0), (0, width - v.shape[1])))

    wqkv = jnp.stack([jnp.concatenate([p["wq"] * scale, p["wk"], p["wv"]], axis=1)
                      for p in layer_params])                       # (L, D, 3D)
    wo = jnp.stack([p["wo"] for p in layer_params])                 # (L, D, D)
    w1 = jnp.stack([p["w1"] for p in layer_params])                 # (L, D, Dff)
    w2 = jnp.stack([p["w2"] for p in layer_params])                 # (L, Dff, D)
    vecs = jnp.stack([
        jnp.concatenate([
            pad_row(jnp.concatenate([p["bq"] * scale, p["bk"], p["bv"]], axis=1)),
            pad_row(p["b1"]),
            pad_row(p["bo"]),
            pad_row(p["ln1_g"]),
            pad_row(p["ln1_b"]),
            pad_row(p["b2"]),
            pad_row(p["ln2_g"]),
            pad_row(p["ln2_b"]),
        ], axis=0)
        for p in layer_params])                                     # (L, 8, W)
    return wqkv, wo, w1, w2, vecs


# ----------------------------- wrapper --------------------------------------
def _prefers_batch_grid():
    # grid=(B,) + "parallel" only maps to real hardware parallelism on v7x
    # (2 TensorCores/chip).  On v5e/v6e it is a serial loop paying ~0.35us per
    # step with M=8 matmuls, so there we fuse the whole batch into one step.
    try:
        kind = jax.devices()[0].device_kind.lower()
    except Exception:
        return False
    return "v7" in kind


def encoder_pallas(src, src_mask, layer_params, *, n_head=N_HEAD):
    B, S, D = src.shape
    L = len(layer_params)
    d_ff = layer_params[0]["w1"].shape[1]
    wqkv, wo, w1, w2, vecs = pack_layer_params(layer_params, D, d_ff, n_head)

    kernel = functools.partial(encoder_kernel, n_layers=L, n_head=n_head)

    def resident(shape):
        zeros = (0,) * len(shape)
        return pl.BlockSpec(shape, lambda *_: zeros)  # same block every step -> DMA once

    if _prefers_batch_grid() and B > 1:
        # v7x: one batch element per TensorCore.
        grid = (B,)
        x_spec = pl.BlockSpec((1, S, D), lambda b: (b, 0, 0))
        m_spec = pl.BlockSpec((1, 1, S), lambda b: (b, 0, 0))
        o_spec = pl.BlockSpec((1, S, D), lambda b: (b, 0, 0))
        dims = ("parallel",)
    else:
        # v5e / v6e: single grid step, whole batch fused (B*S matmul rows).
        grid = (1,)
        x_spec = pl.BlockSpec((B, S, D), lambda i: (0, 0, 0))
        m_spec = pl.BlockSpec((B, 1, S), lambda i: (0, 0, 0))
        o_spec = pl.BlockSpec((B, S, D), lambda i: (0, 0, 0))
        dims = ("arbitrary",)

    return pl.pallas_call(
        kernel,
        out_shape=jax.ShapeDtypeStruct((B, S, D), jnp.float32),
        grid=grid,
        in_specs=[
            x_spec,                  # x
            m_spec,                  # mask
            resident(wqkv.shape),
            resident(wo.shape),
            resident(w1.shape),
            resident(w2.shape),
            resident(vecs.shape),
        ],
        out_specs=o_spec,
        compiler_params=pltpu.CompilerParams(dimension_semantics=dims),
    )(src, src_mask, wqkv, wo, w1, w2, vecs)


# ----------------------------- pure-JAX reference ---------------------------
def encoder_layer_ref(x, mask, p):
    B, S, D = x.shape
    dh = D // N_HEAD
    bias = (1.0 - mask) * NEG_INF                        # (B, 1, S)

    q = x @ p["wq"] + p["bq"]
    k = x @ p["wk"] + p["bk"]
    v = x @ p["wv"] + p["bv"]

    def split(t):  # (B, S, D) -> (B, H, S, dh)
        return t.reshape(B, S, N_HEAD, dh).transpose(0, 2, 1, 3)

    qh, kh, vh = split(q), split(k), split(v)
    s = jnp.einsum("bhqd,bhkd->bhqk", qh, kh) / math.sqrt(dh)
    s = s + bias[:, None, :, :]
    p_attn = jax.nn.softmax(s, axis=-1)
    o = jnp.einsum("bhqk,bhkd->bhqd", p_attn, vh)
    o = o.transpose(0, 2, 1, 3).reshape(B, S, D)
    o = o @ p["wo"] + p["bo"]

    y = x + o
    mu = y.mean(-1, keepdims=True)
    var = ((y - mu) ** 2).mean(-1, keepdims=True)
    y = (y - mu) * jax.lax.rsqrt(var + LN_EPS) * p["ln1_g"] + p["ln1_b"]

    h = jnp.maximum(y @ p["w1"] + p["b1"], 0.0) @ p["w2"] + p["b2"]
    z = y + h
    mu2 = z.mean(-1, keepdims=True)
    var2 = ((z - mu2) ** 2).mean(-1, keepdims=True)
    return (z - mu2) * jax.lax.rsqrt(var2 + LN_EPS) * p["ln2_g"] + p["ln2_b"]


def encoder_ref(src, src_mask, layer_params):
    x = src
    for p in layer_params:
        x = encoder_layer_ref(x, src_mask, p)
    return x


# ----------------------------- param init -----------------------------------
def init_layer_params(key, d_model, d_ff):
    ks = jax.random.split(key, 6)
    def lin(k, fan_in, fan_out):
        return (jax.random.normal(k, (fan_in, fan_out), jnp.float32)
                * (1.0 / math.sqrt(fan_in)))
    return {
        "wq": lin(ks[0], d_model, d_model), "bq": jnp.zeros((1, d_model), jnp.float32),
        "wk": lin(ks[1], d_model, d_model), "bk": jnp.zeros((1, d_model), jnp.float32),
        "wv": lin(ks[2], d_model, d_model), "bv": jnp.zeros((1, d_model), jnp.float32),
        "wo": lin(ks[3], d_model, d_model), "bo": jnp.zeros((1, d_model), jnp.float32),
        "ln1_g": jnp.ones((1, d_model), jnp.float32),
        "ln1_b": jnp.zeros((1, d_model), jnp.float32),
        "w1": lin(ks[4], d_model, d_ff), "b1": jnp.zeros((1, d_ff), jnp.float32),
        "w2": lin(ks[5], d_ff, d_model), "b2": jnp.zeros((1, d_model), jnp.float32),
        "ln2_g": jnp.ones((1, d_model), jnp.float32),
        "ln2_b": jnp.zeros((1, d_model), jnp.float32),
    }


# ----------------------------- main ------------------------------------------
if __name__ == "__main__":
    key = jax.random.PRNGKey(0)
    k_src, k_params = jax.random.split(key)

    src = jax.random.normal(k_src, (B_DEF, S_DEF, D_MODEL), jnp.float32)
    # mask: last two positions of batch element 1 are padding
    src_mask = jnp.ones((B_DEF, 1, S_DEF), jnp.float32)
    src_mask = src_mask.at[1, 0, -2:].set(0.0)

    layer_keys = jax.random.split(k_params, N_LAYERS)
    layer_params = [init_layer_params(k, D_MODEL, D_FF) for k in layer_keys]

    out = encoder_pallas(src, src_mask, layer_params)
    out = jax.block_until_ready(out)

    ref = encoder_ref(src, src_mask, layer_params)
    assert out.shape == (B_DEF, S_DEF, D_MODEL)
    assert jnp.allclose(out, ref, atol=5e-3, rtol=5e-3), (
        f"max err {jnp.max(jnp.abs(out - ref))}")

    print("KERNEL_OK")
</pallas_src>

<mosaic_0001>
module attributes {stable_mosaic.version = 11 : i64} {
  func.func @encoder_kernel(%arg0: i32, %arg1: memref<2x8x32xf32, #tpu.memory_space<vmem>>, %arg2: memref<2x1x8xf32, #tpu.memory_space<vmem>>, %arg3: memref<2x32x96xf32, #tpu.memory_space<vmem>>, %arg4: memref<2x32x32xf32, #tpu.memory_space<vmem>>, %arg5: memref<2x32x64xf32, #tpu.memory_space<vmem>>, %arg6: memref<2x64x32xf32, #tpu.memory_space<vmem>>, %arg7: memref<2x8x96xf32, #tpu.memory_space<vmem>>, %arg8: memref<2x8x32xf32, #tpu.memory_space<vmem>>) attributes {dimension_semantics = [#tpu.dimension_semantics<arbitrary>], iteration_bounds = array<i64: 1>, scalar_prefetch = 0 : i64, scratch_operands = 0 : i64, tpu.core_type = #tpu.core_type<tc>, window_params = [{pipeline_mode = #tpu.pipeline_mode<synchronous>, transform_indices = @transform_0, window_bounds = array<i64: 2, 8, 32>}, {pipeline_mode = #tpu.pipeline_mode<synchronous>, transform_indices = @transform_1, window_bounds = array<i64: 2, 1, 8>}, {pipeline_mode = #tpu.pipeline_mode<synchronous>, transform_indices = @transform_2, window_bounds = array<i64: 2, 32, 96>}, {pipeline_mode = #tpu.pipeline_mode<synchronous>, transform_indices = @transform_3, window_bounds = array<i64: 2, 32, 32>}, {pipeline_mode = #tpu.pipeline_mode<synchronous>, transform_indices = @transform_4, window_bounds = array<i64: 2, 32, 64>}, {pipeline_mode = #tpu.pipeline_mode<synchronous>, transform_indices = @transform_5, window_bounds = array<i64: 2, 64, 32>}, {pipeline_mode = #tpu.pipeline_mode<synchronous>, transform_indices = @transform_6, window_bounds = array<i64: 2, 8, 96>}, {pipeline_mode = #tpu.pipeline_mode<synchronous>, transform_indices = @transform_7, window_bounds = array<i64: 2, 8, 32>}]} {
    %c0 = arith.constant 0 : index
    %c0_0 = arith.constant 0 : index
    %c0_1 = arith.constant 0 : index
    %0 = vector.load %arg1[%c0, %c0_0, %c0_1] : memref<2x8x32xf32, #tpu.memory_space<vmem>>, vector<2x8x32xf32>
    %1 = vector.shape_cast %0 : vector<2x8x32xf32> to vector<16x32xf32>
    %c0_2 = arith.constant 0 : index
    %c0_3 = arith.constant 0 : index
    %c0_4 = arith.constant 0 : index
    %2 = vector.load %arg2[%c0_2, %c0_3, %c0_4] : memref<2x1x8xf32, #tpu.memory_space<vmem>>, vector<1x1x8xf32>
    %3 = vector.shape_cast %2 : vector<1x1x8xf32> to vector<1x8xf32>
    %cst = arith.constant 1.000000e+00 : f32
    %4 = vector.broadcast %cst : f32 to vector<1x8xf32>
    %5 = arith.subf %4, %3 : vector<1x8xf32>
    %cst_5 = arith.constant -1.000000e+09 : f32
    %6 = vector.broadcast %cst_5 : f32 to vector<1x8xf32>
    %7 = arith.mulf %5, %6 : vector<1x8xf32>
    %8 = vector.shape_cast %7 : vector<1x8xf32> to vector<1x8xf32>
    %9 = vector.broadcast %8 : vector<1x8xf32> to vector<8x8xf32>
    %c1 = arith.constant 1 : index
    %c0_6 = arith.constant 0 : index
    %c0_7 = arith.constant 0 : index
    %10 = vector.load %arg2[%c1, %c0_6, %c0_7] : memref<2x1x8xf32, #tpu.memory_space<vmem>>, vector<1x1x8xf32>
    %11 = vector.shape_cast %10 : vector<1x1x8xf32> to vector<1x8xf32>
    %cst_8 = arith.constant 1.000000e+00 : f32
    %12 = vector.broadcast %cst_8 : f32 to vector<1x8xf32>
    %13 = arith.subf %12, %11 : vector<1x8xf32>
    %cst_9 = arith.constant -1.000000e+09 : f32
    %14 = vector.broadcast %cst_9 : f32 to vector<1x8xf32>
    %15 = arith.mulf %13, %14 : vector<1x8xf32>
    %16 = vector.shape_cast %15 : vector<1x8xf32> to vector<1x8xf32>
    %17 = vector.broadcast %16 : vector<1x8xf32> to vector<8x8xf32>
    %c0_10 = arith.constant 0 : index
    %c0_11 = arith.constant 0 : index
    %c0_12 = arith.constant 0 : index
    %18 = vector.load %arg3[%c0_10, %c0_11, %c0_12] : memref<2x32x96xf32, #tpu.memory_space<vmem>>, vector<1x32x96xf32>
    %19 = vector.shape_cast %18 : vector<1x32x96xf32> to vector<32x96xf32>
    %c0_13 = arith.constant 0 : index
    %c0_14 = arith.constant 0 : index
    %c0_15 = arith.constant 0 : index
    %20 = vector.load %arg4[%c0_13, %c0_14, %c0_15] : memref<2x32x32xf32, #tpu.memory_space<vmem>>, vector<1x32x32xf32>
    %21 = vector.shape_cast %20 : vector<1x32x32xf32> to vector<32x32xf32>
    %c0_16 = arith.constant 0 : index
    %c0_17 = arith.constant 0 : index
    %c0_18 = arith.constant 0 : index
    %22 = vector.load %arg5[%c0_16, %c0_17, %c0_18] : memref<2x32x64xf32, #tpu.memory_space<vmem>>, vector<1x32x64xf32>
    %23 = vector.shape_cast %22 : vector<1x32x64xf32> to vector<32x64xf32>
    %c0_19 = arith.constant 0 : index
    %c0_20 = arith.constant 0 : index
    %c0_21 = arith.constant 0 : index
    %24 = vector.load %arg6[%c0_19, %c0_20, %c0_21] : memref<2x64x32xf32, #tpu.memory_space<vmem>>, vector<1x64x32xf32>
    %25 = vector.shape_cast %24 : vector<1x64x32xf32> to vector<64x32xf32>
    %c0_22 = arith.constant 0 : index
    %c0_23 = arith.constant 0 : index
    %c0_24 = arith.constant 0 : index
    %26 = vector.load %arg7[%c0_22, %c0_23, %c0_24] : memref<2x8x96xf32, #tpu.memory_space<vmem>>, vector<1x8x96xf32>
    %27 = vector.shape_cast %26 : vector<1x8x96xf32> to vector<8x96xf32>
    %28 = vector.extract_strided_slice %27 {offsets = [0, 0], sizes = [1, 96], strides = [1, 1]} : vector<8x96xf32> to vector<1x96xf32>
    %29 = vector.extract_strided_slice %27 {offsets = [1, 0], sizes = [1, 64], strides = [1, 1]} : vector<8x96xf32> to vector<1x64xf32>
    %30 = vector.extract_strided_slice %27 {offsets = [2, 0], sizes = [1, 32], strides = [1, 1]} : vector<8x96xf32> to vector<1x32xf32>
    %31 = vector.extract_strided_slice %27 {offsets = [3, 0], sizes = [1, 32], strides = [1, 1]} : vector<8x96xf32> to vector<1x32xf32>
    %32 = vector.extract_strided_slice %27 {offsets = [4, 0], sizes = [1, 32], strides = [1, 1]} : vector<8x96xf32> to vector<1x32xf32>
    %33 = vector.extract_strided_slice %27 {offsets = [5, 0], sizes = [1, 32], strides = [1, 1]} : vector<8x96xf32> to vector<1x32xf32>
    %34 = vector.extract_strided_slice %27 {offsets = [6, 0], sizes = [1, 32], strides = [1, 1]} : vector<8x96xf32> to vector<1x32xf32>
    %35 = vector.extract_strided_slice %27 {offsets = [7, 0], sizes = [1, 32], strides = [1, 1]} : vector<8x96xf32> to vector<1x32xf32>
    %cst_25 = arith.constant dense<0.000000e+00> : vector<16x96xf32>
    %36 = tpu.matmul %1, %19, %cst_25 {dimension_numbers = #tpu.dot_dimension_numbers<[1], [0], [0], [1], [0, 0, 1, 1], [], []>} : vector<16x32xf32>, vector<32x96xf32>, vector<16x96xf32> -> vector<16x96xf32>
    %37 = vector.broadcast %28 : vector<1x96xf32> to vector<16x96xf32>
    %38 = arith.addf %36, %37 : vector<16x96xf32>
    %39 = vector.extract_strided_slice %38 {offsets = [0, 0], sizes = [16, 32], strides = [1, 1]} : vector<16x96xf32> to vector<16x32xf32>
    %40 = vector.extract_strided_slice %38 {offsets = [0, 32], sizes = [16, 32], strides = [1, 1]} : vector<16x96xf32> to vector<16x32xf32>
    %41 = vector.extract_strided_slice %38 {offsets = [0, 64], sizes = [16, 32], strides = [1, 1]} : vector<16x96xf32> to vector<16x32xf32>
    %42 = vector.extract_strided_slice %39 {offsets = [0, 0], sizes = [8, 32], strides = [1, 1]} : vector<16x32xf32> to vector<8x32xf32>
    %43 = vector.extract_strided_slice %40 {offsets = [0, 0], sizes = [8, 32], strides = [1, 1]} : vector<16x32xf32> to vector<8x32xf32>
    %44 = vector.extract_strided_slice %41 {offsets = [0, 0], sizes = [8, 32], strides = [1, 1]} : vector<16x32xf32> to vector<8x32xf32>
    %cst_26 = arith.constant 0.000000e+00 : f32
    %45 = vector.broadcast %cst_26 : f32 to vector<8x32xf32>
    %46 = vector.extract_strided_slice %42 {offsets = [0, 0], sizes = [8, 8], strides = [1, 1]} : vector<8x32xf32> to vector<8x8xf32>
    %47 = vector.extract_strided_slice %43 {offsets = [0, 0], sizes = [8, 8], strides = [1, 1]} : vector<8x32xf32> to vector<8x8xf32>
    %48 = vector.extract_strided_slice %44 {offsets = [0, 0], sizes = [8, 8], strides = [1, 1]} : vector<8x32xf32> to vector<8x8xf32>
    %cst_27 = arith.constant dense<0.000000e+00> : vector<8x8xf32>
    %49 = tpu.matmul %46, %47, %cst_27 {dimension_numbers = #tpu.dot_dimension_numbers<[1], [1], [0], [0], [0, 0, 1, 0], [], []>} : vector<8x8xf32>, vector<8x8xf32>, vector<8x8xf32> -> vector<8x8xf32>
    %50 = arith.addf %49, %9 : vector<8x8xf32>
    %cst_28 = arith.constant dense<0xFF800000> : vector<8xf32>
    %51 = vector.multi_reduction <maximumf>, %50, %cst_28 [1] : vector<8x8xf32> to vector<8xf32>
    %52 = vector.shape_cast %51 : vector<8xf32> to vector<8x1xf32>
    %53 = vector.broadcast %52 : vector<8x1xf32> to vector<8x8xf32>
    %54 = arith.subf %50, %53 : vector<8x8xf32>
    %55 = math.exp %54 : vector<8x8xf32>
    %cst_29 = arith.constant dense<0.000000e+00> : vector<8xf32>
    %56 = vector.multi_reduction <add>, %55, %cst_29 [1] : vector<8x8xf32> to vector<8xf32>
    %57 = vector.shape_cast %56 : vector<8xf32> to vector<8x1xf32>
    %58 = tpu.reciprocal %57 {approx = true} : vector<8x1xf32> -> vector<8x1xf32>
    %59 = vector.broadcast %58 : vector<8x1xf32> to vector<8x8xf32>
    %60 = arith.mulf %55, %59 : vector<8x8xf32>
    %cst_30 = arith.constant dense<0.000000e+00> : vector<8x8xf32>
    %61 = tpu.matmul %60, %48, %cst_30 {dimension_numbers = #tpu.dot_dimension_numbers<[1], [0], [0], [1], [0, 0, 1, 1], [], []>} : vector<8x8xf32>, vector<8x8xf32>, vector<8x8xf32> -> vector<8x8xf32>
    %62 = vector.extract_strided_slice %21 {offsets = [0, 0], sizes = [8, 32], strides = [1, 1]} : vector<32x32xf32> to vector<8x32xf32>
    %cst_31 = arith.constant dense<0.000000e+00> : vector<8x32xf32>
    %63 = tpu.matmul %61, %62, %cst_31 {dimension_numbers = #tpu.dot_dimension_numbers<[1], [0], [0], [1], [0, 0, 1, 1], [], []>} : vector<8x8xf32>, vector<8x32xf32>, vector<8x32xf32> -> vector<8x32xf32>
    %64 = arith.addf %45, %63 : vector<8x32xf32>
    %65 = vector.extract_strided_slice %42 {offsets = [0, 8], sizes = [8, 8], strides = [1, 1]} : vector<8x32xf32> to vector<8x8xf32>
    %66 = vector.extract_strided_slice %43 {offsets = [0, 8], sizes = [8, 8], strides = [1, 1]} : vector<8x32xf32> to vector<8x8xf32>
    %67 = vector.extract_strided_slice %44 {offsets = [0, 8], sizes = [8, 8], strides = [1, 1]} : vector<8x32xf32> to vector<8x8xf32>
    %cst_32 = arith.constant dense<0.000000e+00> : vector<8x8xf32>
    %68 = tpu.matmul %65, %66, %cst_32 {dimension_numbers = #tpu.dot_dimension_numbers<[1], [1], [0], [0], [0, 0, 1, 0], [], []>} : vector<8x8xf32>, vector<8x8xf32>, vector<8x8xf32> -> vector<8x8xf32>
    %69 = arith.addf %68, %9 : vector<8x8xf32>
    %cst_33 = arith.constant dense<0xFF800000> : vector<8xf32>
    %70 = vector.multi_reduction <maximumf>, %69, %cst_33 [1] : vector<8x8xf32> to vector<8xf32>
    %71 = vector.shape_cast %70 : vector<8xf32> to vector<8x1xf32>
    %72 = vector.broadcast %71 : vector<8x1xf32> to vector<8x8xf32>
    %73 = arith.subf %69, %72 : vector<8x8xf32>
    %74 = math.exp %73 : vector<8x8xf32>
    %cst_34 = arith.constant dense<0.000000e+00> : vector<8xf32>
    %75 = vector.multi_reduction <add>, %74, %cst_34 [1] : vector<8x8xf32> to vector<8xf32>
    %76 = vector.shape_cast %75 : vector<8xf32> to vector<8x1xf32>
    %77 = tpu.reciprocal %76 {approx = true} : vector<8x1xf32> -> vector<8x1xf32>
    %78 = vector.broadcast %77 : vector<8x1xf32> to vector<8x8xf32>
    %79 = arith.mulf %74, %78 : vector<8x8xf32>
    %cst_35 = arith.constant dense<0.000000e+00> : vector<8x8xf32>
    %80 = tpu.matmul %79, %67, %cst_35 {dimension_numbers = #tpu.dot_dimension_numbers<[1], [0], [0], [1], [0, 0, 1, 1], [], []>} : vector<8x8xf32>, vector<8x8xf32>, vector<8x8xf32> -> vector<8x8xf32>
    %81 = vector.extract_strided_slice %21 {offsets = [8, 0], sizes = [8, 32], strides = [1, 1]} : vector<32x32xf32> to vector<8x32xf32>
    %cst_36 = arith.constant dense<0.000000e+00> : vector<8x32xf32>
    %82 = tpu.matmul %80, %81, %cst_36 {dimension_numbers = #tpu.dot_dimension_numbers<[1], [0], [0], [1], [0, 0, 1, 1], [], []>} : vector<8x8xf32>, vector<8x32xf32>, vector<8x32xf32> -> vector<8x32xf32>
    %83 = arith.addf %64, %82 : vector<8x32xf32>
    %84 = vector.extract_strided_slice %42 {offsets = [0, 16], sizes = [8, 8], strides = [1, 1]} : vector<8x32xf32> to vector<8x8xf32>
    %85 = vector.extract_strided_slice %43 {offsets = [0, 16], sizes = [8, 8], strides = [1, 1]} : vector<8x32xf32> to vector<8x8xf32>
    %86 = vector.extract_strided_slice %44 {offsets = [0, 16], sizes = [8, 8], strides = [1, 1]} : vector<8x32xf32> to vector<8x8xf32>
    %cst_37 = arith.constant dense<0.000000e+00> : vector<8x8xf32>
    %87 = tpu.matmul %84, %85, %cst_37 {dimension_numbers = #tpu.dot_dimension_numbers<[1], [1], [0], [0], [0, 0, 1, 0], [], []>} : vector<8x8xf32>, vector<8x8xf32>, vector<8x8xf32> -> vector<8x8xf32>
    %88 = arith.addf %87, %9 : vector<8x8xf32>
    %cst_38 = arith.constant dense<0xFF800000> : vector<8xf32>
    %89 = vector.multi_reduction <maximumf>, %88, %cst_38 [1] : vector<8x8xf32> to vector<8xf32>
    %90 = vector.shape_cast %89 : vector<8xf32> to vector<8x1xf32>
    %91 = vector.broadcast %90 : vector<8x1xf32> to vector<8x8xf32>
    %92 = arith.subf %88, %91 : vector<8x8xf32>
    %93 = math.exp %92 : vector<8x8xf32>
    %cst_39 = arith.constant dense<0.000000e+00> : vector<8xf32>
    %94 = vector.multi_reduction <add>, %93, %cst_39 [1] : vector<8x8xf32> to vector<8xf32>
    %95 = vector.shape_cast %94 : vector<8xf32> to vector<8x1xf32>
    %96 = tpu.reciprocal %95 {approx = true} : vector<8x1xf32> -> vector<8x1xf32>
    %97 = vector.broadcast %96 : vector<8x1xf32> to vector<8x8xf32>
    %98 = arith.mulf %93, %97 : vector<8x8xf32>
    %cst_40 = arith.constant dense<0.000000e+00> : vector<8x8xf32>
    %99 = tpu.matmul %98, %86, %cst_40 {dimension_numbers = #tpu.dot_dimension_numbers<[1], [0], [0], [1], [0, 0, 1, 1], [], []>} : vector<8x8xf32>, vector<8x8xf32>, vector<8x8xf32> -> vector<8x8xf32>
    %100 = vector.extract_strided_slice %21 {offsets = [16, 0], sizes = [8, 32], strides = [1, 1]} : vector<32x32xf32> to vector<8x32xf32>
    %cst_41 = arith.constant dense<0.000000e+00> : vector<8x32xf32>
    %101 = tpu.matmul %99, %100, %cst_41 {dimension_numbers = #tpu.dot_dimension_numbers<[1], [0], [0], [1], [0, 0, 1, 1], [], []>} : vector<8x8xf32>, vector<8x32xf32>, vector<8x32xf32> -> vector<8x32xf32>
    %102 = arith.addf %83, %101 : vector<8x32xf32>
    %103 = vector.extract_strided_slice %42 {offsets = [0, 24], sizes = [8, 8], strides = [1, 1]} : vector<8x32xf32> to vector<8x8xf32>
    %104 = vector.extract_strided_slice %43 {offsets = [0, 24], sizes = [8, 8], strides = [1, 1]} : vector<8x32xf32> to vector<8x8xf32>
    %105 = vector.extract_strided_slice %44 {offsets = [0, 24], sizes = [8, 8], strides = [1, 1]} : vector<8x32xf32> to vector<8x8xf32>
    %cst_42 = arith.constant dense<0.000000e+00> : vector<8x8xf32>
    %106 = tpu.matmul %103, %104, %cst_42 {dimension_numbers = #tpu.dot_dimension_numbers<[1], [1], [0], [0], [0, 0, 1, 0], [], []>} : vector<8x8xf32>, vector<8x8xf32>, vector<8x8xf32> -> vector<8x8xf32>
    %107 = arith.addf %106, %9 : vector<8x8xf32>
    %cst_43 = arith.constant dense<0xFF800000> : vector<8xf32>
    %108 = vector.multi_reduction <maximumf>, %107, %cst_43 [1] : vector<8x8xf32> to vector<8xf32>
    %109 = vector.shape_cast %108 : vector<8xf32> to vector<8x1xf32>
    %110 = vector.broadcast %109 : vector<8x1xf32> to vector<8x8xf32>
    %111 = arith.subf %107, %110 : vector<8x8xf32>
    %112 = math.exp %111 : vector<8x8xf32>
    %cst_44 = arith.constant dense<0.000000e+00> : vector<8xf32>
    %113 = vector.multi_reduction <add>, %112, %cst_44 [1] : vector<8x8xf32> to vector<8xf32>
    %114 = vector.shape_cast %113 : vector<8xf32> to vector<8x1xf32>
    %115 = tpu.reciprocal %114 {approx = true} : vector<8x1xf32> -> vector<8x1xf32>
    %116 = vector.broadcast %115 : vector<8x1xf32> to vector<8x8xf32>
    %117 = arith.mulf %112, %116 : vector<8x8xf32>
    %cst_45 = arith.constant dense<0.000000e+00> : vector<8x8xf32>
    %118 = tpu.matmul %117, %105, %cst_45 {dimension_numbers = #tpu.dot_dimension_numbers<[1], [0], [0], [1], [0, 0, 1, 1], [], []>} : vector<8x8xf32>, vector<8x8xf32>, vector<8x8xf32> -> vector<8x8xf32>
    %119 = vector.extract_strided_slice %21 {offsets = [24, 0], sizes = [8, 32], strides = [1, 1]} : vector<32x32xf32> to vector<8x32xf32>
    %cst_46 = arith.constant dense<0.000000e+00> : vector<8x32xf32>
    %120 = tpu.matmul %118, %119, %cst_46 {dimension_numbers = #tpu.dot_dimension_numbers<[1], [0], [0], [1], [0, 0, 1, 1], [], []>} : vector<8x8xf32>, vector<8x32xf32>, vector<8x32xf32> -> vector<8x32xf32>
    %121 = arith.addf %102, %120 : vector<8x32xf32>
    %122 = vector.extract_strided_slice %39 {offsets = [8, 0], sizes = [8, 32], strides = [1, 1]} : vector<16x32xf32> to vector<8x32xf32>
    %123 = vector.extract_strided_slice %40 {offsets = [8, 0], sizes = [8, 32], strides = [1, 1]} : vector<16x32xf32> to vector<8x32xf32>
    %124 = vector.extract_strided_slice %41 {offsets = [8, 0], sizes = [8, 32], strides = [1, 1]} : vector<16x32xf32> to vector<8x32xf32>
    %cst_47 = arith.constant 0.000000e+00 : f32
    %125 = vector.broadcast %cst_47 : f32 to vector<8x32xf32>
    %126 = vector.extract_strided_slice %122 {offsets = [0, 0], sizes = [8, 8], strides = [1, 1]} : vector<8x32xf32> to vector<8x8xf32>
    %127 = vector.extract_strided_slice %123 {offsets = [0, 0], sizes = [8, 8], strides = [1, 1]} : vector<8x32xf32> to vector<8x8xf32>
    %128 = vector.extract_strided_slice %124 {offsets = [0, 0], sizes = [8, 8], strides = [1, 1]} : vector<8x32xf32> to vector<8x8xf32>
    %cst_48 = arith.constant dense<0.000000e+00> : vector<8x8xf32>
    %129 = tpu.matmul %126, %127, %cst_48 {dimension_numbers = #tpu.dot_dimension_numbers<[1], [1], [0], [0], [0, 0, 1, 0], [], []>} : vector<8x8xf32>, vector<8x8xf32>, vector<8x8xf32> -> vector<8x8xf32>
    %130 = arith.addf %129, %17 : vector<8x8xf32>
    %cst_49 = arith.constant dense<0xFF800000> : vector<8xf32>
    %131 = vector.multi_reduction <maximumf>, %130, %cst_49 [1] : vector<8x8xf32> to vector<8xf32>
    %132 = vector.shape_cast %131 : vector<8xf32> to vector<8x1xf32>
    %133 = vector.broadcast %132 : vector<8x1xf32> to vector<8x8xf32>
    %134 = arith.subf %130, %133 : vector<8x8xf32>
    %135 = math.exp %134 : vector<8x8xf32>
    %cst_50 = arith.constant dense<0.000000e+00> : vector<8xf32>
    %136 = vector.multi_reduction <add>, %135, %cst_50 [1] : vector<8x8xf32> to vector<8xf32>
    %137 = vector.shape_cast %136 : vector<8xf32> to vector<8x1xf32>
    %138 = tpu.reciprocal %137 {approx = true} : vector<8x1xf32> -> vector<8x1xf32>
    %139 = vector.broadcast %138 : vector<8x1xf32> to vector<8x8xf32>
    %140 = arith.mulf %135, %139 : vector<8x8xf32>
    %cst_51 = arith.constant dense<0.000000e+00> : vector<8x8xf32>
    %141 = tpu.matmul %140, %128, %cst_51 {dimension_numbers = #tpu.dot_dimension_numbers<[1], [0], [0], [1], [0, 0, 1, 1], [], []>} : vector<8x8xf32>, vector<8x8xf32>, vector<8x8xf32> -> vector<8x8xf32>
    %142 = vector.extract_strided_slice %21 {offsets = [0, 0], sizes = [8, 32], strides = [1, 1]} : vector<32x32xf32> to vector<8x32xf32>
    %cst_52 = arith.constant dense<0.000000e+00> : vector<8x32xf32>
    %143 = tpu.matmul %141, %142, %cst_52 {dimension_numbers = #tpu.dot_dimension_numbers<[1], [0], [0], [1], [0, 0, 1, 1], [], []>} : vector<8x8xf32>, vector<8x32xf32>, vector<8x32xf32> -> vector<8x32xf32>
    %144 = arith.addf %125, %143 : vector<8x32xf32>
    %145 = vector.extract_strided_slice %122 {offsets = [0, 8], sizes = [8, 8], strides = [1, 1]} : vector<8x32xf32> to vector<8x8xf32>
    %146 = vector.extract_strided_slice %123 {offsets = [0, 8], sizes = [8, 8], strides = [1, 1]} : vector<8x32xf32> to vector<8x8xf32>
    %147 = vector.extract_strided_slice %124 {offsets = [0, 8], sizes = [8, 8], strides = [1, 1]} : vector<8x32xf32> to vector<8x8xf32>
    %cst_53 = arith.constant dense<0.000000e+00> : vector<8x8xf32>
    %148 = tpu.matmul %145, %146, %cst_53 {dimension_numbers = #tpu.dot_dimension_numbers<[1], [1], [0], [0], [0, 0, 1, 0], [], []>} : vector<8x8xf32>, vector<8x8xf32>, vector<8x8xf32> -> vector<8x8xf32>
    %149 = arith.addf %148, %17 : vector<8x8xf32>
    %cst_54 = arith.constant dense<0xFF800000> : vector<8xf32>
    %150 = vector.multi_reduction <maximumf>, %149, %cst_54 [1] : vector<8x8xf32> to vector<8xf32>
    %151 = vector.shape_cast %150 : vector<8xf32> to vector<8x1xf32>
    %152 = vector.broadcast %151 : vector<8x1xf32> to vector<8x8xf32>
    %153 = arith.subf %149, %152 : vector<8x8xf32>
    %154 = math.exp %153 : vector<8x8xf32>
    %cst_55 = arith.constant dense<0.000000e+00> : vector<8xf32>
    %155 = vector.multi_reduction <add>, %154, %cst_55 [1] : vector<8x8xf32> to vector<8xf32>
    %156 = vector.shape_cast %155 : vector<8xf32> to vector<8x1xf32>
    %157 = tpu.reciprocal %156 {approx = true} : vector<8x1xf32> -> vector<8x1xf32>
    %158 = vector.broadcast %157 : vector<8x1xf32> to vector<8x8xf32>
    %159 = arith.mulf %154, %158 : vector<8x8xf32>
    %cst_56 = arith.constant dense<0.000000e+00> : vector<8x8xf32>
    %160 = tpu.matmul %159, %147, %cst_56 {dimension_numbers = #tpu.dot_dimension_numbers<[1], [0], [0], [1], [0, 0, 1, 1], [], []>} : vector<8x8xf32>, vector<8x8xf32>, vector<8x8xf32> -> vector<8x8xf32>
    %161 = vector.extract_strided_slice %21 {offsets = [8, 0], sizes = [8, 32], strides = [1, 1]} : vector<32x32xf32> to vector<8x32xf32>
    %cst_57 = arith.constant dense<0.000000e+00> : vector<8x32xf32>
    %162 = tpu.matmul %160, %161, %cst_57 {dimension_numbers = #tpu.dot_dimension_numbers<[1], [0], [0], [1], [0, 0, 1, 1], [], []>} : vector<8x8xf32>, vector<8x32xf32>, vector<8x32xf32> -> vector<8x32xf32>
    %163 = arith.addf %144, %162 : vector<8x32xf32>
    %164 = vector.extract_strided_slice %122 {offsets = [0, 16], sizes = [8, 8], strides = [1, 1]} : vector<8x32xf32> to vector<8x8xf32>
    %165 = vector.extract_strided_slice %123 {offsets = [0, 16], sizes = [8, 8], strides = [1, 1]} : vector<8x32xf32> to vector<8x8xf32>
    %166 = vector.extract_strided_slice %124 {offsets = [0, 16], sizes = [8, 8], strides = [1, 1]} : vector<8x32xf32> to vector<8x8xf32>
    %cst_58 = arith.constant dense<0.000000e+00> : vector<8x8xf32>
    %167 = tpu.matmul %164, %165, %cst_58 {dimension_numbers = #tpu.dot_dimension_numbers<[1], [1], [0], [0], [0, 0, 1, 0], [], []>} : vector<8x8xf32>, vector<8x8xf32>, vector<8x8xf32> -> vector<8x8xf32>
    %168 = arith.addf %167, %17 : vector<8x8xf32>
    %cst_59 = arith.constant dense<0xFF800000> : vector<8xf32>
    %169 = vector.multi_reduction <maximumf>, %168, %cst_59 [1] : vector<8x8xf32> to vector<8xf32>
    %170 = vector.shape_cast %169 : vector<8xf32> to vector<8x1xf32>
    %171 = vector.broadcast %170 : vector<8x1xf32> to vector<8x8xf32>
    %172 = arith.subf %168, %171 : vector<8x8xf32>
    %173 = math.exp %172 : vector<8x8xf32>
    %cst_60 = arith.constant dense<0.000000e+00> : vector<8xf32>
    %174 = vector.multi_reduction <add>, %173, %cst_60 [1] : vector<8x8xf32> to vector<8xf32>
    %175 = vector.shape_cast %174 : vector<8xf32> to vector<8x1xf32>
    %176 = tpu.reciprocal %175 {approx = true} : vector<8x1xf32> -> vector<8x1xf32>
    %177 = vector.broadcast %176 : vector<8x1xf32> to vector<8x8xf32>
    %178 = arith.mulf %173, %177 : vector<8x8xf32>
    %cst_61 = arith.constant dense<0.000000e+00> : vector<8x8xf32>
    %179 = tpu.matmul %178, %166, %cst_61 {dimension_numbers = #tpu.dot_dimension_numbers<[1], [0], [0], [1], [0, 0, 1, 1], [], []>} : vector<8x8xf32>, vector<8x8xf32>, vector<8x8xf32> -> vector<8x8xf32>
    %180 = vector.extract_strided_slice %21 {offsets = [16, 0], sizes = [8, 32], strides = [1, 1]} : vector<32x32xf32> to vector<8x32xf32>
    %cst_62 = arith.constant dense<0.000000e+00> : vector<8x32xf32>
    %181 = tpu.matmul %179, %180, %cst_62 {dimension_numbers = #tpu.dot_dimension_numbers<[1], [0], [0], [1], [0, 0, 1, 1], [], []>} : vector<8x8xf32>, vector<8x32xf32>, vector<8x32xf32> -> vector<8x32xf32>
    %182 = arith.addf %163, %181 : vector<8x32xf32>
    %183 = vector.extract_strided_slice %122 {offsets = [0, 24], sizes = [8, 8], strides = [1, 1]} : vector<8x32xf32> to vector<8x8xf32>
    %184 = vector.extract_strided_slice %123 {offsets = [0, 24], sizes = [8, 8], strides = [1, 1]} : vector<8x32xf32> to vector<8x8xf32>
    %185 = vector.extract_strided_slice %124 {offsets = [0, 24], sizes = [8, 8], strides = [1, 1]} : vector<8x32xf32> to vector<8x8xf32>
    %cst_63 = arith.constant dense<0.000000e+00> : vector<8x8xf32>
    %186 = tpu.matmul %183, %184, %cst_63 {dimension_numbers = #tpu.dot_dimension_numbers<[1], [1], [0], [0], [0, 0, 1, 0], [], []>} : vector<8x8xf32>, vector<8x8xf32>, vector<8x8xf32> -> vector<8x8xf32>
    %187 = arith.addf %186, %17 : vector<8x8xf32>
    %cst_64 = arith.constant dense<0xFF800000> : vector<8xf32>
    %188 = vector.multi_reduction <maximumf>, %187, %cst_64 [1] : vector<8x8xf32> to vector<8xf32>
    %189 = vector.shape_cast %188 : vector<8xf32> to vector<8x1xf32>
    %190 = vector.broadcast %189 : vector<8x1xf32> to vector<8x8xf32>
    %191 = arith.subf %187, %190 : vector<8x8xf32>
    %192 = math.exp %191 : vector<8x8xf32>
    %cst_65 = arith.constant dense<0.000000e+00> : vector<8xf32>
    %193 = vector.multi_reduction <add>, %192, %cst_65 [1] : vector<8x8xf32> to vector<8xf32>
    %194 = vector.shape_cast %193 : vector<8xf32> to vector<8x1xf32>
    %195 = tpu.reciprocal %194 {approx = true} : vector<8x1xf32> -> vector<8x1xf32>
    %196 = vector.broadcast %195 : vector<8x1xf32> to vector<8x8xf32>
    %197 = arith.mulf %192, %196 : vector<8x8xf32>
    %cst_66 = arith.constant dense<0.000000e+00> : vector<8x8xf32>
    %198 = tpu.matmul %197, %185, %cst_66 {dimension_numbers = #tpu.dot_dimension_numbers<[1], [0], [0], [1], [0, 0, 1, 1], [], []>} : vector<8x8xf32>, vector<8x8xf32>, vector<8x8xf32> -> vector<8x8xf32>
    %199 = vector.extract_strided_slice %21 {offsets = [24, 0], sizes = [8, 32], strides = [1, 1]} : vector<32x32xf32> to vector<8x32xf32>
    %cst_67 = arith.constant dense<0.000000e+00> : vector<8x32xf32>
    %200 = tpu.matmul %198, %199, %cst_67 {dimension_numbers = #tpu.dot_dimension_numbers<[1], [0], [0], [1], [0, 0, 1, 1], [], []>} : vector<8x8xf32>, vector<8x32xf32>, vector<8x32xf32> -> vector<8x32xf32>
    %201 = arith.addf %182, %200 : vector<8x32xf32>
    %202 = tpu.concatenate %121, %201 in 0 : vector<8x32xf32>, vector<8x32xf32> -> vector<16x32xf32>
    %203 = vector.broadcast %30 : vector<1x32xf32> to vector<16x32xf32>
    %204 = arith.addf %202, %203 : vector<16x32xf32>
    %205 = arith.addf %1, %204 : vector<16x32xf32>
    %cst_68 = arith.constant dense<0.000000e+00> : vector<16xf32>
    %206 = vector.multi_reduction <add>, %205, %cst_68 [1] : vector<16x32xf32> to vector<16xf32>
    %207 = vector.shape_cast %206 : vector<16xf32> to vector<16x1xf32>
    %cst_69 = arith.constant 3.200000e+01 : f32
    %208 = vector.broadcast %cst_69 : f32 to vector<16x1xf32>
    %209 = arith.divf %207, %208 : vector<16x1xf32>
    %210 = vector.broadcast %209 : vector<16x1xf32> to vector<16x32xf32>
    %211 = arith.subf %205, %210 : vector<16x32xf32>
    %212 = arith.mulf %211, %211 : vector<16x32xf32>
    %cst_70 = arith.constant dense<0.000000e+00> : vector<16xf32>
    %213 = vector.multi_reduction <add>, %212, %cst_70 [1] : vector<16x32xf32> to vector<16xf32>
    %214 = vector.shape_cast %213 : vector<16xf32> to vector<16x1xf32>
    %cst_71 = arith.constant 3.200000e+01 : f32
    %215 = vector.broadcast %cst_71 : f32 to vector<16x1xf32>
    %216 = arith.divf %214, %215 : vector<16x1xf32>
    %217 = vector.broadcast %209 : vector<16x1xf32> to vector<16x32xf32>
    %218 = arith.subf %205, %217 : vector<16x32xf32>
    %cst_72 = arith.constant 9.99999974E-6 : f32
    %219 = vector.broadcast %cst_72 : f32 to vector<16x1xf32>
    %220 = arith.addf %216, %219 : vector<16x1xf32>
    %221 = math.rsqrt %220 : vector<16x1xf32>
    %222 = vector.broadcast %221 : vector<16x1xf32> to vector<16x32xf32>
    %223 = arith.mulf %218, %222 : vector<16x32xf32>
    %224 = vector.broadcast %31 : vector<1x32xf32> to vector<16x32xf32>
    %225 = arith.mulf %223, %224 : vector<16x32xf32>
    %226 = vector.broadcast %32 : vector<1x32xf32> to vector<16x32xf32>
    %227 = arith.addf %225, %226 : vector<16x32xf32>
    %cst_73 = arith.constant dense<0.000000e+00> : vector<16x64xf32>
    %228 = tpu.matmul %227, %23, %cst_73 {dimension_numbers = #tpu.dot_dimension_numbers<[1], [0], [0], [1], [0, 0, 1, 1], [], []>} : vector<16x32xf32>, vector<32x64xf32>, vector<16x64xf32> -> vector<16x64xf32>
    %229 = vector.broadcast %29 : vector<1x64xf32> to vector<16x64xf32>
    %230 = arith.addf %228, %229 : vector<16x64xf32>
    %cst_74 = arith.constant 0.000000e+00 : f32
    %231 = vector.broadcast %cst_74 : f32 to vector<16x64xf32>
    %232 = arith.maximumf %230, %231 : vector<16x64xf32>
    %cst_75 = arith.constant dense<0.000000e+00> : vector<16x32xf32>
    %233 = tpu.matmul %232, %25, %cst_75 {dimension_numbers = #tpu.dot_dimension_numbers<[1], [0], [0], [1], [0, 0, 1, 1], [], []>} : vector<16x64xf32>, vector<64x32xf32>, vector<16x32xf32> -> vector<16x32xf32>
    %234 = vector.broadcast %33 : vector<1x32xf32> to vector<16x32xf32>
    %235 = arith.addf %233, %234 : vector<16x32xf32>
    %236 = arith.addf %227, %235 : vector<16x32xf32>
    %cst_76 = arith.constant dense<0.000000e+00> : vector<16xf32>
    %237 = vector.multi_reduction <add>, %236, %cst_76 [1] : vector<16x32xf32> to vector<16xf32>
    %238 = vector.shape_cast %237 : vector<16xf32> to vector<16x1xf32>
    %cst_77 = arith.constant 3.200000e+01 : f32
    %239 = vector.broadcast %cst_77 : f32 to vector<16x1xf32>
    %240 = arith.divf %238, %239 : vector<16x1xf32>
    %241 = vector.broadcast %240 : vector<16x1xf32> to vector<16x32xf32>
    %242 = arith.subf %236, %241 : vector<16x32xf32>
    %243 = arith.mulf %242, %242 : vector<16x32xf32>
    %cst_78 = arith.constant dense<0.000000e+00> : vector<16xf32>
    %244 = vector.multi_reduction <add>, %243, %cst_78 [1] : vector<16x32xf32> to vector<16xf32>
    %245 = vector.shape_cast %244 : vector<16xf32> to vector<16x1xf32>
    %cst_79 = arith.constant 3.200000e+01 : f32
    %246 = vector.broadcast %cst_79 : f32 to vector<16x1xf32>
    %247 = arith.divf %245, %246 : vector<16x1xf32>
    %248 = vector.broadcast %240 : vector<16x1xf32> to vector<16x32xf32>
    %249 = arith.subf %236, %248 : vector<16x32xf32>
    %cst_80 = arith.constant 9.99999974E-6 : f32
    %250 = vector.broadcast %cst_80 : f32 to vector<16x1xf32>
    %251 = arith.addf %247, %250 : vector<16x1xf32>
    %252 = math.rsqrt %251 : vector<16x1xf32>
    %253 = vector.broadcast %252 : vector<16x1xf32> to vector<16x32xf32>
    %254 = arith.mulf %249, %253 : vector<16x32xf32>
    %255 = vector.broadcast %34 : vector<1x32xf32> to vector<16x32xf32>
    %256 = arith.mulf %254, %255 : vector<16x32xf32>
    %257 = vector.broadcast %35 : vector<1x32xf32> to vector<16x32xf32>
    %258 = arith.addf %256, %257 : vector<16x32xf32>
    %c1_81 = arith.constant 1 : index
    %c0_82 = arith.constant 0 : index
    %c0_83 = arith.constant 0 : index
    %259 = vector.load %arg3[%c1_81, %c0_82, %c0_83] : memref<2x32x96xf32, #tpu.memory_space<vmem>>, vector<1x32x96xf32>
    %260 = vector.shape_cast %259 : vector<1x32x96xf32> to vector<32x96xf32>
    %c1_84 = arith.constant 1 : index
    %c0_85 = arith.constant 0 : index
    %c0_86 = arith.constant 0 : index
    %261 = vector.load %arg4[%c1_84, %c0_85, %c0_86] : memref<2x32x32xf32, #tpu.memory_space<vmem>>, vector<1x32x32xf32>
    %262 = vector.shape_cast %261 : vector<1x32x32xf32> to vector<32x32xf32>
    %c1_87 = arith.constant 1 : index
    %c0_88 = arith.constant 0 : index
    %c0_89 = arith.constant 0 : index
    %263 = vector.load %arg5[%c1_87, %c0_88, %c0_89] : memref<2x32x64xf32, #tpu.memory_space<vmem>>, vector<1x32x64xf32>
    %264 = vector.shape_cast %263 : vector<1x32x64xf32> to vector<32x64xf32>
    %c1_90 = arith.constant 1 : index
    %c0_91 = arith.constant 0 : index
    %c0_92 = arith.constant 0 : index
    %265 = vector.load %arg6[%c1_90, %c0_91, %c0_92] : memref<2x64x32xf32, #tpu.memory_space<vmem>>, vector<1x64x32xf32>
    %266 = vector.shape_cast %265 : vector<1x64x32xf32> to vector<64x32xf32>
    %c1_93 = arith.constant 1 : index
    %c0_94 = arith.constant 0 : index
    %c0_95 = arith.constant 0 : index
    %267 = vector.load %arg7[%c1_93, %c0_94, %c0_95] : memref<2x8x96xf32, #tpu.memory_space<vmem>>, vector<1x8x96xf32>
    %268 = vector.shape_cast %267 : vector<1x8x96xf32> to vector<8x96xf32>
    %269 = vector.extract_strided_slice %268 {offsets = [0, 0], sizes = [1, 96], strides = [1, 1]} : vector<8x96xf32> to vector<1x96xf32>
    %270 = vector.extract_strided_slice %268 {offsets = [1, 0], sizes = [1, 64], strides = [1, 1]} : vector<8x96xf32> to vector<1x64xf32>
    %271 = vector.extract_strided_slice %268 {offsets = [2, 0], sizes = [1, 32], strides = [1, 1]} : vector<8x96xf32> to vector<1x32xf32>
    %272 = vector.extract_strided_slice %268 {offsets = [3, 0], sizes = [1, 32], strides = [1, 1]} : vector<8x96xf32> to vector<1x32xf32>
    %273 = vector.extract_strided_slice %268 {offsets = [4, 0], sizes = [1, 32], strides = [1, 1]} : vector<8x96xf32> to vector<1x32xf32>
    %274 = vector.extract_strided_slice %268 {offsets = [5, 0], sizes = [1, 32], strides = [1, 1]} : vector<8x96xf32> to vector<1x32xf32>
    %275 = vector.extract_strided_slice %268 {offsets = [6, 0], sizes = [1, 32], strides = [1, 1]} : vector<8x96xf32> to vector<1x32xf32>
    %276 = vector.extract_strided_slice %268 {offsets = [7, 0], sizes = [1, 32], strides = [1, 1]} : vector<8x96xf32> to vector<1x32xf32>
    %cst_96 = arith.constant dense<0.000000e+00> : vector<16x96xf32>
    %277 = tpu.matmul %258, %260, %cst_96 {dimension_numbers = #tpu.dot_dimension_numbers<[1], [0], [0], [1], [0, 0, 1, 1], [], []>} : vector<16x32xf32>, vector<32x96xf32>, vector<16x96xf32> -> vector<16x96xf32>
    %278 = vector.broadcast %269 : vector<1x96xf32> to vector<16x96xf32>
    %279 = arith.addf %277, %278 : vector<16x96xf32>
    %280 = vector.extract_strided_slice %279 {offsets = [0, 0], sizes = [16, 32], strides = [1, 1]} : vector<16x96xf32> to vector<16x32xf32>
    %281 = vector.extract_strided_slice %279 {offsets = [0, 32], sizes = [16, 32], strides = [1, 1]} : vector<16x96xf32> to vector<16x32xf32>
    %282 = vector.extract_strided_slice %279 {offsets = [0, 64], sizes = [16, 32], strides = [1, 1]} : vector<16x96xf32> to vector<16x32xf32>
    %283 = vector.extract_strided_slice %280 {offsets = [0, 0], sizes = [8, 32], strides = [1, 1]} : vector<16x32xf32> to vector<8x32xf32>
    %284 = vector.extract_strided_slice %281 {offsets = [0, 0], sizes = [8, 32], strides = [1, 1]} : vector<16x32xf32> to vector<8x32xf32>
    %285 = vector.extract_strided_slice %282 {offsets = [0, 0], sizes = [8, 32], strides = [1, 1]} : vector<16x32xf32> to vector<8x32xf32>
    %cst_97 = arith.constant 0.000000e+00 : f32
    %286 = vector.broadcast %cst_97 : f32 to vector<8x32xf32>
    %287 = vector.extract_strided_slice %283 {offsets = [0, 0], sizes = [8, 8], strides = [1, 1]} : vector<8x32xf32> to vector<8x8xf32>
    %288 = vector.extract_strided_slice %284 {offsets = [0, 0], sizes = [8, 8], strides = [1, 1]} : vector<8x32xf32> to vector<8x8xf32>
    %289 = vector.extract_strided_slice %285 {offsets = [0, 0], sizes = [8, 8], strides = [1, 1]} : vector<8x32xf32> to vector<8x8xf32>
    %cst_98 = arith.constant dense<0.000000e+00> : vector<8x8xf32>
    %290 = tpu.matmul %287, %288, %cst_98 {dimension_numbers = #tpu.dot_dimension_numbers<[1], [1], [0], [0], [0, 0, 1, 0], [], []>} : vector<8x8xf32>, vector<8x8xf32>, vector<8x8xf32> -> vector<8x8xf32>
    %291 = arith.addf %290, %9 : vector<8x8xf32>
    %cst_99 = arith.constant dense<0xFF800000> : vector<8xf32>
    %292 = vector.multi_reduction <maximumf>, %291, %cst_99 [1] : vector<8x8xf32> to vector<8xf32>
    %293 = vector.shape_cast %292 : vector<8xf32> to vector<8x1xf32>
    %294 = vector.broadcast %293 : vector<8x1xf32> to vector<8x8xf32>
    %295 = arith.subf %291, %294 : vector<8x8xf32>
    %296 = math.exp %295 : vector<8x8xf32>
    %cst_100 = arith.constant dense<0.000000e+00> : vector<8xf32>
    %297 = vector.multi_reduction <add>, %296, %cst_100 [1] : vector<8x8xf32> to vector<8xf32>
    %298 = vector.shape_cast %297 : vector<8xf32> to vector<8x1xf32>
    %299 = tpu.reciprocal %298 {approx = true} : vector<8x1xf32> -> vector<8x1xf32>
    %300 = vector.broadcast %299 : vector<8x1xf32> to vector<8x8xf32>
    %301 = arith.mulf %296, %300 : vector<8x8xf32>
    %cst_101 = arith.constant dense<0.000000e+00> : vector<8x8xf32>
    %302 = tpu.matmul %301, %289, %cst_101 {dimension_numbers = #tpu.dot_dimension_numbers<[1], [0], [0], [1], [0, 0, 1, 1], [], []>} : vector<8x8xf32>, vector<8x8xf32>, vector<8x8xf32> -> vector<8x8xf32>
    %303 = vector.extract_strided_slice %262 {offsets = [0, 0], sizes = [8, 32], strides = [1, 1]} : vector<32x32xf32> to vector<8x32xf32>
    %cst_102 = arith.constant dense<0.000000e+00> : vector<8x32xf32>
    %304 = tpu.matmul %302, %303, %cst_102 {dimension_numbers = #tpu.dot_dimension_numbers<[1], [0], [0], [1], [0, 0, 1, 1], [], []>} : vector<8x8xf32>, vector<8x32xf32>, vector<8x32xf32> -> vector<8x32xf32>
    %305 = arith.addf %286, %304 : vector<8x32xf32>
    %306 = vector.extract_strided_slice %283 {offsets = [0, 8], sizes = [8, 8], strides = [1, 1]} : vector<8x32xf32> to vector<8x8xf32>
    %307 = vector.extract_strided_slice %284 {offsets = [0, 8], sizes = [8, 8], strides = [1, 1]} : vector<8x32xf32> to vector<8x8xf32>
    %308 = vector.extract_strided_slice %285 {offsets = [0, 8], sizes = [8, 8], strides = [1, 1]} : vector<8x32xf32> to vector<8x8xf32>
    %cst_103 = arith.constant dense<0.000000e+00> : vector<8x8xf32>
    %309 = tpu.matmul %306, %307, %cst_103 {dimension_numbers = #tpu.dot_dimension_numbers<[1], [1], [0], [0], [0, 0, 1, 0], [], []>} : vector<8x8xf32>, vector<8x8xf32>, vector<8x8xf32> -> vector<8x8xf32>
    %310 = arith.addf %309, %9 : vector<8x8xf32>
    %cst_104 = arith.constant dense<0xFF800000> : vector<8xf32>
    %311 = vector.multi_reduction <maximumf>, %310, %cst_104 [1] : vector<8x8xf32> to vector<8xf32>
    %312 = vector.shape_cast %311 : vector<8xf32> to vector<8x1xf32>
    %313 = vector.broadcast %312 : vector<8x1xf32> to vector<8x8xf32>
    %314 = arith.subf %310, %313 : vector<8x8xf32>
    %315 = math.exp %314 : vector<8x8xf32>
    %cst_105 = arith.constant dense<0.000000e+00> : vector<8xf32>
    %316 = vector.multi_reduction <add>, %315, %cst_105 [1] : vector<8x8xf32> to vector<8xf32>
    %317 = vector.shape_cast %316 : vector<8xf32> to vector<8x1xf32>
    %318 = tpu.reciprocal %317 {approx = true} : vector<8x1xf32> -> vector<8x1xf32>
    %319 = vector.broadcast %318 : vector<8x1xf32> to vector<8x8xf32>
    %320 = arith.mulf %315, %319 : vector<8x8xf32>
    %cst_106 = arith.constant dense<0.000000e+00> : vector<8x8xf32>
    %321 = tpu.matmul %320, %308, %cst_106 {dimension_numbers = #tpu.dot_dimension_numbers<[1], [0], [0], [1], [0, 0, 1, 1], [], []>} : vector<8x8xf32>, vector<8x8xf32>, vector<8x8xf32> -> vector<8x8xf32>
    %322 = vector.extract_strided_slice %262 {offsets = [8, 0], sizes = [8, 32], strides = [1, 1]} : vector<32x32xf32> to vector<8x32xf32>
    %cst_107 = arith.constant dense<0.000000e+00> : vector<8x32xf32>
    %323 = tpu.matmul %321, %322, %cst_107 {dimension_numbers = #tpu.dot_dimension_numbers<[1], [0], [0], [1], [0, 0, 1, 1], [], []>} : vector<8x8xf32>, vector<8x32xf32>, vector<8x32xf32> -> vector<8x32xf32>
    %324 = arith.addf %305, %323 : vector<8x32xf32>
    %325 = vector.extract_strided_slice %283 {offsets = [0, 16], sizes = [8, 8], strides = [1, 1]} : vector<8x32xf32> to vector<8x8xf32>
    %326 = vector.extract_strided_slice %284 {offsets = [0, 16], sizes = [8, 8], strides = [1, 1]} : vector<8x32xf32> to vector<8x8xf32>
    %327 = vector.extract_strided_slice %285 {offsets = [0, 16], sizes = [8, 8], strides = [1, 1]} : vector<8x32xf32> to vector<8x8xf32>
    %cst_108 = arith.constant dense<0.000000e+00> : vector<8x8xf32>
    %328 = tpu.matmul %325, %326, %cst_108 {dimension_numbers = #tpu.dot_dimension_numbers<[1], [1], [0], [0], [0, 0, 1, 0], [], []>} : vector<8x8xf32>, vector<8x8xf32>, vector<8x8xf32> -> vector<8x8xf32>
    %329 = arith.addf %328, %9 : vector<8x8xf32>
    %cst_109 = arith.constant dense<0xFF800000> : vector<8xf32>
    %330 = vector.multi_reduction <maximumf>, %329, %cst_109 [1] : vector<8x8xf32> to vector<8xf32>
    %331 = vector.shape_cast %330 : vector<8xf32> to vector<8x1xf32>
    %332 = vector.broadcast %331 : vector<8x1xf32> to vector<8x8xf32>
    %333 = arith.subf %329, %332 : vector<8x8xf32>
    %334 = math.exp %333 : vector<8x8xf32>
    %cst_110 = arith.constant dense<0.000000e+00> : vector<8xf32>
    %335 = vector.multi_reduction <add>, %334, %cst_110 [1] : vector<8x8xf32> to vector<8xf32>
    %336 = vector.shape_cast %335 : vector<8xf32> to vector<8x1xf32>
    %337 = tpu.reciprocal %336 {approx = true} : vector<8x1xf32> -> vector<8x1xf32>
    %338 = vector.broadcast %337 : vector<8x1xf32> to vector<8x8xf32>
    %339 = arith.mulf %334, %338 : vector<8x8xf32>
    %cst_111 = arith.constant dense<0.000000e+00> : vector<8x8xf32>
    %340 = tpu.matmul %339, %327, %cst_111 {dimension_numbers = #tpu.dot_dimension_numbers<[1], [0], [0], [1], [0, 0, 1, 1], [], []>} : vector<8x8xf32>, vector<8x8xf32>, vector<8x8xf32> -> vector<8x8xf32>
    %341 = vector.extract_strided_slice %262 {offsets = [16, 0], sizes = [8, 32], strides = [1, 1]} : vector<32x32xf32> to vector<8x32xf32>
    %cst_112 = arith.constant dense<0.000000e+00> : vector<8x32xf32>
    %342 = tpu.matmul %340, %341, %cst_112 {dimension_numbers = #tpu.dot_dimension_numbers<[1], [0], [0], [1], [0, 0, 1, 1], [], []>} : vector<8x8xf32>, vector<8x32xf32>, vector<8x32xf32> -> vector<8x32xf32>
    %343 = arith.addf %324, %342 : vector<8x32xf32>
    %344 = vector.extract_strided_slice %283 {offsets = [0, 24], sizes = [8, 8], strides = [1, 1]} : vector<8x32xf32> to vector<8x8xf32>
    %345 = vector.extract_strided_slice %284 {offsets = [0, 24], sizes = [8, 8], strides = [1, 1]} : vector<8x32xf32> to vector<8x8xf32>
    %346 = vector.extract_strided_slice %285 {offsets = [0, 24], sizes = [8, 8], strides = [1, 1]} : vector<8x32xf32> to vector<8x8xf32>
    %cst_113 = arith.constant dense<0.000000e+00> : vector<8x8xf32>
    %347 = tpu.matmul %344, %345, %cst_113 {dimension_numbers = #tpu.dot_dimension_numbers<[1], [1], [0], [0], [0, 0, 1, 0], [], []>} : vector<8x8xf32>, vector<8x8xf32>, vector<8x8xf32> -> vector<8x8xf32>
    %348 = arith.addf %347, %9 : vector<8x8xf32>
    %cst_114 = arith.constant dense<0xFF800000> : vector<8xf32>
    %349 = vector.multi_reduction <maximumf>, %348, %cst_114 [1] : vector<8x8xf32> to vector<8xf32>
    %350 = vector.shape_cast %349 : vector<8xf32> to vector<8x1xf32>
    %351 = vector.broadcast %350 : vector<8x1xf32> to vector<8x8xf32>
    %352 = arith.subf %348, %351 : vector<8x8xf32>
    %353 = math.exp %352 : vector<8x8xf32>
    %cst_115 = arith.constant dense<0.000000e+00> : vector<8xf32>
    %354 = vector.multi_reduction <add>, %353, %cst_115 [1] : vector<8x8xf32> to vector<8xf32>
    %355 = vector.shape_cast %354 : vector<8xf32> to vector<8x1xf32>
    %356 = tpu.reciprocal %355 {approx = true} : vector<8x1xf32> -> vector<8x1xf32>
    %357 = vector.broadcast %356 : vector<8x1xf32> to vector<8x8xf32>
    %358 = arith.mulf %353, %357 : vector<8x8xf32>
    %cst_116 = arith.constant dense<0.000000e+00> : vector<8x8xf32>
    %359 = tpu.matmul %358, %346, %cst_116 {dimension_numbers = #tpu.dot_dimension_numbers<[1], [0], [0], [1], [0, 0, 1, 1], [], []>} : vector<8x8xf32>, vector<8x8xf32>, vector<8x8xf32> -> vector<8x8xf32>
    %360 = vector.extract_strided_slice %262 {offsets = [24, 0], sizes = [8, 32], strides = [1, 1]} : vector<32x32xf32> to vector<8x32xf32>
    %cst_117 = arith.constant dense<0.000000e+00> : vector<8x32xf32>
    %361 = tpu.matmul %359, %360, %cst_117 {dimension_numbers = #tpu.dot_dimension_numbers<[1], [0], [0], [1], [0, 0, 1, 1], [], []>} : vector<8x8xf32>, vector<8x32xf32>, vector<8x32xf32> -> vector<8x32xf32>
    %362 = arith.addf %343, %361 : vector<8x32xf32>
    %363 = vector.extract_strided_slice %280 {offsets = [8, 0], sizes = [8, 32], strides = [1, 1]} : vector<16x32xf32> to vector<8x32xf32>
    %364 = vector.extract_strided_slice %281 {offsets = [8, 0], sizes = [8, 32], strides = [1, 1]} : vector<16x32xf32> to vector<8x32xf32>
    %365 = vector.extract_strided_slice %282 {offsets = [8, 0], sizes = [8, 32], strides = [1, 1]} : vector<16x32xf32> to vector<8x32xf32>
    %cst_118 = arith.constant 0.000000e+00 : f32
    %366 = vector.broadcast %cst_118 : f32 to vector<8x32xf32>
    %367 = vector.extract_strided_slice %363 {offsets = [0, 0], sizes = [8, 8], strides = [1, 1]} : vector<8x32xf32> to vector<8x8xf32>
    %368 = vector.extract_strided_slice %364 {offsets = [0, 0], sizes = [8, 8], strides = [1, 1]} : vector<8x32xf32> to vector<8x8xf32>
    %369 = vector.extract_strided_slice %365 {offsets = [0, 0], sizes = [8, 8], strides = [1, 1]} : vector<8x32xf32> to vector<8x8xf32>
    %cst_119 = arith.constant dense<0.000000e+00> : vector<8x8xf32>
    %370 = tpu.matmul %367, %368, %cst_119 {dimension_numbers = #tpu.dot_dimension_numbers<[1], [1], [0], [0], [0, 0, 1, 0], [], []>} : vector<8x8xf32>, vector<8x8xf32>, vector<8x8xf32> -> vector<8x8xf32>
    %371 = arith.addf %370, %17 : vector<8x8xf32>
    %cst_120 = arith.constant dense<0xFF800000> : vector<8xf32>
    %372 = vector.multi_reduction <maximumf>, %371, %cst_120 [1] : vector<8x8xf32> to vector<8xf32>
    %373 = vector.shape_cast %372 : vector<8xf32> to vector<8x1xf32>
    %374 = vector.broadcast %373 : vector<8x1xf32> to vector<8x8xf32>
    %375 = arith.subf %371, %374 : vector<8x8xf32>
    %376 = math.exp %375 : vector<8x8xf32>
    %cst_121 = arith.constant dense<0.000000e+00> : vector<8xf32>
    %377 = vector.multi_reduction <add>, %376, %cst_121 [1] : vector<8x8xf32> to vector<8xf32>
    %378 = vector.shape_cast %377 : vector<8xf32> to vector<8x1xf32>
    %379 = tpu.reciprocal %378 {approx = true} : vector<8x1xf32> -> vector<8x1xf32>
    %380 = vector.broadcast %379 : vector<8x1xf32> to vector<8x8xf32>
    %381 = arith.mulf %376, %380 : vector<8x8xf32>
    %cst_122 = arith.constant dense<0.000000e+00> : vector<8x8xf32>
    %382 = tpu.matmul %381, %369, %cst_122 {dimension_numbers = #tpu.dot_dimension_numbers<[1], [0], [0], [1], [0, 0, 1, 1], [], []>} : vector<8x8xf32>, vector<8x8xf32>, vector<8x8xf32> -> vector<8x8xf32>
    %383 = vector.extract_strided_slice %262 {offsets = [0, 0], sizes = [8, 32], strides = [1, 1]} : vector<32x32xf32> to vector<8x32xf32>
    %cst_123 = arith.constant dense<0.000000e+00> : vector<8x32xf32>
    %384 = tpu.matmul %382, %383, %cst_123 {dimension_numbers = #tpu.dot_dimension_numbers<[1], [0], [0], [1], [0, 0, 1, 1], [], []>} : vector<8x8xf32>, vector<8x32xf32>, vector<8x32xf32> -> vector<8x32xf32>
    %385 = arith.addf %366, %384 : vector<8x32xf32>
    %386 = vector.extract_strided_slice %363 {offsets = [0, 8], sizes = [8, 8], strides = [1, 1]} : vector<8x32xf32> to vector<8x8xf32>
    %387 = vector.extract_strided_slice %364 {offsets = [0, 8], sizes = [8, 8], strides = [1, 1]} : vector<8x32xf32> to vector<8x8xf32>
    %388 = vector.extract_strided_slice %365 {offsets = [0, 8], sizes = [8, 8], strides = [1, 1]} : vector<8x32xf32> to vector<8x8xf32>
    %cst_124 = arith.constant dense<0.000000e+00> : vector<8x8xf32>
    %389 = tpu.matmul %386, %387, %cst_124 {dimension_numbers = #tpu.dot_dimension_numbers<[1], [1], [0], [0], [0, 0, 1, 0], [], []>} : vector<8x8xf32>, vector<8x8xf32>, vector<8x8xf32> -> vector<8x8xf32>
    %390 = arith.addf %389, %17 : vector<8x8xf32>
    %cst_125 = arith.constant dense<0xFF800000> : vector<8xf32>
    %391 = vector.multi_reduction <maximumf>, %390, %cst_125 [1] : vector<8x8xf32> to vector<8xf32>
    %392 = vector.shape_cast %391 : vector<8xf32> to vector<8x1xf32>
    %393 = vector.broadcast %392 : vector<8x1xf32> to vector<8x8xf32>
    %394 = arith.subf %390, %393 : vector<8x8xf32>
    %395 = math.exp %394 : vector<8x8xf32>
    %cst_126 = arith.constant dense<0.000000e+00> : vector<8xf32>
    %396 = vector.multi_reduction <add>, %395, %cst_126 [1] : vector<8x8xf32> to vector<8xf32>
    %397 = vector.shape_cast %396 : vector<8xf32> to vector<8x1xf32>
    %398 = tpu.reciprocal %397 {approx = true} : vector<8x1xf32> -> vector<8x1xf32>
    %399 = vector.broadcast %398 : vector<8x1xf32> to vector<8x8xf32>
    %400 = arith.mulf %395, %399 : vector<8x8xf32>
    %cst_127 = arith.constant dense<0.000000e+00> : vector<8x8xf32>
    %401 = tpu.matmul %400, %388, %cst_127 {dimension_numbers = #tpu.dot_dimension_numbers<[1], [0], [0], [1], [0, 0, 1, 1], [], []>} : vector<8x8xf32>, vector<8x8xf32>, vector<8x8xf32> -> vector<8x8xf32>
    %402 = vector.extract_strided_slice %262 {offsets = [8, 0], sizes = [8, 32], strides = [1, 1]} : vector<32x32xf32> to vector<8x32xf32>
    %cst_128 = arith.constant dense<0.000000e+00> : vector<8x32xf32>
    %403 = tpu.matmul %401, %402, %cst_128 {dimension_numbers = #tpu.dot_dimension_numbers<[1], [0], [0], [1], [0, 0, 1, 1], [], []>} : vector<8x8xf32>, vector<8x32xf32>, vector<8x32xf32> -> vector<8x32xf32>
    %404 = arith.addf %385, %403 : vector<8x32xf32>
    %405 = vector.extract_strided_slice %363 {offsets = [0, 16], sizes = [8, 8], strides = [1, 1]} : vector<8x32xf32> to vector<8x8xf32>
    %406 = vector.extract_strided_slice %364 {offsets = [0, 16], sizes = [8, 8], strides = [1, 1]} : vector<8x32xf32> to vector<8x8xf32>
    %407 = vector.extract_strided_slice %365 {offsets = [0, 16], sizes = [8, 8], strides = [1, 1]} : vector<8x32xf32> to vector<8x8xf32>
    %cst_129 = arith.constant dense<0.000000e+00> : vector<8x8xf32>
    %408 = tpu.matmul %405, %406, %cst_129 {dimension_numbers = #tpu.dot_dimension_numbers<[1], [1], [0], [0], [0, 0, 1, 0], [], []>} : vector<8x8xf32>, vector<8x8xf32>, vector<8x8xf32> -> vector<8x8xf32>
    %409 = arith.addf %408, %17 : vector<8x8xf32>
    %cst_130 = arith.constant dense<0xFF800000> : vector<8xf32>
    %410 = vector.multi_reduction <maximumf>, %409, %cst_130 [1] : vector<8x8xf32> to vector<8xf32>
    %411 = vector.shape_cast %410 : vector<8xf32> to vector<8x1xf32>
    %412 = vector.broadcast %411 : vector<8x1xf32> to vector<8x8xf32>
    %413 = arith.subf %409, %412 : vector<8x8xf32>
    %414 = math.exp %413 : vector<8x8xf32>
    %cst_131 = arith.constant dense<0.000000e+00> : vector<8xf32>
    %415 = vector.multi_reduction <add>, %414, %cst_131 [1] : vector<8x8xf32> to vector<8xf32>
    %416 = vector.shape_cast %415 : vector<8xf32> to vector<8x1xf32>
    %417 = tpu.reciprocal %416 {approx = true} : vector<8x1xf32> -> vector<8x1xf32>
    %418 = vector.broadcast %417 : vector<8x1xf32> to vector<8x8xf32>
    %419 = arith.mulf %414, %418 : vector<8x8xf32>
    %cst_132 = arith.constant dense<0.000000e+00> : vector<8x8xf32>
    %420 = tpu.matmul %419, %407, %cst_132 {dimension_numbers = #tpu.dot_dimension_numbers<[1], [0], [0], [1], [0, 0, 1, 1], [], []>} : vector<8x8xf32>, vector<8x8xf32>, vector<8x8xf32> -> vector<8x8xf32>
    %421 = vector.extract_strided_slice %262 {offsets = [16, 0], sizes = [8, 32], strides = [1, 1]} : vector<32x32xf32> to vector<8x32xf32>
    %cst_133 = arith.constant dense<0.000000e+00> : vector<8x32xf32>
    %422 = tpu.matmul %420, %421, %cst_133 {dimension_numbers = #tpu.dot_dimension_numbers<[1], [0], [0], [1], [0, 0, 1, 1], [], []>} : vector<8x8xf32>, vector<8x32xf32>, vector<8x32xf32> -> vector<8x32xf32>
    %423 = arith.addf %404, %422 : vector<8x32xf32>
    %424 = vector.extract_strided_slice %363 {offsets = [0, 24], sizes = [8, 8], strides = [1, 1]} : vector<8x32xf32> to vector<8x8xf32>
    %425 = vector.extract_strided_slice %364 {offsets = [0, 24], sizes = [8, 8], strides = [1, 1]} : vector<8x32xf32> to vector<8x8xf32>
    %426 = vector.extract_strided_slice %365 {offsets = [0, 24], sizes = [8, 8], strides = [1, 1]} : vector<8x32xf32> to vector<8x8xf32>
    %cst_134 = arith.constant dense<0.000000e+00> : vector<8x8xf32>
    %427 = tpu.matmul %424, %425, %cst_134 {dimension_numbers = #tpu.dot_dimension_numbers<[1], [1], [0], [0], [0, 0, 1, 0], [], []>} : vector<8x8xf32>, vector<8x8xf32>, vector<8x8xf32> -> vector<8x8xf32>
    %428 = arith.addf %427, %17 : vector<8x8xf32>
    %cst_135 = arith.constant dense<0xFF800000> : vector<8xf32>
    %429 = vector.multi_reduction <maximumf>, %428, %cst_135 [1] : vector<8x8xf32> to vector<8xf32>
    %430 = vector.shape_cast %429 : vector<8xf32> to vector<8x1xf32>
    %431 = vector.broadcast %430 : vector<8x1xf32> to vector<8x8xf32>
    %432 = arith.subf %428, %431 : vector<8x8xf32>
    %433 = math.exp %432 : vector<8x8xf32>
    %cst_136 = arith.constant dense<0.000000e+00> : vector<8xf32>
    %434 = vector.multi_reduction <add>, %433, %cst_136 [1] : vector<8x8xf32> to vector<8xf32>
    %435 = vector.shape_cast %434 : vector<8xf32> to vector<8x1xf32>
    %436 = tpu.reciprocal %435 {approx = true} : vector<8x1xf32> -> vector<8x1xf32>
    %437 = vector.broadcast %436 : vector<8x1xf32> to vector<8x8xf32>
    %438 = arith.mulf %433, %437 : vector<8x8xf32>
    %cst_137 = arith.constant dense<0.000000e+00> : vector<8x8xf32>
    %439 = tpu.matmul %438, %426, %cst_137 {dimension_numbers = #tpu.dot_dimension_numbers<[1], [0], [0], [1], [0, 0, 1, 1], [], []>} : vector<8x8xf32>, vector<8x8xf32>, vector<8x8xf32> -> vector<8x8xf32>
    %440 = vector.extract_strided_slice %262 {offsets = [24, 0], sizes = [8, 32], strides = [1, 1]} : vector<32x32xf32> to vector<8x32xf32>
    %cst_138 = arith.constant dense<0.000000e+00> : vector<8x32xf32>
    %441 = tpu.matmul %439, %440, %cst_138 {dimension_numbers = #tpu.dot_dimension_numbers<[1], [0], [0], [1], [0, 0, 1, 1], [], []>} : vector<8x8xf32>, vector<8x32xf32>, vector<8x32xf32> -> vector<8x32xf32>
    %442 = arith.addf %423, %441 : vector<8x32xf32>
    %443 = tpu.concatenate %362, %442 in 0 : vector<8x32xf32>, vector<8x32xf32> -> vector<16x32xf32>
    %444 = vector.broadcast %271 : vector<1x32xf32> to vector<16x32xf32>
    %445 = arith.addf %443, %444 : vector<16x32xf32>
    %446 = arith.addf %258, %445 : vector<16x32xf32>
    %cst_139 = arith.constant dense<0.000000e+00> : vector<16xf32>
    %447 = vector.multi_reduction <add>, %446, %cst_139 [1] : vector<16x32xf32> to vector<16xf32>
    %448 = vector.shape_cast %447 : vector<16xf32> to vector<16x1xf32>
    %cst_140 = arith.constant 3.200000e+01 : f32
    %449 = vector.broadcast %cst_140 : f32 to vector<16x1xf32>
    %450 = arith.divf %448, %449 : vector<16x1xf32>
    %451 = vector.broadcast %450 : vector<16x1xf32> to vector<16x32xf32>
    %452 = arith.subf %446, %451 : vector<16x32xf32>
    %453 = arith.mulf %452, %452 : vector<16x32xf32>
    %cst_141 = arith.constant dense<0.000000e+00> : vector<16xf32>
    %454 = vector.multi_reduction <add>, %453, %cst_141 [1] : vector<16x32xf32> to vector<16xf32>
    %455 = vector.shape_cast %454 : vector<16xf32> to vector<16x1xf32>
    %cst_142 = arith.constant 3.200000e+01 : f32
    %456 = vector.broadcast %cst_142 : f32 to vector<16x1xf32>
    %457 = arith.divf %455, %456 : vector<16x1xf32>
    %458 = vector.broadcast %450 : vector<16x1xf32> to vector<16x32xf32>
    %459 = arith.subf %446, %458 : vector<16x32xf32>
    %cst_143 = arith.constant 9.99999974E-6 : f32
    %460 = vector.broadcast %cst_143 : f32 to vector<16x1xf32>
    %461 = arith.addf %457, %460 : vector<16x1xf32>
    %462 = math.rsqrt %461 : vector<16x1xf32>
    %463 = vector.broadcast %462 : vector<16x1xf32> to vector<16x32xf32>
    %464 = arith.mulf %459, %463 : vector<16x32xf32>
    %465 = vector.broadcast %272 : vector<1x32xf32> to vector<16x32xf32>
    %466 = arith.mulf %464, %465 : vector<16x32xf32>
    %467 = vector.broadcast %273 : vector<1x32xf32> to vector<16x32xf32>
    %468 = arith.addf %466, %467 : vector<16x32xf32>
    %cst_144 = arith.constant dense<0.000000e+00> : vector<16x64xf32>
    %469 = tpu.matmul %468, %264, %cst_144 {dimension_numbers = #tpu.dot_dimension_numbers<[1], [0], [0], [1], [0, 0, 1, 1], [], []>} : vector<16x32xf32>, vector<32x64xf32>, vector<16x64xf32> -> vector<16x64xf32>
    %470 = vector.broadcast %270 : vector<1x64xf32> to vector<16x64xf32>
    %471 = arith.addf %469, %470 : vector<16x64xf32>
    %cst_145 = arith.constant 0.000000e+00 : f32
    %472 = vector.broadcast %cst_145 : f32 to vector<16x64xf32>
    %473 = arith.maximumf %471, %472 : vector<16x64xf32>
    %cst_146 = arith.constant dense<0.000000e+00> : vector<16x32xf32>
    %474 = tpu.matmul %473, %266, %cst_146 {dimension_numbers = #tpu.dot_dimension_numbers<[1], [0], [0], [1], [0, 0, 1, 1], [], []>} : vector<16x64xf32>, vector<64x32xf32>, vector<16x32xf32> -> vector<16x32xf32>
    %475 = vector.broadcast %274 : vector<1x32xf32> to vector<16x32xf32>
    %476 = arith.addf %474, %475 : vector<16x32xf32>
    %477 = arith.addf %468, %476 : vector<16x32xf32>
    %cst_147 = arith.constant dense<0.000000e+00> : vector<16xf32>
    %478 = vector.multi_reduction <add>, %477, %cst_147 [1] : vector<16x32xf32> to vector<16xf32>
    %479 = vector.shape_cast %478 : vector<16xf32> to vector<16x1xf32>
    %cst_148 = arith.constant 3.200000e+01 : f32
    %480 = vector.broadcast %cst_148 : f32 to vector<16x1xf32>
    %481 = arith.divf %479, %480 : vector<16x1xf32>
    %482 = vector.broadcast %481 : vector<16x1xf32> to vector<16x32xf32>
    %483 = arith.subf %477, %482 : vector<16x32xf32>
    %484 = arith.mulf %483, %483 : vector<16x32xf32>
    %cst_149 = arith.constant dense<0.000000e+00> : vector<16xf32>
    %485 = vector.multi_reduction <add>, %484, %cst_149 [1] : vector<16x32xf32> to vector<16xf32>
    %486 = vector.shape_cast %485 : vector<16xf32> to vector<16x1xf32>
    %cst_150 = arith.constant 3.200000e+01 : f32
    %487 = vector.broadcast %cst_150 : f32 to vector<16x1xf32>
    %488 = arith.divf %486, %487 : vector<16x1xf32>
    %489 = vector.broadcast %481 : vector<16x1xf32> to vector<16x32xf32>
    %490 = arith.subf %477, %489 : vector<16x32xf32>
    %cst_151 = arith.constant 9.99999974E-6 : f32
    %491 = vector.broadcast %cst_151 : f32 to vector<16x1xf32>
    %492 = arith.addf %488, %491 : vector<16x1xf32>
    %493 = math.rsqrt %492 : vector<16x1xf32>
    %494 = vector.broadcast %493 : vector<16x1xf32> to vector<16x32xf32>
    %495 = arith.mulf %490, %494 : vector<16x32xf32>
    %496 = vector.broadcast %275 : vector<1x32xf32> to vector<16x32xf32>
    %497 = arith.mulf %495, %496 : vector<16x32xf32>
    %498 = vector.broadcast %276 : vector<1x32xf32> to vector<16x32xf32>
    %499 = arith.addf %497, %498 : vector<16x32xf32>
    %500 = vector.shape_cast %499 : vector<16x32xf32> to vector<2x8x32xf32>
    %c0_152 = arith.constant 0 : index
    %c0_153 = arith.constant 0 : index
    %c0_154 = arith.constant 0 : index
    %501 = vector.load %arg8[%c0_152, %c0_153, %c0_154] : memref<2x8x32xf32, #tpu.memory_space<vmem>>, vector<2x8x32xf32>
    tpu.vector_store %arg8[%c0_152, %c0_153, %c0_154], %500 {strides = array<i32>} : memref<2x8x32xf32, #tpu.memory_space<vmem>>, vector<2x8x32xf32>,
    return
  }
  func.func @transform_0(%arg0: i32) -> (i32, i32, i32) {
    %c0_i32 = arith.constant 0 : i32
    %c0_i32_0 = arith.constant 0 : i32
    %c0_i32_1 = arith.constant 0 : i32
    %c0_i32_2 = arith.constant 0 : i32
    return %c0_i32, %c0_i32_0, %c0_i32_1 : i32, i32, i32
  }
  func.func @transform_1(%arg0: i32) -> (i32, i32, i32) {
    %c0_i32 = arith.constant 0 : i32
    %c0_i32_0 = arith.constant 0 : i32
    %c0_i32_1 = arith.constant 0 : i32
    %c0_i32_2 = arith.constant 0 : i32
    return %c0_i32, %c0_i32_0, %c0_i32_1 : i32, i32, i32
  }
  func.func @transform_2(%arg0: i32) -> (i32, i32, i32) {
    %c0_i32 = arith.constant 0 : i32
    %c0_i32_0 = arith.constant 0 : i32
    %c0_i32_1 = arith.constant 0 : i32
    %c0_i32_2 = arith.constant 0 : i32
    return %c0_i32, %c0_i32_0, %c0_i32_1 : i32, i32, i32
  }
  func.func @transform_3(%arg0: i32) -> (i32, i32, i32) {
    %c0_i32 = arith.constant 0 : i32
    %c0_i32_0 = arith.constant 0 : i32
    %c0_i32_1 = arith.constant 0 : i32
    %c0_i32_2 = arith.constant 0 : i32
    return %c0_i32, %c0_i32_0, %c0_i32_1 : i32, i32, i32
  }
  func.func @transform_4(%arg0: i32) -> (i32, i32, i32) {
    %c0_i32 = arith.constant 0 : i32
    %c0_i32_0 = arith.constant 0 : i32
    %c0_i32_1 = arith.constant 0 : i32
    %c0_i32_2 = arith.constant 0 : i32
    return %c0_i32, %c0_i32_0, %c0_i32_1 : i32, i32, i32
  }
  func.func @transform_5(%arg0: i32) -> (i32, i32, i32) {
    %c0_i32 = arith.constant 0 : i32
    %c0_i32_0 = arith.constant 0 : i32
    %c0_i32_1 = arith.constant 0 : i32
    %c0_i32_2 = arith.constant 0 : i32
    return %c0_i32, %c0_i32_0, %c0_i32_1 : i32, i32, i32
  }
  func.func @transform_6(%arg0: i32) -> (i32, i32, i32) {
    %c0_i32 = arith.constant 0 : i32
    %c0_i32_0 = arith.constant 0 : i32
    %c0_i32_1 = arith.constant 0 : i32
    %c0_i32_2 = arith.constant 0 : i32
    return %c0_i32, %c0_i32_0, %c0_i32_1 : i32, i32, i32
  }
  func.func @transform_7(%arg0: i32) -> (i32, i32, i32) {
    %c0_i32 = arith.constant 0 : i32
    %c0_i32_0 = arith.constant 0 : i32
    %c0_i32_1 = arith.constant 0 : i32
    %c0_i32_2 = arith.constant 0 : i32
    return %c0_i32, %c0_i32_0, %c0_i32_1 : i32, i32, i32
  }
}

</mosaic_0001>

<llo_original>
// kernel: tpu_custom_call.1
$region0: #{tpu_custom_call.1}
  #allocation0 [shape = 'u32[]', space=smem, size = 0x4, offset = 0x4, fixed_abs, tag = 'smem constant byte address 0x4 - core index']
  #allocation1 [shape = 'u32[144,128]{1,0:T(1,128)}', space=vmem, size = 0x12000, scoped, tag = 'internal scratch']
  %s0 = inlined_call_operand.hbm [shape: f32[2,8,32], index: 0, kind: input, shape index: {}]
  %s1 = inlined_call_operand.vmem [shape: f32[2,1,8], index: 1, kind: input, shape index: {}]
  %s2 = inlined_call_operand.vmem [shape: f32[2,32,96], index: 2, kind: input, shape index: {}]
  %s3 = inlined_call_operand.vmem [shape: f32[2,32,32], index: 3, kind: input, shape index: {}]
  %s4 = inlined_call_operand.vmem [shape: f32[2,32,64], index: 4, kind: input, shape index: {}]
  %s5 = inlined_call_operand.vmem [shape: f32[2,64,32], index: 5, kind: input, shape index: {}]
  %s6 = inlined_call_operand.vmem [shape: f32[2,8,96], index: 6, kind: input, shape index: {}]
  %s7 = inlined_call_operand.hbm [shape: f32[2,8,32], index: 7, kind: output, shape index: {}]
  %s8 = sld [smem:[#allocation0]]
  $region42: #{tpu_custom_call.1} parent=0
    _
  %s10 = ssub.s32 1, %s8
  %s11 = scalar_select 0, %s10, %s8
  $region1: #{tpu_custom_call.1} parent=0
    #allocation2 [shape = 'u8[8192]{0}', space=vmem, size = 0x2000, scoped, tag = 'input window, operand 0, single buffered']
    #allocation3 [shape = 's32[1]{0}', space=sflag, size = 0x4, scoped, tag = 'scoped memory for tpu_custom_call.1']
    #allocation4 [shape = 's32[1]{0}', space=sflag, size = 0x4, scoped, tag = 'scoped memory for tpu_custom_call.1']
    #allocation5 [shape = 'u8[8192]{0}', space=vmem, size = 0x2000, scoped, tag = 'output window, operand 0, single buffered']
    %12 = vsyncpa [#allocation3], 0
    %13 = vsyncpa [#allocation4], 0
    // Predicated region
    $region2: #{tpu_custom_call.1} parent=1 // pred_check
      _
    $region3: #{tpu_custom_call.1} parent=1 // pred_check_branch
      %15 = sbr.rel (0) target = $region5
    $region4: #{tpu_custom_call.1} parent=1 // pred_region
      %s17 = ssub.s32 256, 256
      %18 = vsyncadd [#allocation3], %s17
      %s19 = sshll.u32 [#allocation2], 4
      %s20 = int_to_ptr.vmem [resolvable:$true] %s19
      %25 = dma.hbm_to_vmem [thread:$0]  %s0, 256, %s20, [#allocation3], 128, 128, 8
    $region5: #{tpu_custom_call.1} parent=1 // pred_fallthru
      _
    // Predicated region
    $region6: #{tpu_custom_call.1} parent=1 // pred_check
      _
    $region7: #{tpu_custom_call.1} parent=1 // pred_check_branch
      %27 = sbr.rel (0) target = $region9
    $region8: #{tpu_custom_call.1} parent=1 // pred_region
      _
    $region9: #{tpu_custom_call.1} parent=1 // pred_fallthru
      _
    // Predicated region
    $region10: #{tpu_custom_call.1} parent=1 // pred_check
      _
    $region11: #{tpu_custom_call.1} parent=1 // pred_check_branch
      %29 = sbr.rel (0) target = $region13
    $region12: #{tpu_custom_call.1} parent=1 // pred_region
      _
    $region13: #{tpu_custom_call.1} parent=1 // pred_fallthru
      _
    // Predicated region
    $region14: #{tpu_custom_call.1} parent=1 // pred_check
      _
    $region15: #{tpu_custom_call.1} parent=1 // pred_check_branch
      %31 = sbr.rel (0) target = $region17
    $region16: #{tpu_custom_call.1} parent=1 // pred_region
      _
    $region17: #{tpu_custom_call.1} parent=1 // pred_fallthru
      _
    // Predicated region
    $region18: #{tpu_custom_call.1} parent=1 // pred_check
      _
    $region19: #{tpu_custom_call.1} parent=1 // pred_check_branch
      %33 = sbr.rel (0) target = $region21
    $region20: #{tpu_custom_call.1} parent=1 // pred_region
      _
    $region21: #{tpu_custom_call.1} parent=1 // pred_fallthru
      _
    // Predicated region
    $region22: #{tpu_custom_call.1} parent=1 // pred_check
      _
    $region23: #{tpu_custom_call.1} parent=1 // pred_check_branch
      %35 = sbr.rel (0) target = $region25
    $region24: #{tpu_custom_call.1} parent=1 // pred_region
      _
    $region25: #{tpu_custom_call.1} parent=1 // pred_fallthru
      _
    // Predicated region
    $region26: #{tpu_custom_call.1} parent=1 // pred_check
      _
    $region27: #{tpu_custom_call.1} parent=1 // pred_check_branch
      %37 = sbr.rel (0) target = $region29
    $region28: #{tpu_custom_call.1} parent=1 // pred_region
      _
    $region29: #{tpu_custom_call.1} parent=1 // pred_fallthru
      _
    // Predicated region
    $region30: #{tpu_custom_call.1} parent=1 // pred_check
      _
    $region31: #{tpu_custom_call.1} parent=1 // pred_check_branch
      %39 = sbr.rel (0) target = $region33
    $region32: #{tpu_custom_call.1} parent=1 // pred_region
      %40 = dma.done [#allocation3], 256
    $region33: #{tpu_custom_call.1} parent=1 // pred_fallthru
      _
    %v41 = vld [vmem:[#allocation2] sm:$0xff]
    %v42 = vld [vmem:[#allocation2 + $0x8] sm:$0xff]
    %v43 = vld [vmem:[%s1] sm:$0x1]
    %v44 = vsub.f32 1.0, %v43
    %v45 = vmul.f32 %v44, -1e+09
    %v47 = vlaneseq
    %v48 = vshrl.u32 %v47, 7
    %v49 = vsub.s32 0, %v48
    %v50 = vrot.slane %v45, %v49
    %s52 = scalar_lea.vmem %s1, 1
    %v53 = vld [vmem:[%s52] sm:$0x1]
    %v54 = vsub.f32 1.0, %v53
    %v55 = vmul.f32 %v54, -1e+09
    %v57 = vlaneseq
    %v58 = vshrl.u32 %v57, 7
    %v59 = vsub.s32 0, %v58
    %v60 = vrot.slane %v55, %v59
    %v62 = vld [vmem:[%s2] sm:$0xff]
    %v63 = vld [vmem:[%s2 + $0x8] sm:$0xff]
    %v64 = vld [vmem:[%s2 + $0x10] sm:$0xff]
    %v65 = vld [vmem:[%s2 + $0x18] sm:$0xff]
    %v66 = vld [vmem:[%s3] sm:$0xff]
    %v67 = vld [vmem:[%s3 + $0x8] sm:$0xff]
    %v68 = vld [vmem:[%s3 + $0x10] sm:$0xff]
    %v69 = vld [vmem:[%s3 + $0x18] sm:$0xff]
    %v70 = vld [vmem:[%s4] sm:$0xff]
    %v71 = vld [vmem:[%s4 + $0x8] sm:$0xff]
    %v72 = vld [vmem:[%s4 + $0x10] sm:$0xff]
    %v73 = vld [vmem:[%s4 + $0x18] sm:$0xff]
    %v74 = vld [vmem:[%s5] sm:$0xff]
    %v75 = vld [vmem:[%s5 + $0x8] sm:$0xff]
    %v76 = vld [vmem:[%s5 + $0x10] sm:$0xff]
    %v77 = vld [vmem:[%s5 + $0x18] sm:$0xff]
    %v78 = vld [vmem:[%s5 + $0x20] sm:$0xff]
    %v79 = vld [vmem:[%s5 + $0x28] sm:$0xff]
    %v80 = vld [vmem:[%s5 + $0x30] sm:$0xff]
    %v81 = vld [vmem:[%s5 + $0x38] sm:$0xff]
    %v82 = vld [vmem:[%s6] sm:$0xff]
    %v83 = vlaneseq
    %v84 = vshrl.u32 %v83, 7
    %v85 = vsub.s32 0, %v84
    %v86 = vrot.slane %v82, %v85
    %vm87 = vcmask 261120
    %v89 = vsel %vm87, %v41, 0
    %v92 = vsel %vm87, %v42, 0
    %94 = vmatprep.subr.mxu0 0.0
    %95 = vmatpush1.msra.mxu0 %v62
    %96 = vmatprep.subr.mxu0 0.0
    %97 = vmatpush1.msra.mxu0 %v63
    %98 = vmatprep.subr.mxu0 0.0
    %99 = vmatpush1.msra.mxu0 %v64
    %100 = vmatprep.subr.mxu0 0.0
    %101 = vmatpush1.msra.mxu0 %v65
    %102 = vmatprep.subr.mxu0 0.0
    %103 = vmatpush1.msra.mxu0 0.0
    %104 = vmatprep.subr.mxu0 0.0
    %105 = vmatpush1.msra.mxu0 0.0
    %106 = vmatprep.subr.mxu0 0.0
    %107 = vmatpush1.msra.mxu0 0.0
    %108 = vmatprep.subr.mxu0 0.0
    %109 = vmatpush1.msra.mxu0 0.0
    %110 = vmatprep.subr.mxu0 0.0
    %111 = vmatpush1.msra.mxu0 0.0
    %112 = vmatprep.subr.mxu0 0.0
    %113 = vmatpush1.msra.mxu0 0.0
    %114 = vmatprep.subr.mxu0 0.0
    %115 = vmatpush1.msra.mxu0 0.0
    %116 = vmatprep.subr.mxu0 0.0
    %117 = vmatpush1.msra.mxu0 0.0
    %118 = vmatprep.subr.mxu0 0.0
    %119 = vmatpush1.msra.mxu0 0.0
    %120 = vmatprep.subr.mxu0 0.0
    %121 = vmatpush1.msra.mxu0 0.0
    %122 = vmatprep.subr.mxu0 0.0
    %123 = vmatpush1.msra.mxu0 0.0
    %124 = vmatprep.subr.mxu0 0.0
    %125 = vmatpush1.msra.mxu0 0.0
    %126 = vmatprep.subr.mxu0 0.0
    %127 = vmatpush1.msra.mxu0 0.0
    %128 = vmatprep.subr.mxu0 0.0
    %129 = vmatpush1.msra.mxu0 0.0
    %130 = vmatprep.subr.mxu0 0.0
    %131 = vmatpush1.msra.mxu0 0.0
    %132 = vmatprep.subr.mxu0 0.0
    %133 = vmatpush1.msra.mxu0 0.0
    %134 = vmatprep.subr.mxu0 0.0
    %135 = vmatpush1.msra.mxu0 0.0
    %136 = vmatprep.subr.mxu0 0.0
    %137 = vmatpush1.msra.mxu0 0.0
    %138 = vmatprep.subr.mxu0 0.0
    %139 = vmatpush1.msra.mxu0 0.0
    %140 = vmatprep.subr.mxu0 0.0
    %141 = vmatpush1.msra.mxu0 0.0
    %142 = vmatprep.subr.mxu0 0.0
    %143 = vmatpush1.msra.mxu0 0.0
    %144 = vmatprep.subr.mxu0 0.0
    %145 = vmatpush1.msra.mxu0 0.0
    %146 = vmatprep.subr.mxu0 0.0
    %147 = vmatpush1.msra.mxu0 0.0
    %148 = vmatprep.subr.mxu0 0.0
    %149 = vmatpush1.msra.mxu0 0.0
    %150 = vmatprep.subr.mxu0 0.0
    %151 = vmatpush1.msra.mxu0 0.0
    %152 = vmatprep.subr.mxu0 0.0
    %153 = vmatpush1.msra.mxu0 0.0
    %154 = vmatprep.subr.mxu0 0.0
    %155 = vmatpush1.msra.mxu0 0.0
    %156 = vmatprep.subr.mxu0 0.0
    %157 = vmatpush1.msra.mxu0 0.0
    %158 = vmatprep.mubr.f32.mxu0 0.0
    %159 = vmatmul.mubr.f32.gmra.mrb[0].mxu0 %v89
    %v160 = vpop.f32.mrb[0].mxu0
    %v161 = vadd.f32 %v86, %v160
    %v162 = vpop.f32.mrb[0].mxu0
    %163 = vmatprep.mubr.f32.mxu0 0.0
    %164 = vmatmul.mubr.f32.gmra.mrb[0].mxu0 %v92
    %v165 = vpop.f32.mrb[0].mxu0
    %v166 = vadd.f32 %v86, %v165
    %v167 = vpop.f32.mrb[0].mxu0
    %168 = vdwg.mxu0
    %170 = vrot.lane.b32.xlu0 %v161, 96
    %v171 = vpop.permute.xlu0 %170
    %vm172 = vcmask 64512
    %v173 = vsel %vm172, %v161, 0
    %v175 = vsel %vm172, %v171, 0
    %177 = vmatprep.subr.mxu0 0.0
    %178 = vmatpush1.xpose.msra.mxu0 %v175
    %179 = vmatprep.subr.mxu0 0.0
    %180 = vmatpush1.xpose.msra.mxu0 0.0
    %181 = vmatprep.subr.mxu0 0.0
    %182 = vmatpush1.xpose.msra.mxu0 0.0
    %183 = vmatprep.subr.mxu0 0.0
    %184 = vmatpush1.xpose.msra.mxu0 0.0
    %185 = vmatprep.subr.mxu0 0.0
    %186 = vmatpush1.xpose.msra.mxu0 0.0
    %187 = vmatprep.subr.mxu0 0.0
    %188 = vmatpush1.xpose.msra.mxu0 0.0
    %189 = vmatprep.subr.mxu0 0.0
    %190 = vmatpush1.xpose.msra.mxu0 0.0
    %191 = vmatprep.subr.mxu0 0.0
    %192 = vmatpush1.xpose.msra.mxu0 0.0
    %193 = vmatprep.subr.mxu0 0.0
    %194 = vmatpush1.xpose.msra.mxu0 0.0
    %195 = vmatprep.subr.mxu0 0.0
    %196 = vmatpush1.xpose.msra.mxu0 0.0
    %197 = vmatprep.subr.mxu0 0.0
    %198 = vmatpush1.xpose.msra.mxu0 0.0
    %199 = vmatprep.subr.mxu0 0.0
    %200 = vmatpush1.xpose.msra.mxu0 0.0
    %201 = vmatprep.subr.mxu0 0.0
    %202 = vmatpush1.xpose.msra.mxu0 0.0
    %203 = vmatprep.subr.mxu0 0.0
    %204 = vmatpush1.xpose.msra.mxu0 0.0
    %205 = vmatprep.subr.mxu0 0.0
    %206 = vmatpush1.xpose.msra.mxu0 0.0
    %207 = vmatprep.subr.mxu0 0.0
    %208 = vmatpush1.xpose.msra.mxu0 0.0
    %209 = vmatprep.subr.mxu0 0.0
    %210 = vmatpush1.xpose.msra.mxu0 0.0
    %211 = vmatprep.subr.mxu0 0.0
    %212 = vmatpush1.xpose.msra.mxu0 0.0
    %213 = vmatprep.subr.mxu0 0.0
    %214 = vmatpush1.xpose.msra.mxu0 0.0
    %215 = vmatprep.subr.mxu0 0.0
    %216 = vmatpush1.xpose.msra.mxu0 0.0
    %217 = vmatprep.subr.mxu0 0.0
    %218 = vmatpush1.xpose.msra.mxu0 0.0
    %219 = vmatprep.subr.mxu0 0.0
    %220 = vmatpush1.xpose.msra.mxu0 0.0
    %221 = vmatprep.subr.mxu0 0.0
    %222 = vmatpush1.xpose.msra.mxu0 0.0
    %223 = vmatprep.subr.mxu0 0.0
    %224 = vmatpush1.xpose.msra.mxu0 0.0
    %225 = vmatprep.subr.mxu0 0.0
    %226 = vmatpush1.xpose.msra.mxu0 0.0
    %227 = vmatprep.subr.mxu0 0.0
    %228 = vmatpush1.xpose.msra.mxu0 0.0
    %229 = vmatprep.subr.mxu0 0.0
    %230 = vmatpush1.xpose.msra.mxu0 0.0
    %231 = vmatprep.subr.mxu0 0.0
    %232 = vmatpush1.xpose.msra.mxu0 0.0
    %233 = vmatprep.subr.mxu0 0.0
    %234 = vmatpush1.xpose.msra.mxu0 0.0
    %235 = vmatprep.subr.mxu0 0.0
    %236 = vmatpush1.xpose.msra.mxu0 0.0
    %237 = vmatprep.subr.mxu0 0.0
    %238 = vmatpush1.xpose.msra.mxu0 0.0
    %239 = vmatprep.subr.mxu0 0.0
    %240 = vmatpush1.xpose.msra.mxu0 0.0
    %241 = vmatprep.mubr.f32.mxu0 0.0
    %242 = vmatmul.mubr.f32.gmra.mrb[0].mxu0 %v173
    %v243 = vpop.f32.mrb[0].mxu0
    %v244 = vadd.f32 %v50, %v243
    %v245 = vpop.f32.mrb[0].mxu0
    %246 = vdwg.mxu0
    %v247 = vsel %vm172, %v244, -inf
    %248 = vmax.xlane.f32.xlu0 %v247
    %v249 = vpop.xlane.xlu0 %248
    %v250 = vsub.f32 %v244, %v249
    %v251 = vmul.f32 %v250, 1.442695
    %v252 = vpow.pop %v251
    %v253 = vsel %vm172, %v252, 0.0
    %254 = vadd.xlane.f32.xlu0 %v253
    %v255 = vpop.xlane.xlu0 %254
    %v256 = vrcp.pop %v255
    %v257 = vmul.f32 %v252, %v256
    %258 = vrot.lane.b32.xlu0 %v161, 64
    %v259 = vpop.permute.xlu0 %258
    %v262 = vsel %vm172, %v257, 0
    %264 = vmatprep.subr.mxu0 0.0
    %265 = vmatpush1.msra.mxu0 %v259
    %266 = vmatprep.subr.mxu0 0.0
    %267 = vmatpush1.msra.mxu0 0.0
    %268 = vmatprep.subr.mxu0 0.0
    %269 = vmatpush1.msra.mxu0 0.0
    %270 = vmatprep.subr.mxu0 0.0
    %271 = vmatpush1.msra.mxu0 0.0
    %272 = vmatprep.subr.mxu0 0.0
    %273 = vmatpush1.msra.mxu0 0.0
    %274 = vmatprep.subr.mxu0 0.0
    %275 = vmatpush1.msra.mxu0 0.0
    %276 = vmatprep.subr.mxu0 0.0
    %277 = vmatpush1.msra.mxu0 0.0
    %278 = vmatprep.subr.mxu0 0.0
    %279 = vmatpush1.msra.mxu0 0.0
    %280 = vmatprep.subr.mxu0 0.0
    %281 = vmatpush1.msra.mxu0 0.0
    %282 = vmatprep.subr.mxu0 0.0
    %283 = vmatpush1.msra.mxu0 0.0
    %284 = vmatprep.subr.mxu0 0.0
    %285 = vmatpush1.msra.mxu0 0.0
    %286 = vmatprep.subr.mxu0 0.0
    %287 = vmatpush1.msra.mxu0 0.0
    %288 = vmatprep.subr.mxu0 0.0
    %289 = vmatpush1.msra.mxu0 0.0
    %290 = vmatprep.subr.mxu0 0.0
    %291 = vmatpush1.msra.mxu0 0.0
    %292 = vmatprep.subr.mxu0 0.0
    %293 = vmatpush1.msra.mxu0 0.0
    %294 = vmatprep.subr.mxu0 0.0
    %295 = vmatpush1.msra.mxu0 0.0
    %296 = vmatprep.subr.mxu0 0.0
    %297 = vmatpush1.msra.mxu0 0.0
    %298 = vmatprep.subr.mxu0 0.0
    %299 = vmatpush1.msra.mxu0 0.0
    %300 = vmatprep.subr.mxu0 0.0
    %301 = vmatpush1.msra.mxu0 0.0
    %302 = vmatprep.subr.mxu0 0.0
    %303 = vmatpush1.msra.mxu0 0.0
    %304 = vmatprep.subr.mxu0 0.0
    %305 = vmatpush1.msra.mxu0 0.0
    %306 = vmatprep.subr.mxu0 0.0
    %307 = vmatpush1.msra.mxu0 0.0
    %308 = vmatprep.subr.mxu0 0.0
    %309 = vmatpush1.msra.mxu0 0.0
    %310 = vmatprep.subr.mxu0 0.0
    %311 = vmatpush1.msra.mxu0 0.0
    %312 = vmatprep.subr.mxu0 0.0
    %313 = vmatpush1.msra.mxu0 0.0
    %314 = vmatprep.subr.mxu0 0.0
    %315 = vmatpush1.msra.mxu0 0.0
    %316 = vmatprep.subr.mxu0 0.0
    %317 = vmatpush1.msra.mxu0 0.0
    %318 = vmatprep.subr.mxu0 0.0
    %319 = vmatpush1.msra.mxu0 0.0
    %320 = vmatprep.subr.mxu0 0.0
    %321 = vmatpush1.msra.mxu0 0.0
    %322 = vmatprep.subr.mxu0 0.0
    %323 = vmatpush1.msra.mxu0 0.0
    %324 = vmatprep.subr.mxu0 0.0
    %325 = vmatpush1.msra.mxu0 0.0
    %326 = vmatprep.subr.mxu0 0.0
    %327 = vmatpush1.msra.mxu0 0.0
    %328 = vmatprep.mubr.f32.mxu0 0.0
    %329 = vmatmul.mubr.f32.gmra.mrb[0].mxu0 %v262
    %v330 = vpop.f32.mrb[0].mxu0
    %v331 = vadd.f32 0.0, %v330
    %v332 = vpop.f32.mrb[0].mxu0
    %333 = vdwg.mxu0
    %334 = vrot.lane.b32.xlu0 %v161, 120
    %v335 = vpop.permute.xlu0 %334
    %336 = vrot.lane.b32.xlu0 %v161, 88
    %v337 = vpop.permute.xlu0 %336
    %v338 = vsel %vm172, %v335, 0
    %v340 = vsel %vm172, %v337, 0
    %342 = vmatprep.subr.mxu0 0.0
    %343 = vmatpush1.xpose.msra.mxu0 %v340
    %344 = vmatprep.subr.mxu0 0.0
    %345 = vmatpush1.xpose.msra.mxu0 0.0
    %346 = vmatprep.subr.mxu0 0.0
    %347 = vmatpush1.xpose.msra.mxu0 0.0
    %348 = vmatprep.subr.mxu0 0.0
    %349 = vmatpush1.xpose.msra.mxu0 0.0
    %350 = vmatprep.subr.mxu0 0.0
    %351 = vmatpush1.xpose.msra.mxu0 0.0
    %352 = vmatprep.subr.mxu0 0.0
    %353 = vmatpush1.xpose.msra.mxu0 0.0
    %354 = vmatprep.subr.mxu0 0.0
    %355 = vmatpush1.xpose.msra.mxu0 0.0
    %356 = vmatprep.subr.mxu0 0.0
    %357 = vmatpush1.xpose.msra.mxu0 0.0
    %358 = vmatprep.subr.mxu0 0.0
    %359 = vmatpush1.xpose.msra.mxu0 0.0
    %360 = vmatprep.subr.mxu0 0.0
    %361 = vmatpush1.xpose.msra.mxu0 0.0
    %362 = vmatprep.subr.mxu0 0.0
    %363 = vmatpush1.xpose.msra.mxu0 0.0
    %364 = vmatprep.subr.mxu0 0.0
    %365 = vmatpush1.xpose.msra.mxu0 0.0
    %366 = vmatprep.subr.mxu0 0.0
    %367 = vmatpush1.xpose.msra.mxu0 0.0
    %368 = vmatprep.subr.mxu0 0.0
    %369 = vmatpush1.xpose.msra.mxu0 0.0
    %370 = vmatprep.subr.mxu0 0.0
    %371 = vmatpush1.xpose.msra.mxu0 0.0
    %372 = vmatprep.subr.mxu0 0.0
    %373 = vmatpush1.xpose.msra.mxu0 0.0
    %374 = vmatprep.subr.mxu0 0.0
    %375 = vmatpush1.xpose.msra.mxu0 0.0
    %376 = vmatprep.subr.mxu0 0.0
    %377 = vmatpush1.xpose.msra.mxu0 0.0
    %378 = vmatprep.subr.mxu0 0.0
    %379 = vmatpush1.xpose.msra.mxu0 0.0
    %380 = vmatprep.subr.mxu0 0.0
    %381 = vmatpush1.xpose.msra.mxu0 0.0
    %382 = vmatprep.subr.mxu0 0.0
    %383 = vmatpush1.xpose.msra.mxu0 0.0
    %384 = vmatprep.subr.mxu0 0.0
    %385 = vmatpush1.xpose.msra.mxu0 0.0
    %386 = vmatprep.subr.mxu0 0.0
    %387 = vmatpush1.xpose.msra.mxu0 0.0
    %388 = vmatprep.subr.mxu0 0.0
    %389 = vmatpush1.xpose.msra.mxu0 0.0
    %390 = vmatprep.subr.mxu0 0.0
    %391 = vmatpush1.xpose.msra.mxu0 0.0
    %392 = vmatprep.subr.mxu0 0.0
    %393 = vmatpush1.xpose.msra.mxu0 0.0
    %394 = vmatprep.subr.mxu0 0.0
    %395 = vmatpush1.xpose.msra.mxu0 0.0
    %396 = vmatprep.subr.mxu0 0.0
    %397 = vmatpush1.xpose.msra.mxu0 0.0
    %398 = vmatprep.subr.mxu0 0.0
    %399 = vmatpush1.xpose.msra.mxu0 0.0
    %400 = vmatprep.subr.mxu0 0.0
    %401 = vmatpush1.xpose.msra.mxu0 0.0
    %402 = vmatprep.subr.mxu0 0.0
    %403 = vmatpush1.xpose.msra.mxu0 0.0
    %404 = vmatprep.subr.mxu0 0.0
    %405 = vmatpush1.xpose.msra.mxu0 0.0
    %406 = vmatprep.mubr.f32.mxu0 0.0
    %407 = vmatmul.mubr.f32.gmra.mrb[0].mxu0 %v338
    %v408 = vpop.f32.mrb[0].mxu0
    %v409 = vadd.f32 %v50, %v408
    %v410 = vpop.f32.mrb[0].mxu0
    %411 = vdwg.mxu0
    %v412 = vsel %vm172, %v409, -inf
    %413 = vmax.xlane.f32.xlu0 %v412
    %v414 = vpop.xlane.xlu0 %413
    %v415 = vsub.f32 %v409, %v414
    %v416 = vmul.f32 %v415, 1.442695
    %v417 = vpow.pop %v416
    %v418 = vsel %vm172, %v417, 0.0
    %419 = vadd.xlane.f32.xlu0 %v418
    %v420 = vpop.xlane.xlu0 %419
    %v421 = vrcp.pop %v420
    %v422 = vmul.f32 %v417, %v421
    %423 = vrot.lane.b32.xlu0 %v161, 56
    %v424 = vpop.permute.xlu0 %423
    %v427 = vsel %vm172, %v422, 0
    %429 = vmatprep.subr.mxu0 0.0
    %430 = vmatpush1.msra.mxu0 %v424
    %431 = vmatprep.subr.mxu0 0.0
    %432 = vmatpush1.msra.mxu0 0.0
    %433 = vmatprep.subr.mxu0 0.0
    %434 = vmatpush1.msra.mxu0 0.0
    %435 = vmatprep.subr.mxu0 0.0
    %436 = vmatpush1.msra.mxu0 0.0
    %437 = vmatprep.subr.mxu0 0.0
    %438 = vmatpush1.msra.mxu0 0.0
    %439 = vmatprep.subr.mxu0 0.0
    %440 = vmatpush1.msra.mxu0 0.0
    %441 = vmatprep.subr.mxu0 0.0
    %442 = vmatpush1.msra.mxu0 0.0
    %443 = vmatprep.subr.mxu0 0.0
    %444 = vmatpush1.msra.mxu0 0.0
    %445 = vmatprep.subr.mxu0 0.0
    %446 = vmatpush1.msra.mxu0 0.0
    %447 = vmatprep.subr.mxu0 0.0
    %448 = vmatpush1.msra.mxu0 0.0
    %449 = vmatprep.subr.mxu0 0.0
    %450 = vmatpush1.msra.mxu0 0.0
    %451 = vmatprep.subr.mxu0 0.0
    %452 = vmatpush1.msra.mxu0 0.0
    %453 = vmatprep.subr.mxu0 0.0
    %454 = vmatpush1.msra.mxu0 0.0
    %455 = vmatprep.subr.mxu0 0.0
    %456 = vmatpush1.msra.mxu0 0.0
    %457 = vmatprep.subr.mxu0 0.0
    %458 = vmatpush1.msra.mxu0 0.0
    %459 = vmatprep.subr.mxu0 0.0
    %460 = vmatpush1.msra.mxu0 0.0
    %461 = vmatprep.subr.mxu0 0.0
    %462 = vmatpush1.msra.mxu0 0.0
    %463 = vmatprep.subr.mxu0 0.0
    %464 = vmatpush1.msra.mxu0 0.0
    %465 = vmatprep.subr.mxu0 0.0
    %466 = vmatpush1.msra.mxu0 0.0
    %467 = vmatprep.subr.mxu0 0.0
    %468 = vmatpush1.msra.mxu0 0.0
    %469 = vmatprep.subr.mxu0 0.0
    %470 = vmatpush1.msra.mxu0 0.0
    %471 = vmatprep.subr.mxu0 0.0
    %472 = vmatpush1.msra.mxu0 0.0
    %473 = vmatprep.subr.mxu0 0.0
    %474 = vmatpush1.msra.mxu0 0.0
    %475 = vmatprep.subr.mxu0 0.0
    %476 = vmatpush1.msra.mxu0 0.0
    %477 = vmatprep.subr.mxu0 0.0
    %478 = vmatpush1.msra.mxu0 0.0
    %479 = vmatprep.subr.mxu0 0.0
    %480 = vmatpush1.msra.mxu0 0.0
    %481 = vmatprep.subr.mxu0 0.0
    %482 = vmatpush1.msra.mxu0 0.0
    %483 = vmatprep.subr.mxu0 0.0
    %484 = vmatpush1.msra.mxu0 0.0
    %485 = vmatprep.subr.mxu0 0.0
    %486 = vmatpush1.msra.mxu0 0.0
    %487 = vmatprep.subr.mxu0 0.0
    %488 = vmatpush1.msra.mxu0 0.0
    %489 = vmatprep.subr.mxu0 0.0
    %490 = vmatpush1.msra.mxu0 0.0
    %491 = vmatprep.subr.mxu0 0.0
    %492 = vmatpush1.msra.mxu0 0.0
    %493 = vmatprep.mubr.f32.mxu0 0.0
    %494 = vmatmul.mubr.f32.gmra.mrb[0].mxu0 %v427
    %v495 = vpop.f32.mrb[0].mxu0
    %v496 = vadd.f32 0.0, %v495
    %v497 = vpop.f32.mrb[0].mxu0
    %498 = vdwg.mxu0
    %v500 = vsel %vm172, %v496, 0
    %502 = vmatprep.subr.mxu0 0.0
    %503 = vmatpush1.msra.mxu0 %v67
    %504 = vmatprep.subr.mxu0 0.0
    %505 = vmatpush1.msra.mxu0 0.0
    %506 = vmatprep.subr.mxu0 0.0
    %507 = vmatpush1.msra.mxu0 0.0
    %508 = vmatprep.subr.mxu0 0.0
    %509 = vmatpush1.msra.mxu0 0.0
    %510 = vmatprep.subr.mxu0 0.0
    %511 = vmatpush1.msra.mxu0 0.0
    %512 = vmatprep.subr.mxu0 0.0
    %513 = vmatpush1.msra.mxu0 0.0
    %514 = vmatprep.subr.mxu0 0.0
    %515 = vmatpush1.msra.mxu0 0.0
    %516 = vmatprep.subr.mxu0 0.0
    %517 = vmatpush1.msra.mxu0 0.0
    %518 = vmatprep.subr.mxu0 0.0
    %519 = vmatpush1.msra.mxu0 0.0
    %520 = vmatprep.subr.mxu0 0.0
    %521 = vmatpush1.msra.mxu0 0.0
    %522 = vmatprep.subr.mxu0 0.0
    %523 = vmatpush1.msra.mxu0 0.0
    %524 = vmatprep.subr.mxu0 0.0
    %525 = vmatpush1.msra.mxu0 0.0
    %526 = vmatprep.subr.mxu0 0.0
    %527 = vmatpush1.msra.mxu0 0.0
    %528 = vmatprep.subr.mxu0 0.0
    %529 = vmatpush1.msra.mxu0 0.0
    %530 = vmatprep.subr.mxu0 0.0
    %531 = vmatpush1.msra.mxu0 0.0
    %532 = vmatprep.subr.mxu0 0.0
    %533 = vmatpush1.msra.mxu0 0.0
    %534 = vmatprep.subr.mxu0 0.0
    %535 = vmatpush1.msra.mxu0 0.0
    %536 = vmatprep.subr.mxu0 0.0
    %537 = vmatpush1.msra.mxu0 0.0
    %538 = vmatprep.subr.mxu0 0.0
    %539 = vmatpush1.msra.mxu0 0.0
    %540 = vmatprep.subr.mxu0 0.0
    %541 = vmatpush1.msra.mxu0 0.0
    %542 = vmatprep.subr.mxu0 0.0
    %543 = vmatpush1.msra.mxu0 0.0
    %544 = vmatprep.subr.mxu0 0.0
    %545 = vmatpush1.msra.mxu0 0.0
    %546 = vmatprep.subr.mxu0 0.0
    %547 = vmatpush1.msra.mxu0 0.0
    %548 = vmatprep.subr.mxu0 0.0
    %549 = vmatpush1.msra.mxu0 0.0
    %550 = vmatprep.subr.mxu0 0.0
    %551 = vmatpush1.msra.mxu0 0.0
    %552 = vmatprep.subr.mxu0 0.0
    %553 = vmatpush1.msra.mxu0 0.0
    %554 = vmatprep.subr.mxu0 0.0
    %555 = vmatpush1.msra.mxu0 0.0
    %556 = vmatprep.subr.mxu0 0.0
    %557 = vmatpush1.msra.mxu0 0.0
    %558 = vmatprep.subr.mxu0 0.0
    %559 = vmatpush1.msra.mxu0 0.0
    %560 = vmatprep.subr.mxu0 0.0
    %561 = vmatpush1.msra.mxu0 0.0
    %562 = vmatprep.subr.mxu0 0.0
    %563 = vmatpush1.msra.mxu0 0.0
    %564 = vmatprep.subr.mxu0 0.0
    %565 = vmatpush1.msra.mxu0 0.0
    %566 = vmatprep.mubr.f32.mxu0 0.0
    %567 = vmatmul.mubr.f32.gmra.mrb[0].mxu0 %v500
    %v568 = vpop.f32.mrb[0].mxu0
    %v569 = vadd.f32 0.0, %v568
    %v570 = vpop.f32.mrb[0].mxu0
    %571 = vdwg.mxu0
    %v573 = vsel %vm172, %v331, 0
    %575 = vmatprep.subr.mxu0 0.0
    %576 = vmatpush1.msra.mxu0 %v66
    %577 = vmatprep.subr.mxu0 0.0
    %578 = vmatpush1.msra.mxu0 0.0
    %579 = vmatprep.subr.mxu0 0.0
    %580 = vmatpush1.msra.mxu0 0.0
    %581 = vmatprep.subr.mxu0 0.0
    %582 = vmatpush1.msra.mxu0 0.0
    %583 = vmatprep.subr.mxu0 0.0
    %584 = vmatpush1.msra.mxu0 0.0
    %585 = vmatprep.subr.mxu0 0.0
    %586 = vmatpush1.msra.mxu0 0.0
    %587 = vmatprep.subr.mxu0 0.0
    %588 = vmatpush1.msra.mxu0 0.0
    %589 = vmatprep.subr.mxu0 0.0
    %590 = vmatpush1.msra.mxu0 0.0
    %591 = vmatprep.subr.mxu0 0.0
    %592 = vmatpush1.msra.mxu0 0.0
    %593 = vmatprep.subr.mxu0 0.0
    %594 = vmatpush1.msra.mxu0 0.0
    %595 = vmatprep.subr.mxu0 0.0
    %596 = vmatpush1.msra.mxu0 0.0
    %597 = vmatprep.subr.mxu0 0.0
    %598 = vmatpush1.msra.mxu0 0.0
    %599 = vmatprep.subr.mxu0 0.0
    %600 = vmatpush1.msra.mxu0 0.0
    %601 = vmatprep.subr.mxu0 0.0
    %602 = vmatpush1.msra.mxu0 0.0
    %603 = vmatprep.subr.mxu0 0.0
    %604 = vmatpush1.msra.mxu0 0.0
    %605 = vmatprep.subr.mxu0 0.0
    %606 = vmatpush1.msra.mxu0 0.0
    %607 = vmatprep.subr.mxu0 0.0
    %608 = vmatpush1.msra.mxu0 0.0
    %609 = vmatprep.subr.mxu0 0.0
    %610 = vmatpush1.msra.mxu0 0.0
    %611 = vmatprep.subr.mxu0 0.0
    %612 = vmatpush1.msra.mxu0 0.0
    %613 = vmatprep.subr.mxu0 0.0
    %614 = vmatpush1.msra.mxu0 0.0
    %615 = vmatprep.subr.mxu0 0.0
    %616 = vmatpush1.msra.mxu0 0.0
    %617 = vmatprep.subr.mxu0 0.0
    %618 = vmatpush1.msra.mxu0 0.0
    %619 = vmatprep.subr.mxu0 0.0
    %620 = vmatpush1.msra.mxu0 0.0
    %621 = vmatprep.subr.mxu0 0.0
    %622 = vmatpush1.msra.mxu0 0.0
    %623 = vmatprep.subr.mxu0 0.0
    %624 = vmatpush1.msra.mxu0 0.0
    %625 = vmatprep.subr.mxu0 0.0
    %626 = vmatpush1.msra.mxu0 0.0
    %627 = vmatprep.subr.mxu0 0.0
    %628 = vmatpush1.msra.mxu0 0.0
    %629 = vmatprep.subr.mxu0 0.0
    %630 = vmatpush1.msra.mxu0 0.0
    %631 = vmatprep.subr.mxu0 0.0
    %632 = vmatpush1.msra.mxu0 0.0
    %633 = vmatprep.subr.mxu0 0.0
    %634 = vmatpush1.msra.mxu0 0.0
    %635 = vmatprep.subr.mxu0 0.0
    %636 = vmatpush1.msra.mxu0 0.0
    %637 = vmatprep.subr.mxu0 0.0
    %638 = vmatpush1.msra.mxu0 0.0
    %639 = vmatprep.mubr.f32.mxu0 0.0
    %640 = vmatmul.mubr.f32.gmra.mrb[0].mxu0 %v573
    %v641 = vpop.f32.mrb[0].mxu0
    %v642 = vadd.f32 %v569, %v641
    %v643 = vpop.f32.mrb[0].mxu0
    %644 = vdwg.mxu0
    %645 = vrot.lane.b32.xlu0 %v161, 112
    %v646 = vpop.permute.xlu0 %645
    %647 = vrot.lane.b32.xlu0 %v161, 80
    %v648 = vpop.permute.xlu0 %647
    %v649 = vsel %vm172, %v646, 0
    %v651 = vsel %vm172, %v648, 0
    %653 = vmatprep.subr.mxu0 0.0
    %654 = vmatpush1.xpose.msra.mxu0 %v651
    %655 = vmatprep.subr.mxu0 0.0
    %656 = vmatpush1.xpose.msra.mxu0 0.0
    %657 = vmatprep.subr.mxu0 0.0
    %658 = vmatpush1.xpose.msra.mxu0 0.0
    %659 = vmatprep.subr.mxu0 0.0
    %660 = vmatpush1.xpose.msra.mxu0 0.0
    %661 = vmatprep.subr.mxu0 0.0
    %662 = vmatpush1.xpose.msra.mxu0 0.0
    %663 = vmatprep.subr.mxu0 0.0
    %664 = vmatpush1.xpose.msra.mxu0 0.0
    %665 = vmatprep.subr.mxu0 0.0
    %666 = vmatpush1.xpose.msra.mxu0 0.0
    %667 = vmatprep.subr.mxu0 0.0
    %668 = vmatpush1.xpose.msra.mxu0 0.0
    %669 = vmatprep.subr.mxu0 0.0
    %670 = vmatpush1.xpose.msra.mxu0 0.0
    %671 = vmatprep.subr.mxu0 0.0
    %672 = vmatpush1.xpose.msra.mxu0 0.0
    %673 = vmatprep.subr.mxu0 0.0
    %674 = vmatpush1.xpose.msra.mxu0 0.0
    %675 = vmatprep.subr.mxu0 0.0
    %676 = vmatpush1.xpose.msra.mxu0 0.0
    %677 = vmatprep.subr.mxu0 0.0
    %678 = vmatpush1.xpose.msra.mxu0 0.0
    %679 = vmatprep.subr.mxu0 0.0
    %680 = vmatpush1.xpose.msra.mxu0 0.0
    %681 = vmatprep.subr.mxu0 0.0
    %682 = vmatpush1.xpose.msra.mxu0 0.0
    %683 = vmatprep.subr.mxu0 0.0
    %684 = vmatpush1.xpose.msra.mxu0 0.0
    %685 = vmatprep.subr.mxu0 0.0
    %686 = vmatpush1.xpose.msra.mxu0 0.0
    %687 = vmatprep.subr.mxu0 0.0
    %688 = vmatpush1.xpose.msra.mxu0 0.0
    %689 = vmatprep.subr.mxu0 0.0
    %690 = vmatpush1.xpose.msra.mxu0 0.0
    %691 = vmatprep.subr.mxu0 0.0
    %692 = vmatpush1.xpose.msra.mxu0 0.0
    %693 = vmatprep.subr.mxu0 0.0
    %694 = vmatpush1.xpose.msra.mxu0 0.0
    %695 = vmatprep.subr.mxu0 0.0
    %696 = vmatpush1.xpose.msra.mxu0 0.0
    %697 = vmatprep.subr.mxu0 0.0
    %698 = vmatpush1.xpose.msra.mxu0 0.0
    %699 = vmatprep.subr.mxu0 0.0
    %700 = vmatpush1.xpose.msra.mxu0 0.0
    %701 = vmatprep.subr.mxu0 0.0
    %702 = vmatpush1.xpose.msra.mxu0 0.0
    %703 = vmatprep.subr.mxu0 0.0
    %704 = vmatpush1.xpose.msra.mxu0 0.0
    %705 = vmatprep.subr.mxu0 0.0
    %706 = vmatpush1.xpose.msra.mxu0 0.0
    %707 = vmatprep.subr.mxu0 0.0
    %708 = vmatpush1.xpose.msra.mxu0 0.0
    %709 = vmatprep.subr.mxu0 0.0
    %710 = vmatpush1.xpose.msra.mxu0 0.0
    %711 = vmatprep.subr.mxu0 0.0
    %712 = vmatpush1.xpose.msra.mxu0 0.0
    %713 = vmatprep.subr.mxu0 0.0
    %714 = vmatpush1.xpose.msra.mxu0 0.0
    %715 = vmatprep.subr.mxu0 0.0
    %716 = vmatpush1.xpose.msra.mxu0 0.0
    %717 = vmatprep.mubr.f32.mxu0 0.0
    %718 = vmatmul.mubr.f32.gmra.mrb[0].mxu0 %v649
    %v719 = vpop.f32.mrb[0].mxu0
    %v720 = vadd.f32 %v50, %v719
    %v721 = vpop.f32.mrb[0].mxu0
    %722 = vdwg.mxu0
    %v723 = vsel %vm172, %v720, -inf
    %724 = vmax.xlane.f32.xlu0 %v723
    %v725 = vpop.xlane.xlu0 %724
    %v726 = vsub.f32 %v720, %v725
    %v727 = vmul.f32 %v726, 1.442695
    %v728 = vpow.pop %v727
    %v729 = vsel %vm172, %v728, 0.0
    %730 = vadd.xlane.f32.xlu0 %v729
    %v731 = vpop.xlane.xlu0 %730
    %v732 = vrcp.pop %v731
    %v733 = vmul.f32 %v728, %v732
    %734 = vrot.lane.b32.xlu0 %v161, 48
    %v735 = vpop.permute.xlu0 %734
    %v738 = vsel %vm172, %v733, 0
    %740 = vmatprep.subr.mxu0 0.0
    %741 = vmatpush1.msra.mxu0 %v735
    %742 = vmatprep.subr.mxu0 0.0
    %743 = vmatpush1.msra.mxu0 0.0
    %744 = vmatprep.subr.mxu0 0.0
    %745 = vmatpush1.msra.mxu0 0.0
    %746 = vmatprep.subr.mxu0 0.0
    %747 = vmatpush1.msra.mxu0 0.0
    %748 = vmatprep.subr.mxu0 0.0
    %749 = vmatpush1.msra.mxu0 0.0
    %750 = vmatprep.subr.mxu0 0.0
    %751 = vmatpush1.msra.mxu0 0.0
    %752 = vmatprep.subr.mxu0 0.0
    %753 = vmatpush1.msra.mxu0 0.0
    %754 = vmatprep.subr.mxu0 0.0
    %755 = vmatpush1.msra.mxu0 0.0
    %756 = vmatprep.subr.mxu0 0.0
    %757 = vmatpush1.msra.mxu0 0.0
    %758 = vmatprep.subr.mxu0 0.0
    %759 = vmatpush1.msra.mxu0 0.0
    %760 = vmatprep.subr.mxu0 0.0
    %761 = vmatpush1.msra.mxu0 0.0
    %762 = vmatprep.subr.mxu0 0.0
    %763 = vmatpush1.msra.mxu0 0.0
    %764 = vmatprep.subr.mxu0 0.0
    %765 = vmatpush1.msra.mxu0 0.0
    %766 = vmatprep.subr.mxu0 0.0
    %767 = vmatpush1.msra.mxu0 0.0
    %768 = vmatprep.subr.mxu0 0.0
    %769 = vmatpush1.msra.mxu0 0.0
    %770 = vmatprep.subr.mxu0 0.0
    %771 = vmatpush1.msra.mxu0 0.0
    %772 = vmatprep.subr.mxu0 0.0
    %773 = vmatpush1.msra.mxu0 0.0
    %774 = vmatprep.subr.mxu0 0.0
    %775 = vmatpush1.msra.mxu0 0.0
    %776 = vmatprep.subr.mxu0 0.0
    %777 = vmatpush1.msra.mxu0 0.0
    %778 = vmatprep.subr.mxu0 0.0
    %779 = vmatpush1.msra.mxu0 0.0
    %780 = vmatprep.subr.mxu0 0.0
    %781 = vmatpush1.msra.mxu0 0.0
    %782 = vmatprep.subr.mxu0 0.0
    %783 = vmatpush1.msra.mxu0 0.0
    %784 = vmatprep.subr.mxu0 0.0
    %785 = vmatpush1.msra.mxu0 0.0
    %786 = vmatprep.subr.mxu0 0.0
    %787 = vmatpush1.msra.mxu0 0.0
    %788 = vmatprep.subr.mxu0 0.0
    %789 = vmatpush1.msra.mxu0 0.0
    %790 = vmatprep.subr.mxu0 0.0
    %791 = vmatpush1.msra.mxu0 0.0
    %792 = vmatprep.subr.mxu0 0.0
    %793 = vmatpush1.msra.mxu0 0.0
    %794 = vmatprep.subr.mxu0 0.0
    %795 = vmatpush1.msra.mxu0 0.0
    %796 = vmatprep.subr.mxu0 0.0
    %797 = vmatpush1.msra.mxu0 0.0
    %798 = vmatprep.subr.mxu0 0.0
    %799 = vmatpush1.msra.mxu0 0.0
    %800 = vmatprep.subr.mxu0 0.0
    %801 = vmatpush1.msra.mxu0 0.0
    %802 = vmatprep.subr.mxu0 0.0
    %803 = vmatpush1.msra.mxu0 0.0
    %804 = vmatprep.mubr.f32.mxu0 0.0
    %805 = vmatmul.mubr.f32.gmra.mrb[0].mxu0 %v738
    %v806 = vpop.f32.mrb[0].mxu0
    %v807 = vadd.f32 0.0, %v806
    %v808 = vpop.f32.mrb[0].mxu0
    %809 = vdwg.mxu0
    %v811 = vsel %vm172, %v807, 0
    %813 = vmatprep.subr.mxu0 0.0
    %814 = vmatpush1.msra.mxu0 %v68
    %815 = vmatprep.subr.mxu0 0.0
    %816 = vmatpush1.msra.mxu0 0.0
    %817 = vmatprep.subr.mxu0 0.0
    %818 = vmatpush1.msra.mxu0 0.0
    %819 = vmatprep.subr.mxu0 0.0
    %820 = vmatpush1.msra.mxu0 0.0
    %821 = vmatprep.subr.mxu0 0.0
    %822 = vmatpush1.msra.mxu0 0.0
    %823 = vmatprep.subr.mxu0 0.0
    %824 = vmatpush1.msra.mxu0 0.0
    %825 = vmatprep.subr.mxu0 0.0
    %826 = vmatpush1.msra.mxu0 0.0
    %827 = vmatprep.subr.mxu0 0.0
    %828 = vmatpush1.msra.mxu0 0.0
    %829 = vmatprep.subr.mxu0 0.0
    %830 = vmatpush1.msra.mxu0 0.0
    %831 = vmatprep.subr.mxu0 0.0
    %832 = vmatpush1.msra.mxu0 0.0
    %833 = vmatprep.subr.mxu0 0.0
    %834 = vmatpush1.msra.mxu0 0.0
    %835 = vmatprep.subr.mxu0 0.0
    %836 = vmatpush1.msra.mxu0 0.0
    %837 = vmatprep.subr.mxu0 0.0
    %838 = vmatpush1.msra.mxu0 0.0
    %839 = vmatprep.subr.mxu0 0.0
    %840 = vmatpush1.msra.mxu0 0.0
    %841 = vmatprep.subr.mxu0 0.0
    %842 = vmatpush1.msra.mxu0 0.0
    %843 = vmatprep.subr.mxu0 0.0
    %844 = vmatpush1.msra.mxu0 0.0
    %845 = vmatprep.subr.mxu0 0.0
    %846 = vmatpush1.msra.mxu0 0.0
    %847 = vmatprep.subr.mxu0 0.0
    %848 = vmatpush1.msra.mxu0 0.0
    %849 = vmatprep.subr.mxu0 0.0
    %850 = vmatpush1.msra.mxu0 0.0
    %851 = vmatprep.subr.mxu0 0.0
    %852 = vmatpush1.msra.mxu0 0.0
    %853 = vmatprep.subr.mxu0 0.0
    %854 = vmatpush1.msra.mxu0 0.0
    %855 = vmatprep.subr.mxu0 0.0
    %856 = vmatpush1.msra.mxu0 0.0
    %857 = vmatprep.subr.mxu0 0.0
    %858 = vmatpush1.msra.mxu0 0.0
    %859 = vmatprep.subr.mxu0 0.0
    %860 = vmatpush1.msra.mxu0 0.0
    %861 = vmatprep.subr.mxu0 0.0
    %862 = vmatpush1.msra.mxu0 0.0
    %863 = vmatprep.subr.mxu0 0.0
    %864 = vmatpush1.msra.mxu0 0.0
    %865 = vmatprep.subr.mxu0 0.0
    %866 = vmatpush1.msra.mxu0 0.0
    %867 = vmatprep.subr.mxu0 0.0
    %868 = vmatpush1.msra.mxu0 0.0
    %869 = vmatprep.subr.mxu0 0.0
    %870 = vmatpush1.msra.mxu0 0.0
    %871 = vmatprep.subr.mxu0 0.0
    %872 = vmatpush1.msra.mxu0 0.0
    %873 = vmatprep.subr.mxu0 0.0
    %874 = vmatpush1.msra.mxu0 0.0
    %875 = vmatprep.subr.mxu0 0.0
    %876 = vmatpush1.msra.mxu0 0.0
    %877 = vmatprep.mubr.f32.mxu0 0.0
    %878 = vmatmul.mubr.f32.gmra.mrb[0].mxu0 %v811
    %v879 = vpop.f32.mrb[0].mxu0
    %v880 = vadd.f32 0.0, %v879
    %v881 = vpop.f32.mrb[0].mxu0
    %882 = vdwg.mxu0
    %v883 = vadd.f32 %v642, %v880
    %884 = vrot.lane.b32.xlu0 %v161, 104
    %v885 = vpop.permute.xlu0 %884
    %886 = vrot.lane.b32.xlu0 %v161, 72
    %v887 = vpop.permute.xlu0 %886
    %v888 = vsel %vm172, %v885, 0
    %v890 = vsel %vm172, %v887, 0
    %892 = vmatprep.subr.mxu0 0.0
    %893 = vmatpush1.xpose.msra.mxu0 %v890
    %894 = vmatprep.subr.mxu0 0.0
    %895 = vmatpush1.xpose.msra.mxu0 0.0
    %896 = vmatprep.subr.mxu0 0.0
    %897 = vmatpush1.xpose.msra.mxu0 0.0
    %898 = vmatprep.subr.mxu0 0.0
    %899 = vmatpush1.xpose.msra.mxu0 0.0
    %900 = vmatprep.subr.mxu0 0.0
    %901 = vmatpush1.xpose.msra.mxu0 0.0
    %902 = vmatprep.subr.mxu0 0.0
    %903 = vmatpush1.xpose.msra.mxu0 0.0
    %904 = vmatprep.subr.mxu0 0.0
    %905 = vmatpush1.xpose.msra.mxu0 0.0
    %906 = vmatprep.subr.mxu0 0.0
    %907 = vmatpush1.xpose.msra.mxu0 0.0
    %908 = vmatprep.subr.mxu0 0.0
    %909 = vmatpush1.xpose.msra.mxu0 0.0
    %910 = vmatprep.subr.mxu0 0.0
    %911 = vmatpush1.xpose.msra.mxu0 0.0
    %912 = vmatprep.subr.mxu0 0.0
    %913 = vmatpush1.xpose.msra.mxu0 0.0
    %914 = vmatprep.subr.mxu0 0.0
    %915 = vmatpush1.xpose.msra.mxu0 0.0
    %916 = vmatprep.subr.mxu0 0.0
    %917 = vmatpush1.xpose.msra.mxu0 0.0
    %918 = vmatprep.subr.mxu0 0.0
    %919 = vmatpush1.xpose.msra.mxu0 0.0
    %920 = vmatprep.subr.mxu0 0.0
    %921 = vmatpush1.xpose.msra.mxu0 0.0
    %922 = vmatprep.subr.mxu0 0.0
    %923 = vmatpush1.xpose.msra.mxu0 0.0
    %924 = vmatprep.subr.mxu0 0.0
    %925 = vmatpush1.xpose.msra.mxu0 0.0
    %926 = vmatprep.subr.mxu0 0.0
    %927 = vmatpush1.xpose.msra.mxu0 0.0
    %928 = vmatprep.subr.mxu0 0.0
    %929 = vmatpush1.xpose.msra.mxu0 0.0
    %930 = vmatprep.subr.mxu0 0.0
    %931 = vmatpush1.xpose.msra.mxu0 0.0
    %932 = vmatprep.subr.mxu0 0.0
    %933 = vmatpush1.xpose.msra.mxu0 0.0
    %934 = vmatprep.subr.mxu0 0.0
    %935 = vmatpush1.xpose.msra.mxu0 0.0
    %936 = vmatprep.subr.mxu0 0.0
    %937 = vmatpush1.xpose.msra.mxu0 0.0
    %938 = vmatprep.subr.mxu0 0.0
    %939 = vmatpush1.xpose.msra.mxu0 0.0
    %940 = vmatprep.subr.mxu0 0.0
    %941 = vmatpush1.xpose.msra.mxu0 0.0
    %942 = vmatprep.subr.mxu0 0.0
    %943 = vmatpush1.xpose.msra.mxu0 0.0
    %944 = vmatprep.subr.mxu0 0.0
    %945 = vmatpush1.xpose.msra.mxu0 0.0
    %946 = vmatprep.subr.mxu0 0.0
    %947 = vmatpush1.xpose.msra.mxu0 0.0
    %948 = vmatprep.subr.mxu0 0.0
    %949 = vmatpush1.xpose.msra.mxu0 0.0
    %950 = vmatprep.subr.mxu0 0.0
    %951 = vmatpush1.xpose.msra.mxu0 0.0
    %952 = vmatprep.subr.mxu0 0.0
    %953 = vmatpush1.xpose.msra.mxu0 0.0
    %954 = vmatprep.subr.mxu0 0.0
    %955 = vmatpush1.xpose.msra.mxu0 0.0
    %956 = vmatprep.mubr.f32.mxu0 0.0
    %957 = vmatmul.mubr.f32.gmra.mrb[0].mxu0 %v888
    %v958 = vpop.f32.mrb[0].mxu0
    %v959 = vadd.f32 %v50, %v958
    %v960 = vpop.f32.mrb[0].mxu0
    %961 = vdwg.mxu0
    %v962 = vsel %vm172, %v959, -inf
    %963 = vmax.xlane.f32.xlu0 %v962
    %v964 = vpop.xlane.xlu0 %963
    %v965 = vsub.f32 %v959, %v964
    %v966 = vmul.f32 %v965, 1.442695
    %v967 = vpow.pop %v966
    %v968 = vsel %vm172, %v967, 0.0
    %969 = vadd.xlane.f32.xlu0 %v968
    %v970 = vpop.xlane.xlu0 %969
    %v971 = vrcp.pop %v970
    %v972 = vmul.f32 %v967, %v971
    %973 = vrot.lane.b32.xlu0 %v161, 40
    %v974 = vpop.permute.xlu0 %973
    %v977 = vsel %vm172, %v972, 0
    %979 = vmatprep.subr.mxu0 0.0
    %980 = vmatpush1.msra.mxu0 %v974
    %981 = vmatprep.subr.mxu0 0.0
    %982 = vmatpush1.msra.mxu0 0.0
    %983 = vmatprep.subr.mxu0 0.0
    %984 = vmatpush1.msra.mxu0 0.0
    %985 = vmatprep.subr.mxu0 0.0
    %986 = vmatpush1.msra.mxu0 0.0
    %987 = vmatprep.subr.mxu0 0.0
    %988 = vmatpush1.msra.mxu0 0.0
    %989 = vmatprep.subr.mxu0 0.0
    %990 = vmatpush1.msra.mxu0 0.0
    %991 = vmatprep.subr.mxu0 0.0
    %992 = vmatpush1.msra.mxu0 0.0
    %993 = vmatprep.subr.mxu0 0.0
    %994 = vmatpush1.msra.mxu0 0.0
    %995 = vmatprep.subr.mxu0 0.0
    %996 = vmatpush1.msra.mxu0 0.0
    %997 = vmatprep.subr.mxu0 0.0
    %998 = vmatpush1.msra.mxu0 0.0
    %999 = vmatprep.subr.mxu0 0.0
    %1000 = vmatpush1.msra.mxu0 0.0
    %1001 = vmatprep.subr.mxu0 0.0
    %1002 = vmatpush1.msra.mxu0 0.0
    %1003 = vmatprep.subr.mxu0 0.0
    %1004 = vmatpush1.msra.mxu0 0.0
    %1005 = vmatprep.subr.mxu0 0.0
    %1006 = vmatpush1.msra.mxu0 0.0
    %1007 = vmatprep.subr.mxu0 0.0
    %1008 = vmatpush1.msra.mxu0 0.0
    %1009 = vmatprep.subr.mxu0 0.0
    %1010 = vmatpush1.msra.mxu0 0.0
    %1011 = vmatprep.subr.mxu0 0.0
    %1012 = vmatpush1.msra.mxu0 0.0
    %1013 = vmatprep.subr.mxu0 0.0
    %1014 = vmatpush1.msra.mxu0 0.0
    %1015 = vmatprep.subr.mxu0 0.0
    %1016 = vmatpush1.msra.mxu0 0.0
    %1017 = vmatprep.subr.mxu0 0.0
    %1018 = vmatpush1.msra.mxu0 0.0
    %1019 = vmatprep.subr.mxu0 0.0
    %1020 = vmatpush1.msra.mxu0 0.0
    %1021 = vmatprep.subr.mxu0 0.0
    %1022 = vmatpush1.msra.mxu0 0.0
    %1023 = vmatprep.subr.mxu0 0.0
    %1024 = vmatpush1.msra.mxu0 0.0
    %1025 = vmatprep.subr.mxu0 0.0
    %1026 = vmatpush1.msra.mxu0 0.0
    %1027 = vmatprep.subr.mxu0 0.0
    %1028 = vmatpush1.msra.mxu0 0.0
    %1029 = vmatprep.subr.mxu0 0.0
    %1030 = vmatpush1.msra.mxu0 0.0
    %1031 = vmatprep.subr.mxu0 0.0
    %1032 = vmatpush1.msra.mxu0 0.0
    %1033 = vmatprep.subr.mxu0 0.0
    %1034 = vmatpush1.msra.mxu0 0.0
    %1035 = vmatprep.subr.mxu0 0.0
    %1036 = vmatpush1.msra.mxu0 0.0
    %1037 = vmatprep.subr.mxu0 0.0
    %1038 = vmatpush1.msra.mxu0 0.0
    %1039 = vmatprep.subr.mxu0 0.0
    %1040 = vmatpush1.msra.mxu0 0.0
    %1041 = vmatprep.subr.mxu0 0.0
    %1042 = vmatpush1.msra.mxu0 0.0
    %1043 = vmatprep.mubr.f32.mxu0 0.0
    %1044 = vmatmul.mubr.f32.gmra.mrb[0].mxu0 %v977
    %v1045 = vpop.f32.mrb[0].mxu0
    %v1046 = vadd.f32 0.0, %v1045
    %v1047 = vpop.f32.mrb[0].mxu0
    %1048 = vdwg.mxu0
    %v1050 = vsel %vm172, %v1046, 0
    %1052 = vmatprep.subr.mxu0 0.0
    %1053 = vmatpush1.msra.mxu0 %v69
    %1054 = vmatprep.subr.mxu0 0.0
    %1055 = vmatpush1.msra.mxu0 0.0
    %1056 = vmatprep.subr.mxu0 0.0
    %1057 = vmatpush1.msra.mxu0 0.0
    %1058 = vmatprep.subr.mxu0 0.0
    %1059 = vmatpush1.msra.mxu0 0.0
    %1060 = vmatprep.subr.mxu0 0.0
    %1061 = vmatpush1.msra.mxu0 0.0
    %1062 = vmatprep.subr.mxu0 0.0
    %1063 = vmatpush1.msra.mxu0 0.0
    %1064 = vmatprep.subr.mxu0 0.0
    %1065 = vmatpush1.msra.mxu0 0.0
    %1066 = vmatprep.subr.mxu0 0.0
    %1067 = vmatpush1.msra.mxu0 0.0
    %1068 = vmatprep.subr.mxu0 0.0
    %1069 = vmatpush1.msra.mxu0 0.0
    %1070 = vmatprep.subr.mxu0 0.0
    %1071 = vmatpush1.msra.mxu0 0.0
    %1072 = vmatprep.subr.mxu0 0.0
    %1073 = vmatpush1.msra.mxu0 0.0
    %1074 = vmatprep.subr.mxu0 0.0
    %1075 = vmatpush1.msra.mxu0 0.0
    %1076 = vmatprep.subr.mxu0 0.0
    %1077 = vmatpush1.msra.mxu0 0.0
    %1078 = vmatprep.subr.mxu0 0.0
    %1079 = vmatpush1.msra.mxu0 0.0
    %1080 = vmatprep.subr.mxu0 0.0
    %1081 = vmatpush1.msra.mxu0 0.0
    %1082 = vmatprep.subr.mxu0 0.0
    %1083 = vmatpush1.msra.mxu0 0.0
    %1084 = vmatprep.subr.mxu0 0.0
    %1085 = vmatpush1.msra.mxu0 0.0
    %1086 = vmatprep.subr.mxu0 0.0
    %1087 = vmatpush1.msra.mxu0 0.0
    %1088 = vmatprep.subr.mxu0 0.0
    %1089 = vmatpush1.msra.mxu0 0.0
    %1090 = vmatprep.subr.mxu0 0.0
    %1091 = vmatpush1.msra.mxu0 0.0
    %1092 = vmatprep.subr.mxu0 0.0
    %1093 = vmatpush1.msra.mxu0 0.0
    %1094 = vmatprep.subr.mxu0 0.0
    %1095 = vmatpush1.msra.mxu0 0.0
    %1096 = vmatprep.subr.mxu0 0.0
    %1097 = vmatpush1.msra.mxu0 0.0
    %1098 = vmatprep.subr.mxu0 0.0
    %1099 = vmatpush1.msra.mxu0 0.0
    %1100 = vmatprep.subr.mxu0 0.0
    %1101 = vmatpush1.msra.mxu0 0.0
    %1102 = vmatprep.subr.mxu0 0.0
    %1103 = vmatpush1.msra.mxu0 0.0
    %1104 = vmatprep.subr.mxu0 0.0
    %1105 = vmatpush1.msra.mxu0 0.0
    %1106 = vmatprep.subr.mxu0 0.0
    %1107 = vmatpush1.msra.mxu0 0.0
    %1108 = vmatprep.subr.mxu0 0.0
    %1109 = vmatpush1.msra.mxu0 0.0
    %1110 = vmatprep.subr.mxu0 0.0
    %1111 = vmatpush1.msra.mxu0 0.0
    %1112 = vmatprep.subr.mxu0 0.0
    %1113 = vmatpush1.msra.mxu0 0.0
    %1114 = vmatprep.subr.mxu0 0.0
    %1115 = vmatpush1.msra.mxu0 0.0
    %1116 = vmatprep.mubr.f32.mxu0 0.0
    %1117 = vmatmul.mubr.f32.gmra.mrb[0].mxu0 %v1050
    %v1118 = vpop.f32.mrb[0].mxu0
    %v1119 = vadd.f32 0.0, %v1118
    %v1120 = vpop.f32.mrb[0].mxu0
    %1121 = vdwg.mxu0
    %v1122 = vadd.f32 %v883, %v1119
    %1124 = vrot.lane.b32.xlu0 %v166, 96
    %v1125 = vpop.permute.xlu0 %1124
    %v1126 = vsel %vm172, %v166, 0
    %v1128 = vsel %vm172, %v1125, 0
    %1130 = vmatprep.subr.mxu0 0.0
    %1131 = vmatpush1.xpose.msra.mxu0 %v1128
    %1132 = vmatprep.subr.mxu0 0.0
    %1133 = vmatpush1.xpose.msra.mxu0 0.0
    %1134 = vmatprep.subr.mxu0 0.0
    %1135 = vmatpush1.xpose.msra.mxu0 0.0
    %1136 = vmatprep.subr.mxu0 0.0
    %1137 = vmatpush1.xpose.msra.mxu0 0.0
    %1138 = vmatprep.subr.mxu0 0.0
    %1139 = vmatpush1.xpose.msra.mxu0 0.0
    %1140 = vmatprep.subr.mxu0 0.0
    %1141 = vmatpush1.xpose.msra.mxu0 0.0
    %1142 = vmatprep.subr.mxu0 0.0
    %1143 = vmatpush1.xpose.msra.mxu0 0.0
    %1144 = vmatprep.subr.mxu0 0.0
    %1145 = vmatpush1.xpose.msra.mxu0 0.0
    %1146 = vmatprep.subr.mxu0 0.0
    %1147 = vmatpush1.xpose.msra.mxu0 0.0
    %1148 = vmatprep.subr.mxu0 0.0
    %1149 = vmatpush1.xpose.msra.mxu0 0.0
    %1150 = vmatprep.subr.mxu0 0.0
    %1151 = vmatpush1.xpose.msra.mxu0 0.0
    %1152 = vmatprep.subr.mxu0 0.0
    %1153 = vmatpush1.xpose.msra.mxu0 0.0
    %1154 = vmatprep.subr.mxu0 0.0
    %1155 = vmatpush1.xpose.msra.mxu0 0.0
    %1156 = vmatprep.subr.mxu0 0.0
    %1157 = vmatpush1.xpose.msra.mxu0 0.0
    %1158 = vmatprep.subr.mxu0 0.0
    %1159 = vmatpush1.xpose.msra.mxu0 0.0
    %1160 = vmatprep.subr.mxu0 0.0
    %1161 = vmatpush1.xpose.msra.mxu0 0.0
    %1162 = vmatprep.subr.mxu0 0.0
    %1163 = vmatpush1.xpose.msra.mxu0 0.0
    %1164 = vmatprep.subr.mxu0 0.0
    %1165 = vmatpush1.xpose.msra.mxu0 0.0
    %1166 = vmatprep.subr.mxu0 0.0
    %1167 = vmatpush1.xpose.msra.mxu0 0.0
    %1168 = vmatprep.subr.mxu0 0.0
    %1169 = vmatpush1.xpose.msra.mxu0 0.0
    %1170 = vmatprep.subr.mxu0 0.0
    %1171 = vmatpush1.xpose.msra.mxu0 0.0
    %1172 = vmatprep.subr.mxu0 0.0
    %1173 = vmatpush1.xpose.msra.mxu0 0.0
    %1174 = vmatprep.subr.mxu0 0.0
    %1175 = vmatpush1.xpose.msra.mxu0 0.0
    %1176 = vmatprep.subr.mxu0 0.0
    %1177 = vmatpush1.xpose.msra.mxu0 0.0
    %1178 = vmatprep.subr.mxu0 0.0
    %1179 = vmatpush1.xpose.msra.mxu0 0.0
    %1180 = vmatprep.subr.mxu0 0.0
    %1181 = vmatpush1.xpose.msra.mxu0 0.0
    %1182 = vmatprep.subr.mxu0 0.0
    %1183 = vmatpush1.xpose.msra.mxu0 0.0
    %1184 = vmatprep.subr.mxu0 0.0
    %1185 = vmatpush1.xpose.msra.mxu0 0.0
    %1186 = vmatprep.subr.mxu0 0.0
    %1187 = vmatpush1.xpose.msra.mxu0 0.0
    %1188 = vmatprep.subr.mxu0 0.0
    %1189 = vmatpush1.xpose.msra.mxu0 0.0
    %1190 = vmatprep.subr.mxu0 0.0
    %1191 = vmatpush1.xpose.msra.mxu0 0.0
    %1192 = vmatprep.subr.mxu0 0.0
    %1193 = vmatpush1.xpose.msra.mxu0 0.0
    %1194 = vmatprep.mubr.f32.mxu0 0.0
    %1195 = vmatmul.mubr.f32.gmra.mrb[0].mxu0 %v1126
    %v1196 = vpop.f32.mrb[0].mxu0
    %v1197 = vadd.f32 %v60, %v1196
    %v1198 = vpop.f32.mrb[0].mxu0
    %1199 = vdwg.mxu0
    %v1200 = vsel %vm172, %v1197, -inf
    %1201 = vmax.xlane.f32.xlu0 %v1200
    %v1202 = vpop.xlane.xlu0 %1201
    %v1203 = vsub.f32 %v1197, %v1202
    %v1204 = vmul.f32 %v1203, 1.442695
    %v1205 = vpow.pop %v1204
    %v1206 = vsel %vm172, %v1205, 0.0
    %1207 = vadd.xlane.f32.xlu0 %v1206
    %v1208 = vpop.xlane.xlu0 %1207
    %v1209 = vrcp.pop %v1208
    %v1210 = vmul.f32 %v1205, %v1209
    %1211 = vrot.lane.b32.xlu0 %v166, 64
    %v1212 = vpop.permute.xlu0 %1211
    %v1215 = vsel %vm172, %v1210, 0
    %1217 = vmatprep.subr.mxu0 0.0
    %1218 = vmatpush1.msra.mxu0 %v1212
    %1219 = vmatprep.subr.mxu0 0.0
    %1220 = vmatpush1.msra.mxu0 0.0
    %1221 = vmatprep.subr.mxu0 0.0
    %1222 = vmatpush1.msra.mxu0 0.0
    %1223 = vmatprep.subr.mxu0 0.0
    %1224 = vmatpush1.msra.mxu0 0.0
    %1225 = vmatprep.subr.mxu0 0.0
    %1226 = vmatpush1.msra.mxu0 0.0
    %1227 = vmatprep.subr.mxu0 0.0
    %1228 = vmatpush1.msra.mxu0 0.0
    %1229 = vmatprep.subr.mxu0 0.0
    %1230 = vmatpush1.msra.mxu0 0.0
    %1231 = vmatprep.subr.mxu0 0.0
    %1232 = vmatpush1.msra.mxu0 0.0
    %1233 = vmatprep.subr.mxu0 0.0
    %1234 = vmatpush1.msra.mxu0 0.0
    %1235 = vmatprep.subr.mxu0 0.0
    %1236 = vmatpush1.msra.mxu0 0.0
    %1237 = vmatprep.subr.mxu0 0.0
    %1238 = vmatpush1.msra.mxu0 0.0
    %1239 = vmatprep.subr.mxu0 0.0
    %1240 = vmatpush1.msra.mxu0 0.0
    %1241 = vmatprep.subr.mxu0 0.0
    %1242 = vmatpush1.msra.mxu0 0.0
    %1243 = vmatprep.subr.mxu0 0.0
    %1244 = vmatpush1.msra.mxu0 0.0
    %1245 = vmatprep.subr.mxu0 0.0
    %1246 = vmatpush1.msra.mxu0 0.0
    %1247 = vmatprep.subr.mxu0 0.0
    %1248 = vmatpush1.msra.mxu0 0.0
    %1249 = vmatprep.subr.mxu0 0.0
    %1250 = vmatpush1.msra.mxu0 0.0
    %1251 = vmatprep.subr.mxu0 0.0
    %1252 = vmatpush1.msra.mxu0 0.0
    %1253 = vmatprep.subr.mxu0 0.0
    %1254 = vmatpush1.msra.mxu0 0.0
    %1255 = vmatprep.subr.mxu0 0.0
    %1256 = vmatpush1.msra.mxu0 0.0
    %1257 = vmatprep.subr.mxu0 0.0
    %1258 = vmatpush1.msra.mxu0 0.0
    %1259 = vmatprep.subr.mxu0 0.0
    %1260 = vmatpush1.msra.mxu0 0.0
    %1261 = vmatprep.subr.mxu0 0.0
    %1262 = vmatpush1.msra.mxu0 0.0
    %1263 = vmatprep.subr.mxu0 0.0
    %1264 = vmatpush1.msra.mxu0 0.0
    %1265 = vmatprep.subr.mxu0 0.0
    %1266 = vmatpush1.msra.mxu0 0.0
    %1267 = vmatprep.subr.mxu0 0.0
    %1268 = vmatpush1.msra.mxu0 0.0
    %1269 = vmatprep.subr.mxu0 0.0
    %1270 = vmatpush1.msra.mxu0 0.0
    %1271 = vmatprep.subr.mxu0 0.0
    %1272 = vmatpush1.msra.mxu0 0.0
    %1273 = vmatprep.subr.mxu0 0.0
    %1274 = vmatpush1.msra.mxu0 0.0
    %1275 = vmatprep.subr.mxu0 0.0
    %1276 = vmatpush1.msra.mxu0 0.0
    %1277 = vmatprep.subr.mxu0 0.0
    %1278 = vmatpush1.msra.mxu0 0.0
    %1279 = vmatprep.subr.mxu0 0.0
    %1280 = vmatpush1.msra.mxu0 0.0
    %1281 = vmatprep.mubr.f32.mxu0 0.0
    %1282 = vmatmul.mubr.f32.gmra.mrb[0].mxu0 %v1215
    %v1283 = vpop.f32.mrb[0].mxu0
    %v1284 = vadd.f32 0.0, %v1283
    %v1285 = vpop.f32.mrb[0].mxu0
    %1286 = vdwg.mxu0
    %1287 = vrot.lane.b32.xlu0 %v166, 120
    %v1288 = vpop.permute.xlu0 %1287
    %1289 = vrot.lane.b32.xlu0 %v166, 88
    %v1290 = vpop.permute.xlu0 %1289
    %v1291 = vsel %vm172, %v1288, 0
    %v1293 = vsel %vm172, %v1290, 0
    %1295 = vmatprep.subr.mxu0 0.0
    %1296 = vmatpush1.xpose.msra.mxu0 %v1293
    %1297 = vmatprep.subr.mxu0 0.0
    %1298 = vmatpush1.xpose.msra.mxu0 0.0
    %1299 = vmatprep.subr.mxu0 0.0
    %1300 = vmatpush1.xpose.msra.mxu0 0.0
    %1301 = vmatprep.subr.mxu0 0.0
    %1302 = vmatpush1.xpose.msra.mxu0 0.0
    %1303 = vmatprep.subr.mxu0 0.0
    %1304 = vmatpush1.xpose.msra.mxu0 0.0
    %1305 = vmatprep.subr.mxu0 0.0
    %1306 = vmatpush1.xpose.msra.mxu0 0.0
    %1307 = vmatprep.subr.mxu0 0.0
    %1308 = vmatpush1.xpose.msra.mxu0 0.0
    %1309 = vmatprep.subr.mxu0 0.0
    %1310 = vmatpush1.xpose.msra.mxu0 0.0
    %1311 = vmatprep.subr.mxu0 0.0
    %1312 = vmatpush1.xpose.msra.mxu0 0.0
    %1313 = vmatprep.subr.mxu0 0.0
    %1314 = vmatpush1.xpose.msra.mxu0 0.0
    %1315 = vmatprep.subr.mxu0 0.0
    %1316 = vmatpush1.xpose.msra.mxu0 0.0
    %1317 = vmatprep.subr.mxu0 0.0
    %1318 = vmatpush1.xpose.msra.mxu0 0.0
    %1319 = vmatprep.subr.mxu0 0.0
    %1320 = vmatpush1.xpose.msra.mxu0 0.0
    %1321 = vmatprep.subr.mxu0 0.0
    %1322 = vmatpush1.xpose.msra.mxu0 0.0
    %1323 = vmatprep.subr.mxu0 0.0
    %1324 = vmatpush1.xpose.msra.mxu0 0.0
    %1325 = vmatprep.subr.mxu0 0.0
    %1326 = vmatpush1.xpose.msra.mxu0 0.0
    %1327 = vmatprep.subr.mxu0 0.0
    %1328 = vmatpush1.xpose.msra.mxu0 0.0
    %1329 = vmatprep.subr.mxu0 0.0
    %1330 = vmatpush1.xpose.msra.mxu0 0.0
    %1331 = vmatprep.subr.mxu0 0.0
    %1332 = vmatpush1.xpose.msra.mxu0 0.0
    %1333 = vmatprep.subr.mxu0 0.0
    %1334 = vmatpush1.xpose.msra.mxu0 0.0
    %1335 = vmatprep.subr.mxu0 0.0
    %1336 = vmatpush1.xpose.msra.mxu0 0.0
    %1337 = vmatprep.subr.mxu0 0.0
    %1338 = vmatpush1.xpose.msra.mxu0 0.0
    %1339 = vmatprep.subr.mxu0 0.0
    %1340 = vmatpush1.xpose.msra.mxu0 0.0
    %1341 = vmatprep.subr.mxu0 0.0
    %1342 = vmatpush1.xpose.msra.mxu0 0.0
    %1343 = vmatprep.subr.mxu0 0.0
    %1344 = vmatpush1.xpose.msra.mxu0 0.0
    %1345 = vmatprep.subr.mxu0 0.0
    %1346 = vmatpush1.xpose.msra.mxu0 0.0
    %1347 = vmatprep.subr.mxu0 0.0
    %1348 = vmatpush1.xpose.msra.mxu0 0.0
    %1349 = vmatprep.subr.mxu0 0.0
    %1350 = vmatpush1.xpose.msra.mxu0 0.0
    %1351 = vmatprep.subr.mxu0 0.0
    %1352 = vmatpush1.xpose.msra.mxu0 0.0
    %1353 = vmatprep.subr.mxu0 0.0
    %1354 = vmatpush1.xpose.msra.mxu0 0.0
    %1355 = vmatprep.subr.mxu0 0.0
    %1356 = vmatpush1.xpose.msra.mxu0 0.0
    %1357 = vmatprep.subr.mxu0 0.0
    %1358 = vmatpush1.xpose.msra.mxu0 0.0
    %1359 = vmatprep.mubr.f32.mxu0 0.0
    %1360 = vmatmul.mubr.f32.gmra.mrb[0].mxu0 %v1291
    %v1361 = vpop.f32.mrb[0].mxu0
    %v1362 = vadd.f32 %v60, %v1361
    %v1363 = vpop.f32.mrb[0].mxu0
    %1364 = vdwg.mxu0
    %v1365 = vsel %vm172, %v1362, -inf
    %1366 = vmax.xlane.f32.xlu0 %v1365
    %v1367 = vpop.xlane.xlu0 %1366
    %v1368 = vsub.f32 %v1362, %v1367
    %v1369 = vmul.f32 %v1368, 1.442695
    %v1370 = vpow.pop %v1369
    %v1371 = vsel %vm172, %v1370, 0.0
    %1372 = vadd.xlane.f32.xlu0 %v1371
    %v1373 = vpop.xlane.xlu0 %1372
    %v1374 = vrcp.pop %v1373
    %v1375 = vmul.f32 %v1370, %v1374
    %1376 = vrot.lane.b32.xlu0 %v166, 56
    %v1377 = vpop.permute.xlu0 %1376
    %v1380 = vsel %vm172, %v1375, 0
    %1382 = vmatprep.subr.mxu0 0.0
    %1383 = vmatpush1.msra.mxu0 %v1377
    %1384 = vmatprep.subr.mxu0 0.0
    %1385 = vmatpush1.msra.mxu0 0.0
    %1386 = vmatprep.subr.mxu0 0.0
    %1387 = vmatpush1.msra.mxu0 0.0
    %1388 = vmatprep.subr.mxu0 0.0
    %1389 = vmatpush1.msra.mxu0 0.0
    %1390 = vmatprep.subr.mxu0 0.0
    %1391 = vmatpush1.msra.mxu0 0.0
    %1392 = vmatprep.subr.mxu0 0.0
    %1393 = vmatpush1.msra.mxu0 0.0
    %1394 = vmatprep.subr.mxu0 0.0
    %1395 = vmatpush1.msra.mxu0 0.0
    %1396 = vmatprep.subr.mxu0 0.0
    %1397 = vmatpush1.msra.mxu0 0.0
    %1398 = vmatprep.subr.mxu0 0.0
    %1399 = vmatpush1.msra.mxu0 0.0
    %1400 = vmatprep.subr.mxu0 0.0
    %1401 = vmatpush1.msra.mxu0 0.0
    %1402 = vmatprep.subr.mxu0 0.0
    %1403 = vmatpush1.msra.mxu0 0.0
    %1404 = vmatprep.subr.mxu0 0.0
    %1405 = vmatpush1.msra.mxu0 0.0
    %1406 = vmatprep.subr.mxu0 0.0
    %1407 = vmatpush1.msra.mxu0 0.0
    %1408 = vmatprep.subr.mxu0 0.0
    %1409 = vmatpush1.msra.mxu0 0.0
    %1410 = vmatprep.subr.mxu0 0.0
    %1411 = vmatpush1.msra.mxu0 0.0
    %1412 = vmatprep.subr.mxu0 0.0
    %1413 = vmatpush1.msra.mxu0 0.0
    %1414 = vmatprep.subr.mxu0 0.0
    %1415 = vmatpush1.msra.mxu0 0.0
    %1416 = vmatprep.subr.mxu0 0.0
    %1417 = vmatpush1.msra.mxu0 0.0
    %1418 = vmatprep.subr.mxu0 0.0
    %1419 = vmatpush1.msra.mxu0 0.0
    %1420 = vmatprep.subr.mxu0 0.0
    %1421 = vmatpush1.msra.mxu0 0.0
    %1422 = vmatprep.subr.mxu0 0.0
    %1423 = vmatpush1.msra.mxu0 0.0
    %1424 = vmatprep.subr.mxu0 0.0
    %1425 = vmatpush1.msra.mxu0 0.0
    %1426 = vmatprep.subr.mxu0 0.0
    %1427 = vmatpush1.msra.mxu0 0.0
    %1428 = vmatprep.subr.mxu0 0.0
    %1429 = vmatpush1.msra.mxu0 0.0
    %1430 = vmatprep.subr.mxu0 0.0
    %1431 = vmatpush1.msra.mxu0 0.0
    %1432 = vmatprep.subr.mxu0 0.0
    %1433 = vmatpush1.msra.mxu0 0.0
    %1434 = vmatprep.subr.mxu0 0.0
    %1435 = vmatpush1.msra.mxu0 0.0
    %1436 = vmatprep.subr.mxu0 0.0
    %1437 = vmatpush1.msra.mxu0 0.0
    %1438 = vmatprep.subr.mxu0 0.0
    %1439 = vmatpush1.msra.mxu0 0.0
    %1440 = vmatprep.subr.mxu0 0.0
    %1441 = vmatpush1.msra.mxu0 0.0
    %1442 = vmatprep.subr.mxu0 0.0
    %1443 = vmatpush1.msra.mxu0 0.0
    %1444 = vmatprep.subr.mxu0 0.0
    %1445 = vmatpush1.msra.mxu0 0.0
    %1446 = vmatprep.mubr.f32.mxu0 0.0
    %1447 = vmatmul.mubr.f32.gmra.mrb[0].mxu0 %v1380
    %v1448 = vpop.f32.mrb[0].mxu0
    %v1449 = vadd.f32 0.0, %v1448
    %v1450 = vpop.f32.mrb[0].mxu0
    %1451 = vdwg.mxu0
    %v1453 = vsel %vm172, %v1449, 0
    %1455 = vmatprep.subr.mxu0 0.0
    %1456 = vmatpush1.msra.mxu0 %v67
    %1457 = vmatprep.subr.mxu0 0.0
    %1458 = vmatpush1.msra.mxu0 0.0
    %1459 = vmatprep.subr.mxu0 0.0
    %1460 = vmatpush1.msra.mxu0 0.0
    %1461 = vmatprep.subr.mxu0 0.0
    %1462 = vmatpush1.msra.mxu0 0.0
    %1463 = vmatprep.subr.mxu0 0.0
    %1464 = vmatpush1.msra.mxu0 0.0
    %1465 = vmatprep.subr.mxu0 0.0
    %1466 = vmatpush1.msra.mxu0 0.0
    %1467 = vmatprep.subr.mxu0 0.0
    %1468 = vmatpush1.msra.mxu0 0.0
    %1469 = vmatprep.subr.mxu0 0.0
    %1470 = vmatpush1.msra.mxu0 0.0
    %1471 = vmatprep.subr.mxu0 0.0
    %1472 = vmatpush1.msra.mxu0 0.0
    %1473 = vmatprep.subr.mxu0 0.0
    %1474 = vmatpush1.msra.mxu0 0.0
    %1475 = vmatprep.subr.mxu0 0.0
    %1476 = vmatpush1.msra.mxu0 0.0
    %1477 = vmatprep.subr.mxu0 0.0
    %1478 = vmatpush1.msra.mxu0 0.0
    %1479 = vmatprep.subr.mxu0 0.0
    %1480 = vmatpush1.msra.mxu0 0.0
    %1481 = vmatprep.subr.mxu0 0.0
    %1482 = vmatpush1.msra.mxu0 0.0
    %1483 = vmatprep.subr.mxu0 0.0
    %1484 = vmatpush1.msra.mxu0 0.0
    %1485 = vmatprep.subr.mxu0 0.0
    %1486 = vmatpush1.msra.mxu0 0.0
    %1487 = vmatprep.subr.mxu0 0.0
    %1488 = vmatpush1.msra.mxu0 0.0
    %1489 = vmatprep.subr.mxu0 0.0
    %1490 = vmatpush1.msra.mxu0 0.0
    %1491 = vmatprep.subr.mxu0 0.0
    %1492 = vmatpush1.msra.mxu0 0.0
    %1493 = vmatprep.subr.mxu0 0.0
    %1494 = vmatpush1.msra.mxu0 0.0
    %1495 = vmatprep.subr.mxu0 0.0
    %1496 = vmatpush1.msra.mxu0 0.0
    %1497 = vmatprep.subr.mxu0 0.0
    %1498 = vmatpush1.msra.mxu0 0.0
    %1499 = vmatprep.subr.mxu0 0.0
    %1500 = vmatpush1.msra.mxu0 0.0
    %1501 = vmatprep.subr.mxu0 0.0
    %1502 = vmatpush1.msra.mxu0 0.0
    %1503 = vmatprep.subr.mxu0 0.0
    %1504 = vmatpush1.msra.mxu0 0.0
    %1505 = vmatprep.subr.mxu0 0.0
    %1506 = vmatpush1.msra.mxu0 0.0
    %1507 = vmatprep.subr.mxu0 0.0
    %1508 = vmatpush1.msra.mxu0 0.0
    %1509 = vmatprep.subr.mxu0 0.0
    %1510 = vmatpush1.msra.mxu0 0.0
    %1511 = vmatprep.subr.mxu0 0.0
    %1512 = vmatpush1.msra.mxu0 0.0
    %1513 = vmatprep.subr.mxu0 0.0
    %1514 = vmatpush1.msra.mxu0 0.0
    %1515 = vmatprep.subr.mxu0 0.0
    %1516 = vmatpush1.msra.mxu0 0.0
    %1517 = vmatprep.subr.mxu0 0.0
    %1518 = vmatpush1.msra.mxu0 0.0
    %1519 = vmatprep.mubr.f32.mxu0 0.0
    %1520 = vmatmul.mubr.f32.gmra.mrb[0].mxu0 %v1453
    %v1521 = vpop.f32.mrb[0].mxu0
    %v1522 = vadd.f32 0.0, %v1521
    %v1523 = vpop.f32.mrb[0].mxu0
    %1524 = vdwg.mxu0
    %v1526 = vsel %vm172, %v1284, 0
    %1528 = vmatprep.subr.mxu0 0.0
    %1529 = vmatpush1.msra.mxu0 %v66
    %1530 = vmatprep.subr.mxu0 0.0
    %1531 = vmatpush1.msra.mxu0 0.0
    %1532 = vmatprep.subr.mxu0 0.0
    %1533 = vmatpush1.msra.mxu0 0.0
    %1534 = vmatprep.subr.mxu0 0.0
    %1535 = vmatpush1.msra.mxu0 0.0
    %1536 = vmatprep.subr.mxu0 0.0
    %1537 = vmatpush1.msra.mxu0 0.0
    %1538 = vmatprep.subr.mxu0 0.0
    %1539 = vmatpush1.msra.mxu0 0.0
    %1540 = vmatprep.subr.mxu0 0.0
    %1541 = vmatpush1.msra.mxu0 0.0
    %1542 = vmatprep.subr.mxu0 0.0
    %1543 = vmatpush1.msra.mxu0 0.0
    %1544 = vmatprep.subr.mxu0 0.0
    %1545 = vmatpush1.msra.mxu0 0.0
    %1546 = vmatprep.subr.mxu0 0.0
    %1547 = vmatpush1.msra.mxu0 0.0
    %1548 = vmatprep.subr.mxu0 0.0
    %1549 = vmatpush1.msra.mxu0 0.0
    %1550 = vmatprep.subr.mxu0 0.0
    %1551 = vmatpush1.msra.mxu0 0.0
    %1552 = vmatprep.subr.mxu0 0.0
    %1553 = vmatpush1.msra.mxu0 0.0
    %1554 = vmatprep.subr.mxu0 0.0
    %1555 = vmatpush1.msra.mxu0 0.0
    %1556 = vmatprep.subr.mxu0 0.0
    %1557 = vmatpush1.msra.mxu0 0.0
    %1558 = vmatprep.subr.mxu0 0.0
    %1559 = vmatpush1.msra.mxu0 0.0
    %1560 = vmatprep.subr.mxu0 0.0
    %1561 = vmatpush1.msra.mxu0 0.0
    %1562 = vmatprep.subr.mxu0 0.0
    %1563 = vmatpush1.msra.mxu0 0.0
    %1564 = vmatprep.subr.mxu0 0.0
    %1565 = vmatpush1.msra.mxu0 0.0
    %1566 = vmatprep.subr.mxu0 0.0
    %1567 = vmatpush1.msra.mxu0 0.0
    %1568 = vmatprep.subr.mxu0 0.0
    %1569 = vmatpush1.msra.mxu0 0.0
    %1570 = vmatprep.subr.mxu0 0.0
    %1571 = vmatpush1.msra.mxu0 0.0
    %1572 = vmatprep.subr.mxu0 0.0
    %1573 = vmatpush1.msra.mxu0 0.0
    %1574 = vmatprep.subr.mxu0 0.0
    %1575 = vmatpush1.msra.mxu0 0.0
    %1576 = vmatprep.subr.mxu0 0.0
    %1577 = vmatpush1.msra.mxu0 0.0
    %1578 = vmatprep.subr.mxu0 0.0
    %1579 = vmatpush1.msra.mxu0 0.0
    %1580 = vmatprep.subr.mxu0 0.0
    %1581 = vmatpush1.msra.mxu0 0.0
    %1582 = vmatprep.subr.mxu0 0.0
    %1583 = vmatpush1.msra.mxu0 0.0
    %1584 = vmatprep.subr.mxu0 0.0
    %1585 = vmatpush1.msra.mxu0 0.0
    %1586 = vmatprep.subr.mxu0 0.0
    %1587 = vmatpush1.msra.mxu0 0.0
    %1588 = vmatprep.subr.mxu0 0.0
    %1589 = vmatpush1.msra.mxu0 0.0
    %1590 = vmatprep.subr.mxu0 0.0
    %1591 = vmatpush1.msra.mxu0 0.0
    %1592 = vmatprep.mubr.f32.mxu0 0.0
    %1593 = vmatmul.mubr.f32.gmra.mrb[0].mxu0 %v1526
    %v1594 = vpop.f32.mrb[0].mxu0
    %v1595 = vadd.f32 %v1522, %v1594
    %v1596 = vpop.f32.mrb[0].mxu0
    %1597 = vdwg.mxu0
    %1598 = vrot.lane.b32.xlu0 %v166, 112
    %v1599 = vpop.permute.xlu0 %1598
    %1600 = vrot.lane.b32.xlu0 %v166, 80
    %v1601 = vpop.permute.xlu0 %1600
    %v1602 = vsel %vm172, %v1599, 0
    %v1604 = vsel %vm172, %v1601, 0
    %1606 = vmatprep.subr.mxu0 0.0
    %1607 = vmatpush1.xpose.msra.mxu0 %v1604
    %1608 = vmatprep.subr.mxu0 0.0
    %1609 = vmatpush1.xpose.msra.mxu0 0.0
    %1610 = vmatprep.subr.mxu0 0.0
    %1611 = vmatpush1.xpose.msra.mxu0 0.0
    %1612 = vmatprep.subr.mxu0 0.0
    %1613 = vmatpush1.xpose.msra.mxu0 0.0
    %1614 = vmatprep.subr.mxu0 0.0
    %1615 = vmatpush1.xpose.msra.mxu0 0.0
    %1616 = vmatprep.subr.mxu0 0.0
    %1617 = vmatpush1.xpose.msra.mxu0 0.0
    %1618 = vmatprep.subr.mxu0 0.0
    %1619 = vmatpush1.xpose.msra.mxu0 0.0
    %1620 = vmatprep.subr.mxu0 0.0
    %1621 = vmatpush1.xpose.msra.mxu0 0.0
    %1622 = vmatprep.subr.mxu0 0.0
    %1623 = vmatpush1.xpose.msra.mxu0 0.0
    %1624 = vmatprep.subr.mxu0 0.0
    %1625 = vmatpush1.xpose.msra.mxu0 0.0
    %1626 = vmatprep.subr.mxu0 0.0
    %1627 = vmatpush1.xpose.msra.mxu0 0.0
    %1628 = vmatprep.subr.mxu0 0.0
    %1629 = vmatpush1.xpose.msra.mxu0 0.0
    %1630 = vmatprep.subr.mxu0 0.0
    %1631 = vmatpush1.xpose.msra.mxu0 0.0
    %1632 = vmatprep.subr.mxu0 0.0
    %1633 = vmatpush1.xpose.msra.mxu0 0.0
    %1634 = vmatprep.subr.mxu0 0.0
    %1635 = vmatpush1.xpose.msra.mxu0 0.0
    %1636 = vmatprep.subr.mxu0 0.0
    %1637 = vmatpush1.xpose.msra.mxu0 0.0
    %1638 = vmatprep.subr.mxu0 0.0
    %1639 = vmatpush1.xpose.msra.mxu0 0.0
    %1640 = vmatprep.subr.mxu0 0.0
    %1641 = vmatpush1.xpose.msra.mxu0 0.0
    %1642 = vmatprep.subr.mxu0 0.0
    %1643 = vmatpush1.xpose.msra.mxu0 0.0
    %1644 = vmatprep.subr.mxu0 0.0
    %1645 = vmatpush1.xpose.msra.mxu0 0.0
    %1646 = vmatprep.subr.mxu0 0.0
    %1647 = vmatpush1.xpose.msra.mxu0 0.0
    %1648 = vmatprep.subr.mxu0 0.0
    %1649 = vmatpush1.xpose.msra.mxu0 0.0
    %1650 = vmatprep.subr.mxu0 0.0
    %1651 = vmatpush1.xpose.msra.mxu0 0.0
    %1652 = vmatprep.subr.mxu0 0.0
    %1653 = vmatpush1.xpose.msra.mxu0 0.0
    %1654 = vmatprep.subr.mxu0 0.0
    %1655 = vmatpush1.xpose.msra.mxu0 0.0
    %1656 = vmatprep.subr.mxu0 0.0
    %1657 = vmatpush1.xpose.msra.mxu0 0.0
    %1658 = vmatprep.subr.mxu0 0.0
    %1659 = vmatpush1.xpose.msra.mxu0 0.0
    %1660 = vmatprep.subr.mxu0 0.0
    %1661 = vmatpush1.xpose.msra.mxu0 0.0
    %1662 = vmatprep.subr.mxu0 0.0
    %1663 = vmatpush1.xpose.msra.mxu0 0.0
    %1664 = vmatprep.subr.mxu0 0.0
    %1665 = vmatpush1.xpose.msra.mxu0 0.0
    %1666 = vmatprep.subr.mxu0 0.0
    %1667 = vmatpush1.xpose.msra.mxu0 0.0
    %1668 = vmatprep.subr.mxu0 0.0
    %1669 = vmatpush1.xpose.msra.mxu0 0.0
    %1670 = vmatprep.mubr.f32.mxu0 0.0
    %1671 = vmatmul.mubr.f32.gmra.mrb[0].mxu0 %v1602
    %v1672 = vpop.f32.mrb[0].mxu0
    %v1673 = vadd.f32 %v60, %v1672
    %v1674 = vpop.f32.mrb[0].mxu0
    %1675 = vdwg.mxu0
    %v1676 = vsel %vm172, %v1673, -inf
    %1677 = vmax.xlane.f32.xlu0 %v1676
    %v1678 = vpop.xlane.xlu0 %1677
    %v1679 = vsub.f32 %v1673, %v1678
    %v1680 = vmul.f32 %v1679, 1.442695
    %v1681 = vpow.pop %v1680
    %v1682 = vsel %vm172, %v1681, 0.0
    %1683 = vadd.xlane.f32.xlu0 %v1682
    %v1684 = vpop.xlane.xlu0 %1683
    %v1685 = vrcp.pop %v1684
    %v1686 = vmul.f32 %v1681, %v1685
    %1687 = vrot.lane.b32.xlu0 %v166, 48
    %v1688 = vpop.permute.xlu0 %1687
    %v1691 = vsel %vm172, %v1686, 0
    %1693 = vmatprep.subr.mxu0 0.0
    %1694 = vmatpush1.msra.mxu0 %v1688
    %1695 = vmatprep.subr.mxu0 0.0
    %1696 = vmatpush1.msra.mxu0 0.0
    %1697 = vmatprep.subr.mxu0 0.0
    %1698 = vmatpush1.msra.mxu0 0.0
    %1699 = vmatprep.subr.mxu0 0.0
    %1700 = vmatpush1.msra.mxu0 0.0
    %1701 = vmatprep.subr.mxu0 0.0
    %1702 = vmatpush1.msra.mxu0 0.0
    %1703 = vmatprep.subr.mxu0 0.0
    %1704 = vmatpush1.msra.mxu0 0.0
    %1705 = vmatprep.subr.mxu0 0.0
    %1706 = vmatpush1.msra.mxu0 0.0
    %1707 = vmatprep.subr.mxu0 0.0
    %1708 = vmatpush1.msra.mxu0 0.0
    %1709 = vmatprep.subr.mxu0 0.0
    %1710 = vmatpush1.msra.mxu0 0.0
    %1711 = vmatprep.subr.mxu0 0.0
    %1712 = vmatpush1.msra.mxu0 0.0
    %1713 = vmatprep.subr.mxu0 0.0
    %1714 = vmatpush1.msra.mxu0 0.0
    %1715 = vmatprep.subr.mxu0 0.0
    %1716 = vmatpush1.msra.mxu0 0.0
    %1717 = vmatprep.subr.mxu0 0.0
    %1718 = vmatpush1.msra.mxu0 0.0
    %1719 = vmatprep.subr.mxu0 0.0
    %1720 = vmatpush1.msra.mxu0 0.0
    %1721 = vmatprep.subr.mxu0 0.0
    %1722 = vmatpush1.msra.mxu0 0.0
    %1723 = vmatprep.subr.mxu0 0.0
    %1724 = vmatpush1.msra.mxu0 0.0
    %1725 = vmatprep.subr.mxu0 0.0
    %1726 = vmatpush1.msra.mxu0 0.0
    %1727 = vmatprep.subr.mxu0 0.0
    %1728 = vmatpush1.msra.mxu0 0.0
    %1729 = vmatprep.subr.mxu0 0.0
    %1730 = vmatpush1.msra.mxu0 0.0
    %1731 = vmatprep.subr.mxu0 0.0
    %1732 = vmatpush1.msra.mxu0 0.0
    %1733 = vmatprep.subr.mxu0 0.0
    %1734 = vmatpush1.msra.mxu0 0.0
    %1735 = vmatprep.subr.mxu0 0.0
    %1736 = vmatpush1.msra.mxu0 0.0
    %1737 = vmatprep.subr.mxu0 0.0
    %1738 = vmatpush1.msra.mxu0 0.0
    %1739 = vmatprep.subr.mxu0 0.0
    %1740 = vmatpush1.msra.mxu0 0.0
    %1741 = vmatprep.subr.mxu0 0.0
    %1742 = vmatpush1.msra.mxu0 0.0
    %1743 = vmatprep.subr.mxu0 0.0
    %1744 = vmatpush1.msra.mxu0 0.0
    %1745 = vmatprep.subr.mxu0 0.0
    %1746 = vmatpush1.msra.mxu0 0.0
    %1747 = vmatprep.subr.mxu0 0.0
    %1748 = vmatpush1.msra.mxu0 0.0
    %1749 = vmatprep.subr.mxu0 0.0
    %1750 = vmatpush1.msra.mxu0 0.0
    %1751 = vmatprep.subr.mxu0 0.0
    %1752 = vmatpush1.msra.mxu0 0.0
    %1753 = vmatprep.subr.mxu0 0.0
    %1754 = vmatpush1.msra.mxu0 0.0
    %1755 = vmatprep.subr.mxu0 0.0
    %1756 = vmatpush1.msra.mxu0 0.0
    %1757 = vmatprep.mubr.f32.mxu0 0.0
    %1758 = vmatmul.mubr.f32.gmra.mrb[0].mxu0 %v1691
    %v1759 = vpop.f32.mrb[0].mxu0
    %v1760 = vadd.f32 0.0, %v1759
    %v1761 = vpop.f32.mrb[0].mxu0
    %1762 = vdwg.mxu0
    %v1764 = vsel %vm172, %v1760, 0
    %1766 = vmatprep.subr.mxu0 0.0
    %1767 = vmatpush1.msra.mxu0 %v68
    %1768 = vmatprep.subr.mxu0 0.0
    %1769 = vmatpush1.msra.mxu0 0.0
    %1770 = vmatprep.subr.mxu0 0.0
    %1771 = vmatpush1.msra.mxu0 0.0
    %1772 = vmatprep.subr.mxu0 0.0
    %1773 = vmatpush1.msra.mxu0 0.0
    %1774 = vmatprep.subr.mxu0 0.0
    %1775 = vmatpush1.msra.mxu0 0.0
    %1776 = vmatprep.subr.mxu0 0.0
    %1777 = vmatpush1.msra.mxu0 0.0
    %1778 = vmatprep.subr.mxu0 0.0
    %1779 = vmatpush1.msra.mxu0 0.0
    %1780 = vmatprep.subr.mxu0 0.0
    %1781 = vmatpush1.msra.mxu0 0.0
    %1782 = vmatprep.subr.mxu0 0.0
    %1783 = vmatpush1.msra.mxu0 0.0
    %1784 = vmatprep.subr.mxu0 0.0
    %1785 = vmatpush1.msra.mxu0 0.0
    %1786 = vmatprep.subr.mxu0 0.0
    %1787 = vmatpush1.msra.mxu0 0.0
    %1788 = vmatprep.subr.mxu0 0.0
    %1789 = vmatpush1.msra.mxu0 0.0
    %1790 = vmatprep.subr.mxu0 0.0
    %1791 = vmatpush1.msra.mxu0 0.0
    %1792 = vmatprep.subr.mxu0 0.0
    %1793 = vmatpush1.msra.mxu0 0.0
    %1794 = vmatprep.subr.mxu0 0.0
    %1795 = vmatpush1.msra.mxu0 0.0
    %1796 = vmatprep.subr.mxu0 0.0
    %1797 = vmatpush1.msra.mxu0 0.0
    %1798 = vmatprep.subr.mxu0 0.0
    %1799 = vmatpush1.msra.mxu0 0.0
    %1800 = vmatprep.subr.mxu0 0.0
    %1801 = vmatpush1.msra.mxu0 0.0
    %1802 = vmatprep.subr.mxu0 0.0
    %1803 = vmatpush1.msra.mxu0 0.0
    %1804 = vmatprep.subr.mxu0 0.0
    %1805 = vmatpush1.msra.mxu0 0.0
    %1806 = vmatprep.subr.mxu0 0.0
    %1807 = vmatpush1.msra.mxu0 0.0
    %1808 = vmatprep.subr.mxu0 0.0
    %1809 = vmatpush1.msra.mxu0 0.0
    %1810 = vmatprep.subr.mxu0 0.0
    %1811 = vmatpush1.msra.mxu0 0.0
    %1812 = vmatprep.subr.mxu0 0.0
    %1813 = vmatpush1.msra.mxu0 0.0
    %1814 = vmatprep.subr.mxu0 0.0
    %1815 = vmatpush1.msra.mxu0 0.0
    %1816 = vmatprep.subr.mxu0 0.0
    %1817 = vmatpush1.msra.mxu0 0.0
    %1818 = vmatprep.subr.mxu0 0.0
    %1819 = vmatpush1.msra.mxu0 0.0
    %1820 = vmatprep.subr.mxu0 0.0
    %1821 = vmatpush1.msra.mxu0 0.0
    %1822 = vmatprep.subr.mxu0 0.0
    %1823 = vmatpush1.msra.mxu0 0.0
    %1824 = vmatprep.subr.mxu0 0.0
    %1825 = vmatpush1.msra.mxu0 0.0
    %1826 = vmatprep.subr.mxu0 0.0
    %1827 = vmatpush1.msra.mxu0 0.0
    %1828 = vmatprep.subr.mxu0 0.0
    %1829 = vmatpush1.msra.mxu0 0.0
    %1830 = vmatprep.mubr.f32.mxu0 0.0
    %1831 = vmatmul.mubr.f32.gmra.mrb[0].mxu0 %v1764
    %v1832 = vpop.f32.mrb[0].mxu0
    %v1833 = vadd.f32 0.0, %v1832
    %v1834 = vpop.f32.mrb[0].mxu0
    %1835 = vdwg.mxu0
    %v1836 = vadd.f32 %v1595, %v1833
    %1837 = vrot.lane.b32.xlu0 %v166, 104
    %v1838 = vpop.permute.xlu0 %1837
    %1839 = vrot.lane.b32.xlu0 %v166, 72
    %v1840 = vpop.permute.xlu0 %1839
    %v1841 = vsel %vm172, %v1838, 0
    %v1843 = vsel %vm172, %v1840, 0
    %1845 = vmatprep.subr.mxu0 0.0
    %1846 = vmatpush1.xpose.msra.mxu0 %v1843
    %1847 = vmatprep.subr.mxu0 0.0
    %1848 = vmatpush1.xpose.msra.mxu0 0.0
    %1849 = vmatprep.subr.mxu0 0.0
    %1850 = vmatpush1.xpose.msra.mxu0 0.0
    %1851 = vmatprep.subr.mxu0 0.0
    %1852 = vmatpush1.xpose.msra.mxu0 0.0
    %1853 = vmatprep.subr.mxu0 0.0
    %1854 = vmatpush1.xpose.msra.mxu0 0.0
    %1855 = vmatprep.subr.mxu0 0.0
    %1856 = vmatpush1.xpose.msra.mxu0 0.0
    %1857 = vmatprep.subr.mxu0 0.0
    %1858 = vmatpush1.xpose.msra.mxu0 0.0
    %1859 = vmatprep.subr.mxu0 0.0
    %1860 = vmatpush1.xpose.msra.mxu0 0.0
    %1861 = vmatprep.subr.mxu0 0.0
    %1862 = vmatpush1.xpose.msra.mxu0 0.0
    %1863 = vmatprep.subr.mxu0 0.0
    %1864 = vmatpush1.xpose.msra.mxu0 0.0
    %1865 = vmatprep.subr.mxu0 0.0
    %1866 = vmatpush1.xpose.msra.mxu0 0.0
    %1867 = vmatprep.subr.mxu0 0.0
    %1868 = vmatpush1.xpose.msra.mxu0 0.0
    %1869 = vmatprep.subr.mxu0 0.0
    %1870 = vmatpush1.xpose.msra.mxu0 0.0
    %1871 = vmatprep.subr.mxu0 0.0
    %1872 = vmatpush1.xpose.msra.mxu0 0.0
    %1873 = vmatprep.subr.mxu0 0.0
    %1874 = vmatpush1.xpose.msra.mxu0 0.0
    %1875 = vmatprep.subr.mxu0 0.0
    %1876 = vmatpush1.xpose.msra.mxu0 0.0
    %1877 = vmatprep.subr.mxu0 0.0
    %1878 = vmatpush1.xpose.msra.mxu0 0.0
    %1879 = vmatprep.subr.mxu0 0.0
    %1880 = vmatpush1.xpose.msra.mxu0 0.0
    %1881 = vmatprep.subr.mxu0 0.0
    %1882 = vmatpush1.xpose.msra.mxu0 0.0
    %1883 = vmatprep.subr.mxu0 0.0
    %1884 = vmatpush1.xpose.msra.mxu0 0.0
    %1885 = vmatprep.subr.mxu0 0.0
    %1886 = vmatpush1.xpose.msra.mxu0 0.0
    %1887 = vmatprep.subr.mxu0 0.0
    %1888 = vmatpush1.xpose.msra.mxu0 0.0
    %1889 = vmatprep.subr.mxu0 0.0
    %1890 = vmatpush1.xpose.msra.mxu0 0.0
    %1891 = vmatprep.subr.mxu0 0.0
    %1892 = vmatpush1.xpose.msra.mxu0 0.0
    %1893 = vmatprep.subr.mxu0 0.0
    %1894 = vmatpush1.xpose.msra.mxu0 0.0
    %1895 = vmatprep.subr.mxu0 0.0
    %1896 = vmatpush1.xpose.msra.mxu0 0.0
    %1897 = vmatprep.subr.mxu0 0.0
    %1898 = vmatpush1.xpose.msra.mxu0 0.0
    %1899 = vmatprep.subr.mxu0 0.0
    %1900 = vmatpush1.xpose.msra.mxu0 0.0
    %1901 = vmatprep.subr.mxu0 0.0
    %1902 = vmatpush1.xpose.msra.mxu0 0.0
    %1903 = vmatprep.subr.mxu0 0.0
    %1904 = vmatpush1.xpose.msra.mxu0 0.0
    %1905 = vmatprep.subr.mxu0 0.0
    %1906 = vmatpush1.xpose.msra.mxu0 0.0
    %1907 = vmatprep.subr.mxu0 0.0
    %1908 = vmatpush1.xpose.msra.mxu0 0.0
    %1909 = vmatprep.mubr.f32.mxu0 0.0
    %1910 = vmatmul.mubr.f32.gmra.mrb[0].mxu0 %v1841
    %v1911 = vpop.f32.mrb[0].mxu0
    %v1912 = vadd.f32 %v60, %v1911
    %v1913 = vpop.f32.mrb[0].mxu0
    %1914 = vdwg.mxu0
    %v1915 = vsel %vm172, %v1912, -inf
    %1916 = vmax.xlane.f32.xlu0 %v1915
    %v1917 = vpop.xlane.xlu0 %1916
    %v1918 = vsub.f32 %v1912, %v1917
    %v1919 = vmul.f32 %v1918, 1.442695
    %v1920 = vpow.pop %v1919
    %v1921 = vsel %vm172, %v1920, 0.0
    %1922 = vadd.xlane.f32.xlu0 %v1921
    %v1923 = vpop.xlane.xlu0 %1922
    %v1924 = vrcp.pop %v1923
    %v1925 = vmul.f32 %v1920, %v1924
    %1926 = vrot.lane.b32.xlu0 %v166, 40
    %v1927 = vpop.permute.xlu0 %1926
    %v1930 = vsel %vm172, %v1925, 0
    %1932 = vmatprep.subr.mxu0 0.0
    %1933 = vmatpush1.msra.mxu0 %v1927
    %1934 = vmatprep.subr.mxu0 0.0
    %1935 = vmatpush1.msra.mxu0 0.0
    %1936 = vmatprep.subr.mxu0 0.0
    %1937 = vmatpush1.msra.mxu0 0.0
    %1938 = vmatprep.subr.mxu0 0.0
    %1939 = vmatpush1.msra.mxu0 0.0
    %1940 = vmatprep.subr.mxu0 0.0
    %1941 = vmatpush1.msra.mxu0 0.0
    %1942 = vmatprep.subr.mxu0 0.0
    %1943 = vmatpush1.msra.mxu0 0.0
    %1944 = vmatprep.subr.mxu0 0.0
    %1945 = vmatpush1.msra.mxu0 0.0
    %1946 = vmatprep.subr.mxu0 0.0
    %1947 = vmatpush1.msra.mxu0 0.0
    %1948 = vmatprep.subr.mxu0 0.0
    %1949 = vmatpush1.msra.mxu0 0.0
    %1950 = vmatprep.subr.mxu0 0.0
    %1951 = vmatpush1.msra.mxu0 0.0
    %1952 = vmatprep.subr.mxu0 0.0
    %1953 = vmatpush1.msra.mxu0 0.0
    %1954 = vmatprep.subr.mxu0 0.0
    %1955 = vmatpush1.msra.mxu0 0.0
    %1956 = vmatprep.subr.mxu0 0.0
    %1957 = vmatpush1.msra.mxu0 0.0
    %1958 = vmatprep.subr.mxu0 0.0
    %1959 = vmatpush1.msra.mxu0 0.0
    %1960 = vmatprep.subr.mxu0 0.0
    %1961 = vmatpush1.msra.mxu0 0.0
    %1962 = vmatprep.subr.mxu0 0.0
    %1963 = vmatpush1.msra.mxu0 0.0
    %1964 = vmatprep.subr.mxu0 0.0
    %1965 = vmatpush1.msra.mxu0 0.0
    %1966 = vmatprep.subr.mxu0 0.0
    %1967 = vmatpush1.msra.mxu0 0.0
    %1968 = vmatprep.subr.mxu0 0.0
    %1969 = vmatpush1.msra.mxu0 0.0
    %1970 = vmatprep.subr.mxu0 0.0
    %1971 = vmatpush1.msra.mxu0 0.0
    %1972 = vmatprep.subr.mxu0 0.0
    %1973 = vmatpush1.msra.mxu0 0.0
    %1974 = vmatprep.subr.mxu0 0.0
    %1975 = vmatpush1.msra.mxu0 0.0
    %1976 = vmatprep.subr.mxu0 0.0
    %1977 = vmatpush1.msra.mxu0 0.0
    %1978 = vmatprep.subr.mxu0 0.0
    %1979 = vmatpush1.msra.mxu0 0.0
    %1980 = vmatprep.subr.mxu0 0.0
    %1981 = vmatpush1.msra.mxu0 0.0
    %1982 = vmatprep.subr.mxu0 0.0
    %1983 = vmatpush1.msra.mxu0 0.0
    %1984 = vmatprep.subr.mxu0 0.0
    %1985 = vmatpush1.msra.mxu0 0.0
    %1986 = vmatprep.subr.mxu0 0.0
    %1987 = vmatpush1.msra.mxu0 0.0
    %1988 = vmatprep.subr.mxu0 0.0
    %1989 = vmatpush1.msra.mxu0 0.0
    %1990 = vmatprep.subr.mxu0 0.0
    %1991 = vmatpush1.msra.mxu0 0.0
    %1992 = vmatprep.subr.mxu0 0.0
    %1993 = vmatpush1.msra.mxu0 0.0
    %1994 = vmatprep.subr.mxu0 0.0
    %1995 = vmatpush1.msra.mxu0 0.0
    %1996 = vmatprep.mubr.f32.mxu0 0.0
    %1997 = vmatmul.mubr.f32.gmra.mrb[0].mxu0 %v1930
    %v1998 = vpop.f32.mrb[0].mxu0
    %v1999 = vadd.f32 0.0, %v1998
    %v2000 = vpop.f32.mrb[0].mxu0
    %2001 = vdwg.mxu0
    %v2003 = vsel %vm172, %v1999, 0
    %2005 = vmatprep.subr.mxu0 0.0
    %2006 = vmatpush1.msra.mxu0 %v69
    %2007 = vmatprep.subr.mxu0 0.0
    %2008 = vmatpush1.msra.mxu0 0.0
    %2009 = vmatprep.subr.mxu0 0.0
    %2010 = vmatpush1.msra.mxu0 0.0
    %2011 = vmatprep.subr.mxu0 0.0
    %2012 = vmatpush1.msra.mxu0 0.0
    %2013 = vmatprep.subr.mxu0 0.0
    %2014 = vmatpush1.msra.mxu0 0.0
    %2015 = vmatprep.subr.mxu0 0.0
    %2016 = vmatpush1.msra.mxu0 0.0
    %2017 = vmatprep.subr.mxu0 0.0
    %2018 = vmatpush1.msra.mxu0 0.0
    %2019 = vmatprep.subr.mxu0 0.0
    %2020 = vmatpush1.msra.mxu0 0.0
    %2021 = vmatprep.subr.mxu0 0.0
    %2022 = vmatpush1.msra.mxu0 0.0
    %2023 = vmatprep.subr.mxu0 0.0
    %2024 = vmatpush1.msra.mxu0 0.0
    %2025 = vmatprep.subr.mxu0 0.0
    %2026 = vmatpush1.msra.mxu0 0.0
    %2027 = vmatprep.subr.mxu0 0.0
    %2028 = vmatpush1.msra.mxu0 0.0
    %2029 = vmatprep.subr.mxu0 0.0
    %2030 = vmatpush1.msra.mxu0 0.0
    %2031 = vmatprep.subr.mxu0 0.0
    %2032 = vmatpush1.msra.mxu0 0.0
    %2033 = vmatprep.subr.mxu0 0.0
    %2034 = vmatpush1.msra.mxu0 0.0
    %2035 = vmatprep.subr.mxu0 0.0
    %2036 = vmatpush1.msra.mxu0 0.0
    %2037 = vmatprep.subr.mxu0 0.0
    %2038 = vmatpush1.msra.mxu0 0.0
    %2039 = vmatprep.subr.mxu0 0.0
    %2040 = vmatpush1.msra.mxu0 0.0
    %2041 = vmatprep.subr.mxu0 0.0
    %2042 = vmatpush1.msra.mxu0 0.0
    %2043 = vmatprep.subr.mxu0 0.0
    %2044 = vmatpush1.msra.mxu0 0.0
    %2045 = vmatprep.subr.mxu0 0.0
    %2046 = vmatpush1.msra.mxu0 0.0
    %2047 = vmatprep.subr.mxu0 0.0
    %2048 = vmatpush1.msra.mxu0 0.0
    %2049 = vmatprep.subr.mxu0 0.0
    %2050 = vmatpush1.msra.mxu0 0.0
    %2051 = vmatprep.subr.mxu0 0.0
    %2052 = vmatpush1.msra.mxu0 0.0
    %2053 = vmatprep.subr.mxu0 0.0
    %2054 = vmatpush1.msra.mxu0 0.0
    %2055 = vmatprep.subr.mxu0 0.0
    %2056 = vmatpush1.msra.mxu0 0.0
    %2057 = vmatprep.subr.mxu0 0.0
    %2058 = vmatpush1.msra.mxu0 0.0
    %2059 = vmatprep.subr.mxu0 0.0
    %2060 = vmatpush1.msra.mxu0 0.0
    %2061 = vmatprep.subr.mxu0 0.0
    %2062 = vmatpush1.msra.mxu0 0.0
    %2063 = vmatprep.subr.mxu0 0.0
    %2064 = vmatpush1.msra.mxu0 0.0
    %2065 = vmatprep.subr.mxu0 0.0
    %2066 = vmatpush1.msra.mxu0 0.0
    %2067 = vmatprep.subr.mxu0 0.0
    %2068 = vmatpush1.msra.mxu0 0.0
    %2069 = vmatprep.mubr.f32.mxu0 0.0
    %2070 = vmatmul.mubr.f32.gmra.mrb[0].mxu0 %v2003
    %v2071 = vpop.f32.mrb[0].mxu0
    %v2072 = vadd.f32 0.0, %v2071
    %v2073 = vpop.f32.mrb[0].mxu0
    %2074 = vdwg.mxu0
    %v2075 = vadd.f32 %v1836, %v2072
    %v2076 = vlaneseq
    %v2077 = vshrl.u32 %v2076, 7
    %v2078 = vsub.s32 2, %v2077
    %v2079 = vrot.slane %v82, %v2078
    %v2080 = vadd.f32 %v1122, %v2079
    %v2081 = vadd.f32 %v2075, %v2079
    %v2082 = vadd.f32 %v41, %v2080
    %v2083 = vadd.f32 %v42, %v2081
    %v2084 = vsel %vm87, %v2082, 0.0
    %2085 = vadd.xlane.f32.xlu0 %v2084
    %v2086 = vpop.xlane.xlu0 %2085
    %v2087 = vsel %vm87, %v2083, 0.0
    %2088 = vadd.xlane.f32.xlu0 %v2087
    %v2089 = vpop.xlane.xlu0 %2088
    %v2090 = vrcp.pop 32.0
    %v2091 = vmul.f32 %v2086, %v2090
    %v2092 = vmul.f32 %v2089, %v2090
    %v2093 = vsub.f32 %v2082, %v2091
    %v2094 = vsub.f32 %v2083, %v2092
    %v2095 = vmul.f32 %v2093, %v2093
    %v2096 = vmul.f32 %v2094, %v2094
    %v2097 = vsel %vm87, %v2095, 0.0
    %2098 = vadd.xlane.f32.xlu0 %v2097
    %v2099 = vpop.xlane.xlu0 %2098
    %v2100 = vsel %vm87, %v2096, 0.0
    %2101 = vadd.xlane.f32.xlu0 %v2100
    %v2102 = vpop.xlane.xlu0 %2101
    %v2103 = vmul.f32 %v2099, %v2090
    %v2104 = vmul.f32 %v2102, %v2090
    %v2105 = vadd.f32 %v2103, 1e-05
    %v2106 = vadd.f32 %v2104, 1e-05
    %v2107 = vrsqrt.pop %v2105
    %v2108 = vrsqrt.pop %v2106
    %v2109 = vmul.f32 %v2093, %v2107
    %v2110 = vmul.f32 %v2094, %v2108
    %v2111 = vlaneseq
    %v2112 = vshrl.u32 %v2111, 7
    %v2113 = vsub.s32 3, %v2112
    %v2114 = vrot.slane %v82, %v2113
    %v2115 = vmul.f32 %v2109, %v2114
    %v2116 = vmul.f32 %v2110, %v2114
    %v2117 = vlaneseq
    %v2118 = vshrl.u32 %v2117, 7
    %v2119 = vsub.s32 4, %v2118
    %v2120 = vrot.slane %v82, %v2119
    %v2121 = vadd.f32 %v2115, %v2120
    %v2122 = vadd.f32 %v2116, %v2120
    %v2123 = vlaneseq
    %v2124 = vshrl.u32 %v2123, 7
    %v2125 = vsub.s32 1, %v2124
    %v2126 = vrot.slane %v82, %v2125
    %v2128 = vsel %vm87, %v2121, 0
    %v2131 = vsel %vm87, %v2122, 0
    %2133 = vmatprep.subr.mxu0 0.0
    %2134 = vmatpush1.msra.mxu0 %v70
    %2135 = vmatprep.subr.mxu0 0.0
    %2136 = vmatpush1.msra.mxu0 %v71
    %2137 = vmatprep.subr.mxu0 0.0
    %2138 = vmatpush1.msra.mxu0 %v72
    %2139 = vmatprep.subr.mxu0 0.0
    %2140 = vmatpush1.msra.mxu0 %v73
    %2141 = vmatprep.subr.mxu0 0.0
    %2142 = vmatpush1.msra.mxu0 0.0
    %2143 = vmatprep.subr.mxu0 0.0
    %2144 = vmatpush1.msra.mxu0 0.0
    %2145 = vmatprep.subr.mxu0 0.0
    %2146 = vmatpush1.msra.mxu0 0.0
    %2147 = vmatprep.subr.mxu0 0.0
    %2148 = vmatpush1.msra.mxu0 0.0
    %2149 = vmatprep.subr.mxu0 0.0
    %2150 = vmatpush1.msra.mxu0 0.0
    %2151 = vmatprep.subr.mxu0 0.0
    %2152 = vmatpush1.msra.mxu0 0.0
    %2153 = vmatprep.subr.mxu0 0.0
    %2154 = vmatpush1.msra.mxu0 0.0
    %2155 = vmatprep.subr.mxu0 0.0
    %2156 = vmatpush1.msra.mxu0 0.0
    %2157 = vmatprep.subr.mxu0 0.0
    %2158 = vmatpush1.msra.mxu0 0.0
    %2159 = vmatprep.subr.mxu0 0.0
    %2160 = vmatpush1.msra.mxu0 0.0
    %2161 = vmatprep.subr.mxu0 0.0
    %2162 = vmatpush1.msra.mxu0 0.0
    %2163 = vmatprep.subr.mxu0 0.0
    %2164 = vmatpush1.msra.mxu0 0.0
    %2165 = vmatprep.subr.mxu0 0.0
    %2166 = vmatpush1.msra.mxu0 0.0
    %2167 = vmatprep.subr.mxu0 0.0
    %2168 = vmatpush1.msra.mxu0 0.0
    %2169 = vmatprep.subr.mxu0 0.0
    %2170 = vmatpush1.msra.mxu0 0.0
    %2171 = vmatprep.subr.mxu0 0.0
    %2172 = vmatpush1.msra.mxu0 0.0
    %2173 = vmatprep.subr.mxu0 0.0
    %2174 = vmatpush1.msra.mxu0 0.0
    %2175 = vmatprep.subr.mxu0 0.0
    %2176 = vmatpush1.msra.mxu0 0.0
    %2177 = vmatprep.subr.mxu0 0.0
    %2178 = vmatpush1.msra.mxu0 0.0
    %2179 = vmatprep.subr.mxu0 0.0
    %2180 = vmatpush1.msra.mxu0 0.0
    %2181 = vmatprep.subr.mxu0 0.0
    %2182 = vmatpush1.msra.mxu0 0.0
    %2183 = vmatprep.subr.mxu0 0.0
    %2184 = vmatpush1.msra.mxu0 0.0
    %2185 = vmatprep.subr.mxu0 0.0
    %2186 = vmatpush1.msra.mxu0 0.0
    %2187 = vmatprep.subr.mxu0 0.0
    %2188 = vmatpush1.msra.mxu0 0.0
    %2189 = vmatprep.subr.mxu0 0.0
    %2190 = vmatpush1.msra.mxu0 0.0
    %2191 = vmatprep.subr.mxu0 0.0
    %2192 = vmatpush1.msra.mxu0 0.0
    %2193 = vmatprep.subr.mxu0 0.0
    %2194 = vmatpush1.msra.mxu0 0.0
    %2195 = vmatprep.subr.mxu0 0.0
    %2196 = vmatpush1.msra.mxu0 0.0
    %2197 = vmatprep.mubr.f32.mxu0 0.0
    %2198 = vmatmul.mubr.f32.gmra.mrb[0].mxu0 %v2128
    %v2199 = vpop.f32.mrb[0].mxu0
    %v2200 = vadd.f32 %v2126, %v2199
    %v2201 = vpop.f32.mrb[0].mxu0
    %2202 = vmatprep.mubr.f32.mxu0 0.0
    %2203 = vmatmul.mubr.f32.gmra.mrb[0].mxu0 %v2131
    %v2204 = vpop.f32.mrb[0].mxu0
    %v2205 = vadd.f32 %v2126, %v2204
    %v2206 = vpop.f32.mrb[0].mxu0
    %2207 = vdwg.mxu0
    %v2208 = vmax.f32 %v2200, 0.0
    %v2209 = vmax.f32 %v2205, 0.0
    %v2210 = vlaneseq
    %v2211 = vshrl.u32 %v2210, 7
    %v2212 = vsub.s32 5, %v2211
    %v2213 = vrot.slane %v82, %v2212
    %vm2214 = vcmask 523264
    %v2216 = vsel %vm2214, %v2208, 0
    %v2219 = vsel %vm2214, %v2209, 0
    %2221 = vmatprep.subr.mxu0 0.0
    %2222 = vmatpush1.msra.mxu0 %v74
    %2223 = vmatprep.subr.mxu0 0.0
    %2224 = vmatpush1.msra.mxu0 %v75
    %2225 = vmatprep.subr.mxu0 0.0
    %2226 = vmatpush1.msra.mxu0 %v76
    %2227 = vmatprep.subr.mxu0 0.0
    %2228 = vmatpush1.msra.mxu0 %v77
    %2229 = vmatprep.subr.mxu0 0.0
    %2230 = vmatpush1.msra.mxu0 %v78
    %2231 = vmatprep.subr.mxu0 0.0
    %2232 = vmatpush1.msra.mxu0 %v79
    %2233 = vmatprep.subr.mxu0 0.0
    %2234 = vmatpush1.msra.mxu0 %v80
    %2235 = vmatprep.subr.mxu0 0.0
    %2236 = vmatpush1.msra.mxu0 %v81
    %2237 = vmatprep.subr.mxu0 0.0
    %2238 = vmatpush1.msra.mxu0 0.0
    %2239 = vmatprep.subr.mxu0 0.0
    %2240 = vmatpush1.msra.mxu0 0.0
    %2241 = vmatprep.subr.mxu0 0.0
    %2242 = vmatpush1.msra.mxu0 0.0
    %2243 = vmatprep.subr.mxu0 0.0
    %2244 = vmatpush1.msra.mxu0 0.0
    %2245 = vmatprep.subr.mxu0 0.0
    %2246 = vmatpush1.msra.mxu0 0.0
    %2247 = vmatprep.subr.mxu0 0.0
    %2248 = vmatpush1.msra.mxu0 0.0
    %2249 = vmatprep.subr.mxu0 0.0
    %2250 = vmatpush1.msra.mxu0 0.0
    %2251 = vmatprep.subr.mxu0 0.0
    %2252 = vmatpush1.msra.mxu0 0.0
    %2253 = vmatprep.subr.mxu0 0.0
    %2254 = vmatpush1.msra.mxu0 0.0
    %2255 = vmatprep.subr.mxu0 0.0
    %2256 = vmatpush1.msra.mxu0 0.0
    %2257 = vmatprep.subr.mxu0 0.0
    %2258 = vmatpush1.msra.mxu0 0.0
    %2259 = vmatprep.subr.mxu0 0.0
    %2260 = vmatpush1.msra.mxu0 0.0
    %2261 = vmatprep.subr.mxu0 0.0
    %2262 = vmatpush1.msra.mxu0 0.0
    %2263 = vmatprep.subr.mxu0 0.0
    %2264 = vmatpush1.msra.mxu0 0.0
    %2265 = vmatprep.subr.mxu0 0.0
    %2266 = vmatpush1.msra.mxu0 0.0
    %2267 = vmatprep.subr.mxu0 0.0
    %2268 = vmatpush1.msra.mxu0 0.0
    %2269 = vmatprep.subr.mxu0 0.0
    %2270 = vmatpush1.msra.mxu0 0.0
    %2271 = vmatprep.subr.mxu0 0.0
    %2272 = vmatpush1.msra.mxu0 0.0
    %2273 = vmatprep.subr.mxu0 0.0
    %2274 = vmatpush1.msra.mxu0 0.0
    %2275 = vmatprep.subr.mxu0 0.0
    %2276 = vmatpush1.msra.mxu0 0.0
    %2277 = vmatprep.subr.mxu0 0.0
    %2278 = vmatpush1.msra.mxu0 0.0
    %2279 = vmatprep.subr.mxu0 0.0
    %2280 = vmatpush1.msra.mxu0 0.0
    %2281 = vmatprep.subr.mxu0 0.0
    %2282 = vmatpush1.msra.mxu0 0.0
    %2283 = vmatprep.subr.mxu0 0.0
    %2284 = vmatpush1.msra.mxu0 0.0
    %2285 = vmatprep.mubr.f32.mxu0 0.0
    %2286 = vmatmul.mubr.f32.gmra.mrb[0].mxu0 %v2216
    %v2287 = vpop.f32.mrb[0].mxu0
    %v2288 = vadd.f32 %v2213, %v2287
    %v2289 = vpop.f32.mrb[0].mxu0
    %2290 = vmatprep.mubr.f32.mxu0 0.0
    %2291 = vmatmul.mubr.f32.gmra.mrb[0].mxu0 %v2219
    %v2292 = vpop.f32.mrb[0].mxu0
    %v2293 = vadd.f32 %v2213, %v2292
    %v2294 = vpop.f32.mrb[0].mxu0
    %2295 = vdwg.mxu0
    %v2296 = vadd.f32 %v2121, %v2288
    %v2297 = vadd.f32 %v2122, %v2293
    %v2298 = vsel %vm87, %v2296, 0.0
    %2299 = vadd.xlane.f32.xlu0 %v2298
    %v2300 = vpop.xlane.xlu0 %2299
    %v2301 = vsel %vm87, %v2297, 0.0
    %2302 = vadd.xlane.f32.xlu0 %v2301
    %v2303 = vpop.xlane.xlu0 %2302
    %v2304 = vmul.f32 %v2300, %v2090
    %v2305 = vmul.f32 %v2303, %v2090
    %v2306 = vsub.f32 %v2296, %v2304
    %v2307 = vsub.f32 %v2297, %v2305
    %v2308 = vmul.f32 %v2306, %v2306
    %v2309 = vmul.f32 %v2307, %v2307
    %v2310 = vsel %vm87, %v2308, 0.0
    %2311 = vadd.xlane.f32.xlu0 %v2310
    %v2312 = vpop.xlane.xlu0 %2311
    %v2313 = vsel %vm87, %v2309, 0.0
    %2314 = vadd.xlane.f32.xlu0 %v2313
    %v2315 = vpop.xlane.xlu0 %2314
    %v2316 = vmul.f32 %v2312, %v2090
    %v2317 = vmul.f32 %v2315, %v2090
    %v2318 = vadd.f32 %v2316, 1e-05
    %v2319 = vadd.f32 %v2317, 1e-05
    %v2320 = vrsqrt.pop %v2318
    %v2321 = vrsqrt.pop %v2319
    %v2322 = vmul.f32 %v2306, %v2320
    %v2323 = vmul.f32 %v2307, %v2321
    %v2324 = vlaneseq
    %v2325 = vshrl.u32 %v2324, 7
    %v2326 = vsub.s32 6, %v2325
    %v2327 = vrot.slane %v82, %v2326
    %v2328 = vmul.f32 %v2322, %v2327
    %v2329 = vmul.f32 %v2323, %v2327
    %v2330 = vlaneseq
    %v2331 = vshrl.u32 %v2330, 7
    %v2332 = vsub.s32 7, %v2331
    %v2333 = vrot.slane %v82, %v2332
    %v2334 = vadd.f32 %v2328, %v2333
    %v2335 = vadd.f32 %v2329, %v2333
    %s2336 = scalar_lea.vmem %s2, 32
    %v2337 = vld [vmem:[%s2336] sm:$0xff]
    %v2338 = vld [vmem:[%s2336 + $0x8] sm:$0xff]
    %v2339 = vld [vmem:[%s2336 + $0x10] sm:$0xff]
    %v2340 = vld [vmem:[%s2336 + $0x18] sm:$0xff]
    %s2341 = scalar_lea.vmem %s3, 32
    %v2342 = vld [vmem:[%s2341] sm:$0xff]
    %v2343 = vld [vmem:[%s2341 + $0x8] sm:$0xff]
    %v2344 = vld [vmem:[%s2341 + $0x10] sm:$0xff]
    %v2345 = vld [vmem:[%s2341 + $0x18] sm:$0xff]
    %s2346 = scalar_lea.vmem %s4, 32
    %v2347 = vld [vmem:[%s2346] sm:$0xff]
    %v2348 = vld [vmem:[%s2346 + $0x8] sm:$0xff]
    %v2349 = vld [vmem:[%s2346 + $0x10] sm:$0xff]
    %v2350 = vld [vmem:[%s2346 + $0x18] sm:$0xff]
    %s2351 = scalar_lea.vmem %s5, 64
    %v2352 = vld [vmem:[%s2351] sm:$0xff]
    %v2353 = vld [vmem:[%s2351 + $0x8] sm:$0xff]
    %v2354 = vld [vmem:[%s2351 + $0x10] sm:$0xff]
    %v2355 = vld [vmem:[%s2351 + $0x18] sm:$0xff]
    %v2356 = vld [vmem:[%s2351 + $0x20] sm:$0xff]
    %v2357 = vld [vmem:[%s2351 + $0x28] sm:$0xff]
    %v2358 = vld [vmem:[%s2351 + $0x30] sm:$0xff]
    %v2359 = vld [vmem:[%s2351 + $0x38] sm:$0xff]
    %s2360 = scalar_lea.vmem %s6, 8
    %v2361 = vld [vmem:[%s2360] sm:$0xff]
    %v2362 = vlaneseq
    %v2363 = vshrl.u32 %v2362, 7
    %v2364 = vsub.s32 0, %v2363
    %v2365 = vrot.slane %v2361, %v2364
    %v2367 = vsel %vm87, %v2334, 0
    %v2370 = vsel %vm87, %v2335, 0
    %2372 = vmatprep.subr.mxu0 0.0
    %2373 = vmatpush1.msra.mxu0 %v2337
    %2374 = vmatprep.subr.mxu0 0.0
    %2375 = vmatpush1.msra.mxu0 %v2338
    %2376 = vmatprep.subr.mxu0 0.0
    %2377 = vmatpush1.msra.mxu0 %v2339
    %2378 = vmatprep.subr.mxu0 0.0
    %2379 = vmatpush1.msra.mxu0 %v2340
    %2380 = vmatprep.subr.mxu0 0.0
    %2381 = vmatpush1.msra.mxu0 0.0
    %2382 = vmatprep.subr.mxu0 0.0
    %2383 = vmatpush1.msra.mxu0 0.0
    %2384 = vmatprep.subr.mxu0 0.0
    %2385 = vmatpush1.msra.mxu0 0.0
    %2386 = vmatprep.subr.mxu0 0.0
    %2387 = vmatpush1.msra.mxu0 0.0
    %2388 = vmatprep.subr.mxu0 0.0
    %2389 = vmatpush1.msra.mxu0 0.0
    %2390 = vmatprep.subr.mxu0 0.0
    %2391 = vmatpush1.msra.mxu0 0.0
    %2392 = vmatprep.subr.mxu0 0.0
    %2393 = vmatpush1.msra.mxu0 0.0
    %2394 = vmatprep.subr.mxu0 0.0
    %2395 = vmatpush1.msra.mxu0 0.0
    %2396 = vmatprep.subr.mxu0 0.0
    %2397 = vmatpush1.msra.mxu0 0.0
    %2398 = vmatprep.subr.mxu0 0.0
    %2399 = vmatpush1.msra.mxu0 0.0
    %2400 = vmatprep.subr.mxu0 0.0
    %2401 = vmatpush1.msra.mxu0 0.0
    %2402 = vmatprep.subr.mxu0 0.0
    %2403 = vmatpush1.msra.mxu0 0.0
    %2404 = vmatprep.subr.mxu0 0.0
    %2405 = vmatpush1.msra.mxu0 0.0
    %2406 = vmatprep.subr.mxu0 0.0
    %2407 = vmatpush1.msra.mxu0 0.0
    %2408 = vmatprep.subr.mxu0 0.0
    %2409 = vmatpush1.msra.mxu0 0.0
    %2410 = vmatprep.subr.mxu0 0.0
    %2411 = vmatpush1.msra.mxu0 0.0
    %2412 = vmatprep.subr.mxu0 0.0
    %2413 = vmatpush1.msra.mxu0 0.0
    %2414 = vmatprep.subr.mxu0 0.0
    %2415 = vmatpush1.msra.mxu0 0.0
    %2416 = vmatprep.subr.mxu0 0.0
    %2417 = vmatpush1.msra.mxu0 0.0
    %2418 = vmatprep.subr.mxu0 0.0
    %2419 = vmatpush1.msra.mxu0 0.0
    %2420 = vmatprep.subr.mxu0 0.0
    %2421 = vmatpush1.msra.mxu0 0.0
    %2422 = vmatprep.subr.mxu0 0.0
    %2423 = vmatpush1.msra.mxu0 0.0
    %2424 = vmatprep.subr.mxu0 0.0
    %2425 = vmatpush1.msra.mxu0 0.0
    %2426 = vmatprep.subr.mxu0 0.0
    %2427 = vmatpush1.msra.mxu0 0.0
    %2428 = vmatprep.subr.mxu0 0.0
    %2429 = vmatpush1.msra.mxu0 0.0
    %2430 = vmatprep.subr.mxu0 0.0
    %2431 = vmatpush1.msra.mxu0 0.0
    %2432 = vmatprep.subr.mxu0 0.0
    %2433 = vmatpush1.msra.mxu0 0.0
    %2434 = vmatprep.subr.mxu0 0.0
    %2435 = vmatpush1.msra.mxu0 0.0
    %2436 = vmatprep.mubr.f32.mxu0 0.0
    %2437 = vmatmul.mubr.f32.gmra.mrb[0].mxu0 %v2367
    %v2438 = vpop.f32.mrb[0].mxu0
    %v2439 = vadd.f32 %v2365, %v2438
    %v2440 = vpop.f32.mrb[0].mxu0
    %2441 = vmatprep.mubr.f32.mxu0 0.0
    %2442 = vmatmul.mubr.f32.gmra.mrb[0].mxu0 %v2370
    %v2443 = vpop.f32.mrb[0].mxu0
    %v2444 = vadd.f32 %v2365, %v2443
    %v2445 = vpop.f32.mrb[0].mxu0
    %2446 = vdwg.mxu0
    %2448 = vrot.lane.b32.xlu0 %v2439, 96
    %v2449 = vpop.permute.xlu0 %2448
    %v2450 = vsel %vm172, %v2439, 0
    %v2452 = vsel %vm172, %v2449, 0
    %2454 = vmatprep.subr.mxu0 0.0
    %2455 = vmatpush1.xpose.msra.mxu0 %v2452
    %2456 = vmatprep.subr.mxu0 0.0
    %2457 = vmatpush1.xpose.msra.mxu0 0.0
    %2458 = vmatprep.subr.mxu0 0.0
    %2459 = vmatpush1.xpose.msra.mxu0 0.0
    %2460 = vmatprep.subr.mxu0 0.0
    %2461 = vmatpush1.xpose.msra.mxu0 0.0
    %2462 = vmatprep.subr.mxu0 0.0
    %2463 = vmatpush1.xpose.msra.mxu0 0.0
    %2464 = vmatprep.subr.mxu0 0.0
    %2465 = vmatpush1.xpose.msra.mxu0 0.0
    %2466 = vmatprep.subr.mxu0 0.0
    %2467 = vmatpush1.xpose.msra.mxu0 0.0
    %2468 = vmatprep.subr.mxu0 0.0
    %2469 = vmatpush1.xpose.msra.mxu0 0.0
    %2470 = vmatprep.subr.mxu0 0.0
    %2471 = vmatpush1.xpose.msra.mxu0 0.0
    %2472 = vmatprep.subr.mxu0 0.0
    %2473 = vmatpush1.xpose.msra.mxu0 0.0
    %2474 = vmatprep.subr.mxu0 0.0
    %2475 = vmatpush1.xpose.msra.mxu0 0.0
    %2476 = vmatprep.subr.mxu0 0.0
    %2477 = vmatpush1.xpose.msra.mxu0 0.0
    %2478 = vmatprep.subr.mxu0 0.0
    %2479 = vmatpush1.xpose.msra.mxu0 0.0
    %2480 = vmatprep.subr.mxu0 0.0
    %2481 = vmatpush1.xpose.msra.mxu0 0.0
    %2482 = vmatprep.subr.mxu0 0.0
    %2483 = vmatpush1.xpose.msra.mxu0 0.0
    %2484 = vmatprep.subr.mxu0 0.0
    %2485 = vmatpush1.xpose.msra.mxu0 0.0
    %2486 = vmatprep.subr.mxu0 0.0
    %2487 = vmatpush1.xpose.msra.mxu0 0.0
    %2488 = vmatprep.subr.mxu0 0.0
    %2489 = vmatpush1.xpose.msra.mxu0 0.0
    %2490 = vmatprep.subr.mxu0 0.0
    %2491 = vmatpush1.xpose.msra.mxu0 0.0
    %2492 = vmatprep.subr.mxu0 0.0
    %2493 = vmatpush1.xpose.msra.mxu0 0.0
    %2494 = vmatprep.subr.mxu0 0.0
    %2495 = vmatpush1.xpose.msra.mxu0 0.0
    %2496 = vmatprep.subr.mxu0 0.0
    %2497 = vmatpush1.xpose.msra.mxu0 0.0
    %2498 = vmatprep.subr.mxu0 0.0
    %2499 = vmatpush1.xpose.msra.mxu0 0.0
    %2500 = vmatprep.subr.mxu0 0.0
    %2501 = vmatpush1.xpose.msra.mxu0 0.0
    %2502 = vmatprep.subr.mxu0 0.0
    %2503 = vmatpush1.xpose.msra.mxu0 0.0
    %2504 = vmatprep.subr.mxu0 0.0
    %2505 = vmatpush1.xpose.msra.mxu0 0.0
    %2506 = vmatprep.subr.mxu0 0.0
    %2507 = vmatpush1.xpose.msra.mxu0 0.0
    %2508 = vmatprep.subr.mxu0 0.0
    %2509 = vmatpush1.xpose.msra.mxu0 0.0
    %2510 = vmatprep.subr.mxu0 0.0
    %2511 = vmatpush1.xpose.msra.mxu0 0.0
    %2512 = vmatprep.subr.mxu0 0.0
    %2513 = vmatpush1.xpose.msra.mxu0 0.0
    %2514 = vmatprep.subr.mxu0 0.0
    %2515 = vmatpush1.xpose.msra.mxu0 0.0
    %2516 = vmatprep.subr.mxu0 0.0
    %2517 = vmatpush1.xpose.msra.mxu0 0.0
    %2518 = vmatprep.mubr.f32.mxu0 0.0
    %2519 = vmatmul.mubr.f32.gmra.mrb[0].mxu0 %v2450
    %v2520 = vpop.f32.mrb[0].mxu0
    %v2521 = vadd.f32 %v50, %v2520
    %v2522 = vpop.f32.mrb[0].mxu0
    %2523 = vdwg.mxu0
    %v2524 = vsel %vm172, %v2521, -inf
    %2525 = vmax.xlane.f32.xlu0 %v2524
    %v2526 = vpop.xlane.xlu0 %2525
    %v2527 = vsub.f32 %v2521, %v2526
    %v2528 = vmul.f32 %v2527, 1.442695
    %v2529 = vpow.pop %v2528
    %v2530 = vsel %vm172, %v2529, 0.0
    %2531 = vadd.xlane.f32.xlu0 %v2530
    %v2532 = vpop.xlane.xlu0 %2531
    %v2533 = vrcp.pop %v2532
    %v2534 = vmul.f32 %v2529, %v2533
    %2535 = vrot.lane.b32.xlu0 %v2439, 64
    %v2536 = vpop.permute.xlu0 %2535
    %v2539 = vsel %vm172, %v2534, 0
    %2541 = vmatprep.subr.mxu0 0.0
    %2542 = vmatpush1.msra.mxu0 %v2536
    %2543 = vmatprep.subr.mxu0 0.0
    %2544 = vmatpush1.msra.mxu0 0.0
    %2545 = vmatprep.subr.mxu0 0.0
    %2546 = vmatpush1.msra.mxu0 0.0
    %2547 = vmatprep.subr.mxu0 0.0
    %2548 = vmatpush1.msra.mxu0 0.0
    %2549 = vmatprep.subr.mxu0 0.0
    %2550 = vmatpush1.msra.mxu0 0.0
    %2551 = vmatprep.subr.mxu0 0.0
    %2552 = vmatpush1.msra.mxu0 0.0
    %2553 = vmatprep.subr.mxu0 0.0
    %2554 = vmatpush1.msra.mxu0 0.0
    %2555 = vmatprep.subr.mxu0 0.0
    %2556 = vmatpush1.msra.mxu0 0.0
    %2557 = vmatprep.subr.mxu0 0.0
    %2558 = vmatpush1.msra.mxu0 0.0
    %2559 = vmatprep.subr.mxu0 0.0
    %2560 = vmatpush1.msra.mxu0 0.0
    %2561 = vmatprep.subr.mxu0 0.0
    %2562 = vmatpush1.msra.mxu0 0.0
    %2563 = vmatprep.subr.mxu0 0.0
    %2564 = vmatpush1.msra.mxu0 0.0
    %2565 = vmatprep.subr.mxu0 0.0
    %2566 = vmatpush1.msra.mxu0 0.0
    %2567 = vmatprep.subr.mxu0 0.0
    %2568 = vmatpush1.msra.mxu0 0.0
    %2569 = vmatprep.subr.mxu0 0.0
    %2570 = vmatpush1.msra.mxu0 0.0
    %2571 = vmatprep.subr.mxu0 0.0
    %2572 = vmatpush1.msra.mxu0 0.0
    %2573 = vmatprep.subr.mxu0 0.0
    %2574 = vmatpush1.msra.mxu0 0.0
    %2575 = vmatprep.subr.mxu0 0.0
    %2576 = vmatpush1.msra.mxu0 0.0
    %2577 = vmatprep.subr.mxu0 0.0
    %2578 = vmatpush1.msra.mxu0 0.0
    %2579 = vmatprep.subr.mxu0 0.0
    %2580 = vmatpush1.msra.mxu0 0.0
    %2581 = vmatprep.subr.mxu0 0.0
    %2582 = vmatpush1.msra.mxu0 0.0
    %2583 = vmatprep.subr.mxu0 0.0
    %2584 = vmatpush1.msra.mxu0 0.0
    %2585 = vmatprep.subr.mxu0 0.0
    %2586 = vmatpush1.msra.mxu0 0.0
    %2587 = vmatprep.subr.mxu0 0.0
    %2588 = vmatpush1.msra.mxu0 0.0
    %2589 = vmatprep.subr.mxu0 0.0
    %2590 = vmatpush1.msra.mxu0 0.0
    %2591 = vmatprep.subr.mxu0 0.0
    %2592 = vmatpush1.msra.mxu0 0.0
    %2593 = vmatprep.subr.mxu0 0.0
    %2594 = vmatpush1.msra.mxu0 0.0
    %2595 = vmatprep.subr.mxu0 0.0
    %2596 = vmatpush1.msra.mxu0 0.0
    %2597 = vmatprep.subr.mxu0 0.0
    %2598 = vmatpush1.msra.mxu0 0.0
    %2599 = vmatprep.subr.mxu0 0.0
    %2600 = vmatpush1.msra.mxu0 0.0
    %2601 = vmatprep.subr.mxu0 0.0
    %2602 = vmatpush1.msra.mxu0 0.0
    %2603 = vmatprep.subr.mxu0 0.0
    %2604 = vmatpush1.msra.mxu0 0.0
    %2605 = vmatprep.mubr.f32.mxu0 0.0
    %2606 = vmatmul.mubr.f32.gmra.mrb[0].mxu0 %v2539
    %v2607 = vpop.f32.mrb[0].mxu0
    %v2608 = vadd.f32 0.0, %v2607
    %v2609 = vpop.f32.mrb[0].mxu0
    %2610 = vdwg.mxu0
    %2611 = vrot.lane.b32.xlu0 %v2439, 120
    %v2612 = vpop.permute.xlu0 %2611
    %2613 = vrot.lane.b32.xlu0 %v2439, 88
    %v2614 = vpop.permute.xlu0 %2613
    %v2615 = vsel %vm172, %v2612, 0
    %v2617 = vsel %vm172, %v2614, 0
    %2619 = vmatprep.subr.mxu0 0.0
    %2620 = vmatpush1.xpose.msra.mxu0 %v2617
    %2621 = vmatprep.subr.mxu0 0.0
    %2622 = vmatpush1.xpose.msra.mxu0 0.0
    %2623 = vmatprep.subr.mxu0 0.0
    %2624 = vmatpush1.xpose.msra.mxu0 0.0
    %2625 = vmatprep.subr.mxu0 0.0
    %2626 = vmatpush1.xpose.msra.mxu0 0.0
    %2627 = vmatprep.subr.mxu0 0.0
    %2628 = vmatpush1.xpose.msra.mxu0 0.0
    %2629 = vmatprep.subr.mxu0 0.0
    %2630 = vmatpush1.xpose.msra.mxu0 0.0
    %2631 = vmatprep.subr.mxu0 0.0
    %2632 = vmatpush1.xpose.msra.mxu0 0.0
    %2633 = vmatprep.subr.mxu0 0.0
    %2634 = vmatpush1.xpose.msra.mxu0 0.0
    %2635 = vmatprep.subr.mxu0 0.0
    %2636 = vmatpush1.xpose.msra.mxu0 0.0
    %2637 = vmatprep.subr.mxu0 0.0
    %2638 = vmatpush1.xpose.msra.mxu0 0.0
    %2639 = vmatprep.subr.mxu0 0.0
    %2640 = vmatpush1.xpose.msra.mxu0 0.0
    %2641 = vmatprep.subr.mxu0 0.0
    %2642 = vmatpush1.xpose.msra.mxu0 0.0
    %2643 = vmatprep.subr.mxu0 0.0
    %2644 = vmatpush1.xpose.msra.mxu0 0.0
    %2645 = vmatprep.subr.mxu0 0.0
    %2646 = vmatpush1.xpose.msra.mxu0 0.0
    %2647 = vmatprep.subr.mxu0 0.0
    %2648 = vmatpush1.xpose.msra.mxu0 0.0
    %2649 = vmatprep.subr.mxu0 0.0
    %2650 = vmatpush1.xpose.msra.mxu0 0.0
    %2651 = vmatprep.subr.mxu0 0.0
    %2652 = vmatpush1.xpose.msra.mxu0 0.0
    %2653 = vmatprep.subr.mxu0 0.0
    %2654 = vmatpush1.xpose.msra.mxu0 0.0
    %2655 = vmatprep.subr.mxu0 0.0
    %2656 = vmatpush1.xpose.msra.mxu0 0.0
    %2657 = vmatprep.subr.mxu0 0.0
    %2658 = vmatpush1.xpose.msra.mxu0 0.0
    %2659 = vmatprep.subr.mxu0 0.0
    %2660 = vmatpush1.xpose.msra.mxu0 0.0
    %2661 = vmatprep.subr.mxu0 0.0
    %2662 = vmatpush1.xpose.msra.mxu0 0.0
    %2663 = vmatprep.subr.mxu0 0.0
    %2664 = vmatpush1.xpose.msra.mxu0 0.0
    %2665 = vmatprep.subr.mxu0 0.0
    %2666 = vmatpush1.xpose.msra.mxu0 0.0
    %2667 = vmatprep.subr.mxu0 0.0
    %2668 = vmatpush1.xpose.msra.mxu0 0.0
    %2669 = vmatprep.subr.mxu0 0.0
    %2670 = vmatpush1.xpose.msra.mxu0 0.0
    %2671 = vmatprep.subr.mxu0 0.0
    %2672 = vmatpush1.xpose.msra.mxu0 0.0
    %2673 = vmatprep.subr.mxu0 0.0
    %2674 = vmatpush1.xpose.msra.mxu0 0.0
    %2675 = vmatprep.subr.mxu0 0.0
    %2676 = vmatpush1.xpose.msra.mxu0 0.0
    %2677 = vmatprep.subr.mxu0 0.0
    %2678 = vmatpush1.xpose.msra.mxu0 0.0
    %2679 = vmatprep.subr.mxu0 0.0
    %2680 = vmatpush1.xpose.msra.mxu0 0.0
    %2681 = vmatprep.subr.mxu0 0.0
    %2682 = vmatpush1.xpose.msra.mxu0 0.0
    %2683 = vmatprep.mubr.f32.mxu0 0.0
    %2684 = vmatmul.mubr.f32.gmra.mrb[0].mxu0 %v2615
    %v2685 = vpop.f32.mrb[0].mxu0
    %v2686 = vadd.f32 %v50, %v2685
    %v2687 = vpop.f32.mrb[0].mxu0
    %2688 = vdwg.mxu0
    %v2689 = vsel %vm172, %v2686, -inf
    %2690 = vmax.xlane.f32.xlu0 %v2689
    %v2691 = vpop.xlane.xlu0 %2690
    %v2692 = vsub.f32 %v2686, %v2691
    %v2693 = vmul.f32 %v2692, 1.442695
    %v2694 = vpow.pop %v2693
    %v2695 = vsel %vm172, %v2694, 0.0
    %2696 = vadd.xlane.f32.xlu0 %v2695
    %v2697 = vpop.xlane.xlu0 %2696
    %v2698 = vrcp.pop %v2697
    %v2699 = vmul.f32 %v2694, %v2698
    %2700 = vrot.lane.b32.xlu0 %v2439, 56
    %v2701 = vpop.permute.xlu0 %2700
    %v2704 = vsel %vm172, %v2699, 0
    %2706 = vmatprep.subr.mxu0 0.0
    %2707 = vmatpush1.msra.mxu0 %v2701
    %2708 = vmatprep.subr.mxu0 0.0
    %2709 = vmatpush1.msra.mxu0 0.0
    %2710 = vmatprep.subr.mxu0 0.0
    %2711 = vmatpush1.msra.mxu0 0.0
    %2712 = vmatprep.subr.mxu0 0.0
    %2713 = vmatpush1.msra.mxu0 0.0
    %2714 = vmatprep.subr.mxu0 0.0
    %2715 = vmatpush1.msra.mxu0 0.0
    %2716 = vmatprep.subr.mxu0 0.0
    %2717 = vmatpush1.msra.mxu0 0.0
    %2718 = vmatprep.subr.mxu0 0.0
    %2719 = vmatpush1.msra.mxu0 0.0
    %2720 = vmatprep.subr.mxu0 0.0
    %2721 = vmatpush1.msra.mxu0 0.0
    %2722 = vmatprep.subr.mxu0 0.0
    %2723 = vmatpush1.msra.mxu0 0.0
    %2724 = vmatprep.subr.mxu0 0.0
    %2725 = vmatpush1.msra.mxu0 0.0
    %2726 = vmatprep.subr.mxu0 0.0
    %2727 = vmatpush1.msra.mxu0 0.0
    %2728 = vmatprep.subr.mxu0 0.0
    %2729 = vmatpush1.msra.mxu0 0.0
    %2730 = vmatprep.subr.mxu0 0.0
    %2731 = vmatpush1.msra.mxu0 0.0
    %2732 = vmatprep.subr.mxu0 0.0
    %2733 = vmatpush1.msra.mxu0 0.0
    %2734 = vmatprep.subr.mxu0 0.0
    %2735 = vmatpush1.msra.mxu0 0.0
    %2736 = vmatprep.subr.mxu0 0.0
    %2737 = vmatpush1.msra.mxu0 0.0
    %2738 = vmatprep.subr.mxu0 0.0
    %2739 = vmatpush1.msra.mxu0 0.0
    %2740 = vmatprep.subr.mxu0 0.0
    %2741 = vmatpush1.msra.mxu0 0.0
    %2742 = vmatprep.subr.mxu0 0.0
    %2743 = vmatpush1.msra.mxu0 0.0
    %2744 = vmatprep.subr.mxu0 0.0
    %2745 = vmatpush1.msra.mxu0 0.0
    %2746 = vmatprep.subr.mxu0 0.0
    %2747 = vmatpush1.msra.mxu0 0.0
    %2748 = vmatprep.subr.mxu0 0.0
    %2749 = vmatpush1.msra.mxu0 0.0
    %2750 = vmatprep.subr.mxu0 0.0
    %2751 = vmatpush1.msra.mxu0 0.0
    %2752 = vmatprep.subr.mxu0 0.0
    %2753 = vmatpush1.msra.mxu0 0.0
    %2754 = vmatprep.subr.mxu0 0.0
    %2755 = vmatpush1.msra.mxu0 0.0
    %2756 = vmatprep.subr.mxu0 0.0
    %2757 = vmatpush1.msra.mxu0 0.0
    %2758 = vmatprep.subr.mxu0 0.0
    %2759 = vmatpush1.msra.mxu0 0.0
    %2760 = vmatprep.subr.mxu0 0.0
    %2761 = vmatpush1.msra.mxu0 0.0
    %2762 = vmatprep.subr.mxu0 0.0
    %2763 = vmatpush1.msra.mxu0 0.0
    %2764 = vmatprep.subr.mxu0 0.0
    %2765 = vmatpush1.msra.mxu0 0.0
    %2766 = vmatprep.subr.mxu0 0.0
    %2767 = vmatpush1.msra.mxu0 0.0
    %2768 = vmatprep.subr.mxu0 0.0
    %2769 = vmatpush1.msra.mxu0 0.0
    %2770 = vmatprep.mubr.f32.mxu0 0.0
    %2771 = vmatmul.mubr.f32.gmra.mrb[0].mxu0 %v2704
    %v2772 = vpop.f32.mrb[0].mxu0
    %v2773 = vadd.f32 0.0, %v2772
    %v2774 = vpop.f32.mrb[0].mxu0
    %2775 = vdwg.mxu0
    %v2777 = vsel %vm172, %v2773, 0
    %2779 = vmatprep.subr.mxu0 0.0
    %2780 = vmatpush1.msra.mxu0 %v2343
    %2781 = vmatprep.subr.mxu0 0.0
    %2782 = vmatpush1.msra.mxu0 0.0
    %2783 = vmatprep.subr.mxu0 0.0
    %2784 = vmatpush1.msra.mxu0 0.0
    %2785 = vmatprep.subr.mxu0 0.0
    %2786 = vmatpush1.msra.mxu0 0.0
    %2787 = vmatprep.subr.mxu0 0.0
    %2788 = vmatpush1.msra.mxu0 0.0
    %2789 = vmatprep.subr.mxu0 0.0
    %2790 = vmatpush1.msra.mxu0 0.0
    %2791 = vmatprep.subr.mxu0 0.0
    %2792 = vmatpush1.msra.mxu0 0.0
    %2793 = vmatprep.subr.mxu0 0.0
    %2794 = vmatpush1.msra.mxu0 0.0
    %2795 = vmatprep.subr.mxu0 0.0
    %2796 = vmatpush1.msra.mxu0 0.0
    %2797 = vmatprep.subr.mxu0 0.0
    %2798 = vmatpush1.msra.mxu0 0.0
    %2799 = vmatprep.subr.mxu0 0.0
    %2800 = vmatpush1.msra.mxu0 0.0
    %2801 = vmatprep.subr.mxu0 0.0
    %2802 = vmatpush1.msra.mxu0 0.0
    %2803 = vmatprep.subr.mxu0 0.0
    %2804 = vmatpush1.msra.mxu0 0.0
    %2805 = vmatprep.subr.mxu0 0.0
    %2806 = vmatpush1.msra.mxu0 0.0
    %2807 = vmatprep.subr.mxu0 0.0
    %2808 = vmatpush1.msra.mxu0 0.0
    %2809 = vmatprep.subr.mxu0 0.0
    %2810 = vmatpush1.msra.mxu0 0.0
    %2811 = vmatprep.subr.mxu0 0.0
    %2812 = vmatpush1.msra.mxu0 0.0
    %2813 = vmatprep.subr.mxu0 0.0
    %2814 = vmatpush1.msra.mxu0 0.0
    %2815 = vmatprep.subr.mxu0 0.0
    %2816 = vmatpush1.msra.mxu0 0.0
    %2817 = vmatprep.subr.mxu0 0.0
    %2818 = vmatpush1.msra.mxu0 0.0
    %2819 = vmatprep.subr.mxu0 0.0
    %2820 = vmatpush1.msra.mxu0 0.0
    %2821 = vmatprep.subr.mxu0 0.0
    %2822 = vmatpush1.msra.mxu0 0.0
    %2823 = vmatprep.subr.mxu0 0.0
    %2824 = vmatpush1.msra.mxu0 0.0
    %2825 = vmatprep.subr.mxu0 0.0
    %2826 = vmatpush1.msra.mxu0 0.0
    %2827 = vmatprep.subr.mxu0 0.0
    %2828 = vmatpush1.msra.mxu0 0.0
    %2829 = vmatprep.subr.mxu0 0.0
    %2830 = vmatpush1.msra.mxu0 0.0
    %2831 = vmatprep.subr.mxu0 0.0
    %2832 = vmatpush1.msra.mxu0 0.0
    %2833 = vmatprep.subr.mxu0 0.0
    %2834 = vmatpush1.msra.mxu0 0.0
    %2835 = vmatprep.subr.mxu0 0.0
    %2836 = vmatpush1.msra.mxu0 0.0
    %2837 = vmatprep.subr.mxu0 0.0
    %2838 = vmatpush1.msra.mxu0 0.0
    %2839 = vmatprep.subr.mxu0 0.0
    %2840 = vmatpush1.msra.mxu0 0.0
    %2841 = vmatprep.subr.mxu0 0.0
    %2842 = vmatpush1.msra.mxu0 0.0
    %2843 = vmatprep.mubr.f32.mxu0 0.0
    %2844 = vmatmul.mubr.f32.gmra.mrb[0].mxu0 %v2777
    %v2845 = vpop.f32.mrb[0].mxu0
    %v2846 = vadd.f32 0.0, %v2845
    %v2847 = vpop.f32.mrb[0].mxu0
    %2848 = vdwg.mxu0
    %v2850 = vsel %vm172, %v2608, 0
    %2852 = vmatprep.subr.mxu0 0.0
    %2853 = vmatpush1.msra.mxu0 %v2342
    %2854 = vmatprep.subr.mxu0 0.0
    %2855 = vmatpush1.msra.mxu0 0.0
    %2856 = vmatprep.subr.mxu0 0.0
    %2857 = vmatpush1.msra.mxu0 0.0
    %2858 = vmatprep.subr.mxu0 0.0
    %2859 = vmatpush1.msra.mxu0 0.0
    %2860 = vmatprep.subr.mxu0 0.0
    %2861 = vmatpush1.msra.mxu0 0.0
    %2862 = vmatprep.subr.mxu0 0.0
    %2863 = vmatpush1.msra.mxu0 0.0
    %2864 = vmatprep.subr.mxu0 0.0
    %2865 = vmatpush1.msra.mxu0 0.0
    %2866 = vmatprep.subr.mxu0 0.0
    %2867 = vmatpush1.msra.mxu0 0.0
    %2868 = vmatprep.subr.mxu0 0.0
    %2869 = vmatpush1.msra.mxu0 0.0
    %2870 = vmatprep.subr.mxu0 0.0
    %2871 = vmatpush1.msra.mxu0 0.0
    %2872 = vmatprep.subr.mxu0 0.0
    %2873 = vmatpush1.msra.mxu0 0.0
    %2874 = vmatprep.subr.mxu0 0.0
    %2875 = vmatpush1.msra.mxu0 0.0
    %2876 = vmatprep.subr.mxu0 0.0
    %2877 = vmatpush1.msra.mxu0 0.0
    %2878 = vmatprep.subr.mxu0 0.0
    %2879 = vmatpush1.msra.mxu0 0.0
    %2880 = vmatprep.subr.mxu0 0.0
    %2881 = vmatpush1.msra.mxu0 0.0
    %2882 = vmatprep.subr.mxu0 0.0
    %2883 = vmatpush1.msra.mxu0 0.0
    %2884 = vmatprep.subr.mxu0 0.0
    %2885 = vmatpush1.msra.mxu0 0.0
    %2886 = vmatprep.subr.mxu0 0.0
    %2887 = vmatpush1.msra.mxu0 0.0
    %2888 = vmatprep.subr.mxu0 0.0
    %2889 = vmatpush1.msra.mxu0 0.0
    %2890 = vmatprep.subr.mxu0 0.0
    %2891 = vmatpush1.msra.mxu0 0.0
    %2892 = vmatprep.subr.mxu0 0.0
    %2893 = vmatpush1.msra.mxu0 0.0
    %2894 = vmatprep.subr.mxu0 0.0
    %2895 = vmatpush1.msra.mxu0 0.0
    %2896 = vmatprep.subr.mxu0 0.0
    %2897 = vmatpush1.msra.mxu0 0.0
    %2898 = vmatprep.subr.mxu0 0.0
    %2899 = vmatpush1.msra.mxu0 0.0
    %2900 = vmatprep.subr.mxu0 0.0
    %2901 = vmatpush1.msra.mxu0 0.0
    %2902 = vmatprep.subr.mxu0 0.0
    %2903 = vmatpush1.msra.mxu0 0.0
    %2904 = vmatprep.subr.mxu0 0.0
    %2905 = vmatpush1.msra.mxu0 0.0
    %2906 = vmatprep.subr.mxu0 0.0
    %2907 = vmatpush1.msra.mxu0 0.0
    %2908 = vmatprep.subr.mxu0 0.0
    %2909 = vmatpush1.msra.mxu0 0.0
    %2910 = vmatprep.subr.mxu0 0.0
    %2911 = vmatpush1.msra.mxu0 0.0
    %2912 = vmatprep.subr.mxu0 0.0
    %2913 = vmatpush1.msra.mxu0 0.0
    %2914 = vmatprep.subr.mxu0 0.0
    %2915 = vmatpush1.msra.mxu0 0.0
    %2916 = vmatprep.mubr.f32.mxu0 0.0
    %2917 = vmatmul.mubr.f32.gmra.mrb[0].mxu0 %v2850
    %v2918 = vpop.f32.mrb[0].mxu0
    %v2919 = vadd.f32 %v2846, %v2918
    %v2920 = vpop.f32.mrb[0].mxu0
    %2921 = vdwg.mxu0
    %2922 = vrot.lane.b32.xlu0 %v2439, 112
    %v2923 = vpop.permute.xlu0 %2922
    %2924 = vrot.lane.b32.xlu0 %v2439, 80
    %v2925 = vpop.permute.xlu0 %2924
    %v2926 = vsel %vm172, %v2923, 0
    %v2928 = vsel %vm172, %v2925, 0
    %2930 = vmatprep.subr.mxu0 0.0
    %2931 = vmatpush1.xpose.msra.mxu0 %v2928
    %2932 = vmatprep.subr.mxu0 0.0
    %2933 = vmatpush1.xpose.msra.mxu0 0.0
    %2934 = vmatprep.subr.mxu0 0.0
    %2935 = vmatpush1.xpose.msra.mxu0 0.0
    %2936 = vmatprep.subr.mxu0 0.0
    %2937 = vmatpush1.xpose.msra.mxu0 0.0
    %2938 = vmatprep.subr.mxu0 0.0
    %2939 = vmatpush1.xpose.msra.mxu0 0.0
    %2940 = vmatprep.subr.mxu0 0.0
    %2941 = vmatpush1.xpose.msra.mxu0 0.0
    %2942 = vmatprep.subr.mxu0 0.0
    %2943 = vmatpush1.xpose.msra.mxu0 0.0
    %2944 = vmatprep.subr.mxu0 0.0
    %2945 = vmatpush1.xpose.msra.mxu0 0.0
    %2946 = vmatprep.subr.mxu0 0.0
    %2947 = vmatpush1.xpose.msra.mxu0 0.0
    %2948 = vmatprep.subr.mxu0 0.0
    %2949 = vmatpush1.xpose.msra.mxu0 0.0
    %2950 = vmatprep.subr.mxu0 0.0
    %2951 = vmatpush1.xpose.msra.mxu0 0.0
    %2952 = vmatprep.subr.mxu0 0.0
    %2953 = vmatpush1.xpose.msra.mxu0 0.0
    %2954 = vmatprep.subr.mxu0 0.0
    %2955 = vmatpush1.xpose.msra.mxu0 0.0
    %2956 = vmatprep.subr.mxu0 0.0
    %2957 = vmatpush1.xpose.msra.mxu0 0.0
    %2958 = vmatprep.subr.mxu0 0.0
    %2959 = vmatpush1.xpose.msra.mxu0 0.0
    %2960 = vmatprep.subr.mxu0 0.0
    %2961 = vmatpush1.xpose.msra.mxu0 0.0
    %2962 = vmatprep.subr.mxu0 0.0
    %2963 = vmatpush1.xpose.msra.mxu0 0.0
    %2964 = vmatprep.subr.mxu0 0.0
    %2965 = vmatpush1.xpose.msra.mxu0 0.0
    %2966 = vmatprep.subr.mxu0 0.0
    %2967 = vmatpush1.xpose.msra.mxu0 0.0
    %2968 = vmatprep.subr.mxu0 0.0
    %2969 = vmatpush1.xpose.msra.mxu0 0.0
    %2970 = vmatprep.subr.mxu0 0.0
    %2971 = vmatpush1.xpose.msra.mxu0 0.0
    %2972 = vmatprep.subr.mxu0 0.0
    %2973 = vmatpush1.xpose.msra.mxu0 0.0
    %2974 = vmatprep.subr.mxu0 0.0
    %2975 = vmatpush1.xpose.msra.mxu0 0.0
    %2976 = vmatprep.subr.mxu0 0.0
    %2977 = vmatpush1.xpose.msra.mxu0 0.0
    %2978 = vmatprep.subr.mxu0 0.0
    %2979 = vmatpush1.xpose.msra.mxu0 0.0
    %2980 = vmatprep.subr.mxu0 0.0
    %2981 = vmatpush1.xpose.msra.mxu0 0.0
    %2982 = vmatprep.subr.mxu0 0.0
    %2983 = vmatpush1.xpose.msra.mxu0 0.0
    %2984 = vmatprep.subr.mxu0 0.0
    %2985 = vmatpush1.xpose.msra.mxu0 0.0
    %2986 = vmatprep.subr.mxu0 0.0
    %2987 = vmatpush1.xpose.msra.mxu0 0.0
    %2988 = vmatprep.subr.mxu0 0.0
    %2989 = vmatpush1.xpose.msra.mxu0 0.0
    %2990 = vmatprep.subr.mxu0 0.0
    %2991 = vmatpush1.xpose.msra.mxu0 0.0
    %2992 = vmatprep.subr.mxu0 0.0
    %2993 = vmatpush1.xpose.msra.mxu0 0.0
    %2994 = vmatprep.mubr.f32.mxu0 0.0
    %2995 = vmatmul.mubr.f32.gmra.mrb[0].mxu0 %v2926
    %v2996 = vpop.f32.mrb[0].mxu0
    %v2997 = vadd.f32 %v50, %v2996
    %v2998 = vpop.f32.mrb[0].mxu0
    %2999 = vdwg.mxu0
    %v3000 = vsel %vm172, %v2997, -inf
    %3001 = vmax.xlane.f32.xlu0 %v3000
    %v3002 = vpop.xlane.xlu0 %3001
    %v3003 = vsub.f32 %v2997, %v3002
    %v3004 = vmul.f32 %v3003, 1.442695
    %v3005 = vpow.pop %v3004
    %v3006 = vsel %vm172, %v3005, 0.0
    %3007 = vadd.xlane.f32.xlu0 %v3006
    %v3008 = vpop.xlane.xlu0 %3007
    %v3009 = vrcp.pop %v3008
    %v3010 = vmul.f32 %v3005, %v3009
    %3011 = vrot.lane.b32.xlu0 %v2439, 48
    %v3012 = vpop.permute.xlu0 %3011
    %v3015 = vsel %vm172, %v3010, 0
    %3017 = vmatprep.subr.mxu0 0.0
    %3018 = vmatpush1.msra.mxu0 %v3012
    %3019 = vmatprep.subr.mxu0 0.0
    %3020 = vmatpush1.msra.mxu0 0.0
    %3021 = vmatprep.subr.mxu0 0.0
    %3022 = vmatpush1.msra.mxu0 0.0
    %3023 = vmatprep.subr.mxu0 0.0
    %3024 = vmatpush1.msra.mxu0 0.0
    %3025 = vmatprep.subr.mxu0 0.0
    %3026 = vmatpush1.msra.mxu0 0.0
    %3027 = vmatprep.subr.mxu0 0.0
    %3028 = vmatpush1.msra.mxu0 0.0
    %3029 = vmatprep.subr.mxu0 0.0
    %3030 = vmatpush1.msra.mxu0 0.0
    %3031 = vmatprep.subr.mxu0 0.0
    %3032 = vmatpush1.msra.mxu0 0.0
    %3033 = vmatprep.subr.mxu0 0.0
    %3034 = vmatpush1.msra.mxu0 0.0
    %3035 = vmatprep.subr.mxu0 0.0
    %3036 = vmatpush1.msra.mxu0 0.0
    %3037 = vmatprep.subr.mxu0 0.0
    %3038 = vmatpush1.msra.mxu0 0.0
    %3039 = vmatprep.subr.mxu0 0.0
    %3040 = vmatpush1.msra.mxu0 0.0
    %3041 = vmatprep.subr.mxu0 0.0
    %3042 = vmatpush1.msra.mxu0 0.0
    %3043 = vmatprep.subr.mxu0 0.0
    %3044 = vmatpush1.msra.mxu0 0.0
    %3045 = vmatprep.subr.mxu0 0.0
    %3046 = vmatpush1.msra.mxu0 0.0
    %3047 = vmatprep.subr.mxu0 0.0
    %3048 = vmatpush1.msra.mxu0 0.0
    %3049 = vmatprep.subr.mxu0 0.0
    %3050 = vmatpush1.msra.mxu0 0.0
    %3051 = vmatprep.subr.mxu0 0.0
    %3052 = vmatpush1.msra.mxu0 0.0
    %3053 = vmatprep.subr.mxu0 0.0
    %3054 = vmatpush1.msra.mxu0 0.0
    %3055 = vmatprep.subr.mxu0 0.0
    %3056 = vmatpush1.msra.mxu0 0.0
    %3057 = vmatprep.subr.mxu0 0.0
    %3058 = vmatpush1.msra.mxu0 0.0
    %3059 = vmatprep.subr.mxu0 0.0
    %3060 = vmatpush1.msra.mxu0 0.0
    %3061 = vmatprep.subr.mxu0 0.0
    %3062 = vmatpush1.msra.mxu0 0.0
    %3063 = vmatprep.subr.mxu0 0.0
    %3064 = vmatpush1.msra.mxu0 0.0
    %3065 = vmatprep.subr.mxu0 0.0
    %3066 = vmatpush1.msra.mxu0 0.0
    %3067 = vmatprep.subr.mxu0 0.0
    %3068 = vmatpush1.msra.mxu0 0.0
    %3069 = vmatprep.subr.mxu0 0.0
    %3070 = vmatpush1.msra.mxu0 0.0
    %3071 = vmatprep.subr.mxu0 0.0
    %3072 = vmatpush1.msra.mxu0 0.0
    %3073 = vmatprep.subr.mxu0 0.0
    %3074 = vmatpush1.msra.mxu0 0.0
    %3075 = vmatprep.subr.mxu0 0.0
    %3076 = vmatpush1.msra.mxu0 0.0
    %3077 = vmatprep.subr.mxu0 0.0
    %3078 = vmatpush1.msra.mxu0 0.0
    %3079 = vmatprep.subr.mxu0 0.0
    %3080 = vmatpush1.msra.mxu0 0.0
    %3081 = vmatprep.mubr.f32.mxu0 0.0
    %3082 = vmatmul.mubr.f32.gmra.mrb[0].mxu0 %v3015
    %v3083 = vpop.f32.mrb[0].mxu0
    %v3084 = vadd.f32 0.0, %v3083
    %v3085 = vpop.f32.mrb[0].mxu0
    %3086 = vdwg.mxu0
    %v3088 = vsel %vm172, %v3084, 0
    %3090 = vmatprep.subr.mxu0 0.0
    %3091 = vmatpush1.msra.mxu0 %v2344
    %3092 = vmatprep.subr.mxu0 0.0
    %3093 = vmatpush1.msra.mxu0 0.0
    %3094 = vmatprep.subr.mxu0 0.0
    %3095 = vmatpush1.msra.mxu0 0.0
    %3096 = vmatprep.subr.mxu0 0.0
    %3097 = vmatpush1.msra.mxu0 0.0
    %3098 = vmatprep.subr.mxu0 0.0
    %3099 = vmatpush1.msra.mxu0 0.0
    %3100 = vmatprep.subr.mxu0 0.0
    %3101 = vmatpush1.msra.mxu0 0.0
    %3102 = vmatprep.subr.mxu0 0.0
    %3103 = vmatpush1.msra.mxu0 0.0
    %3104 = vmatprep.subr.mxu0 0.0
    %3105 = vmatpush1.msra.mxu0 0.0
    %3106 = vmatprep.subr.mxu0 0.0
    %3107 = vmatpush1.msra.mxu0 0.0
    %3108 = vmatprep.subr.mxu0 0.0
    %3109 = vmatpush1.msra.mxu0 0.0
    %3110 = vmatprep.subr.mxu0 0.0
    %3111 = vmatpush1.msra.mxu0 0.0
    %3112 = vmatprep.subr.mxu0 0.0
    %3113 = vmatpush1.msra.mxu0 0.0
    %3114 = vmatprep.subr.mxu0 0.0
    %3115 = vmatpush1.msra.mxu0 0.0
    %3116 = vmatprep.subr.mxu0 0.0
    %3117 = vmatpush1.msra.mxu0 0.0
    %3118 = vmatprep.subr.mxu0 0.0
    %3119 = vmatpush1.msra.mxu0 0.0
    %3120 = vmatprep.subr.mxu0 0.0
    %3121 = vmatpush1.msra.mxu0 0.0
    %3122 = vmatprep.subr.mxu0 0.0
    %3123 = vmatpush1.msra.mxu0 0.0
    %3124 = vmatprep.subr.mxu0 0.0
    %3125 = vmatpush1.msra.mxu0 0.0
    %3126 = vmatprep.subr.mxu0 0.0
    %3127 = vmatpush1.msra.mxu0 0.0
    %3128 = vmatprep.subr.mxu0 0.0
    %3129 = vmatpush1.msra.mxu0 0.0
    %3130 = vmatprep.subr.mxu0 0.0
    %3131 = vmatpush1.msra.mxu0 0.0
    %3132 = vmatprep.subr.mxu0 0.0
    %3133 = vmatpush1.msra.mxu0 0.0
    %3134 = vmatprep.subr.mxu0 0.0
    %3135 = vmatpush1.msra.mxu0 0.0
    %3136 = vmatprep.subr.mxu0 0.0
    %3137 = vmatpush1.msra.mxu0 0.0
    %3138 = vmatprep.subr.mxu0 0.0
    %3139 = vmatpush1.msra.mxu0 0.0
    %3140 = vmatprep.subr.mxu0 0.0
    %3141 = vmatpush1.msra.mxu0 0.0
    %3142 = vmatprep.subr.mxu0 0.0
    %3143 = vmatpush1.msra.mxu0 0.0
    %3144 = vmatprep.subr.mxu0 0.0
    %3145 = vmatpush1.msra.mxu0 0.0
    %3146 = vmatprep.subr.mxu0 0.0
    %3147 = vmatpush1.msra.mxu0 0.0
    %3148 = vmatprep.subr.mxu0 0.0
    %3149 = vmatpush1.msra.mxu0 0.0
    %3150 = vmatprep.subr.mxu0 0.0
    %3151 = vmatpush1.msra.mxu0 0.0
    %3152 = vmatprep.subr.mxu0 0.0
    %3153 = vmatpush1.msra.mxu0 0.0
    %3154 = vmatprep.mubr.f32.mxu0 0.0
    %3155 = vmatmul.mubr.f32.gmra.mrb[0].mxu0 %v3088
    %v3156 = vpop.f32.mrb[0].mxu0
    %v3157 = vadd.f32 0.0, %v3156
    %v3158 = vpop.f32.mrb[0].mxu0
    %3159 = vdwg.mxu0
    %v3160 = vadd.f32 %v2919, %v3157
    %3161 = vrot.lane.b32.xlu0 %v2439, 104
    %v3162 = vpop.permute.xlu0 %3161
    %3163 = vrot.lane.b32.xlu0 %v2439, 72
    %v3164 = vpop.permute.xlu0 %3163
    %v3165 = vsel %vm172, %v3162, 0
    %v3167 = vsel %vm172, %v3164, 0
    %3169 = vmatprep.subr.mxu0 0.0
    %3170 = vmatpush1.xpose.msra.mxu0 %v3167
    %3171 = vmatprep.subr.mxu0 0.0
    %3172 = vmatpush1.xpose.msra.mxu0 0.0
    %3173 = vmatprep.subr.mxu0 0.0
    %3174 = vmatpush1.xpose.msra.mxu0 0.0
    %3175 = vmatprep.subr.mxu0 0.0
    %3176 = vmatpush1.xpose.msra.mxu0 0.0
    %3177 = vmatprep.subr.mxu0 0.0
    %3178 = vmatpush1.xpose.msra.mxu0 0.0
    %3179 = vmatprep.subr.mxu0 0.0
    %3180 = vmatpush1.xpose.msra.mxu0 0.0
    %3181 = vmatprep.subr.mxu0 0.0
    %3182 = vmatpush1.xpose.msra.mxu0 0.0
    %3183 = vmatprep.subr.mxu0 0.0
    %3184 = vmatpush1.xpose.msra.mxu0 0.0
    %3185 = vmatprep.subr.mxu0 0.0
    %3186 = vmatpush1.xpose.msra.mxu0 0.0
    %3187 = vmatprep.subr.mxu0 0.0
    %3188 = vmatpush1.xpose.msra.mxu0 0.0
    %3189 = vmatprep.subr.mxu0 0.0
    %3190 = vmatpush1.xpose.msra.mxu0 0.0
    %3191 = vmatprep.subr.mxu0 0.0
    %3192 = vmatpush1.xpose.msra.mxu0 0.0
    %3193 = vmatprep.subr.mxu0 0.0
    %3194 = vmatpush1.xpose.msra.mxu0 0.0
    %3195 = vmatprep.subr.mxu0 0.0
    %3196 = vmatpush1.xpose.msra.mxu0 0.0
    %3197 = vmatprep.subr.mxu0 0.0
    %3198 = vmatpush1.xpose.msra.mxu0 0.0
    %3199 = vmatprep.subr.mxu0 0.0
    %3200 = vmatpush1.xpose.msra.mxu0 0.0
    %3201 = vmatprep.subr.mxu0 0.0
    %3202 = vmatpush1.xpose.msra.mxu0 0.0
    %3203 = vmatprep.subr.mxu0 0.0
    %3204 = vmatpush1.xpose.msra.mxu0 0.0
    %3205 = vmatprep.subr.mxu0 0.0
    %3206 = vmatpush1.xpose.msra.mxu0 0.0
    %3207 = vmatprep.subr.mxu0 0.0
    %3208 = vmatpush1.xpose.msra.mxu0 0.0
    %3209 = vmatprep.subr.mxu0 0.0
    %3210 = vmatpush1.xpose.msra.mxu0 0.0
    %3211 = vmatprep.subr.mxu0 0.0
    %3212 = vmatpush1.xpose.msra.mxu0 0.0
    %3213 = vmatprep.subr.mxu0 0.0
    %3214 = vmatpush1.xpose.msra.mxu0 0.0
    %3215 = vmatprep.subr.mxu0 0.0
    %3216 = vmatpush1.xpose.msra.mxu0 0.0
    %3217 = vmatprep.subr.mxu0 0.0
    %3218 = vmatpush1.xpose.msra.mxu0 0.0
    %3219 = vmatprep.subr.mxu0 0.0
    %3220 = vmatpush1.xpose.msra.mxu0 0.0
    %3221 = vmatprep.subr.mxu0 0.0
    %3222 = vmatpush1.xpose.msra.mxu0 0.0
    %3223 = vmatprep.subr.mxu0 0.0
    %3224 = vmatpush1.xpose.msra.mxu0 0.0
    %3225 = vmatprep.subr.mxu0 0.0
    %3226 = vmatpush1.xpose.msra.mxu0 0.0
    %3227 = vmatprep.subr.mxu0 0.0
    %3228 = vmatpush1.xpose.msra.mxu0 0.0
    %3229 = vmatprep.subr.mxu0 0.0
    %3230 = vmatpush1.xpose.msra.mxu0 0.0
    %3231 = vmatprep.subr.mxu0 0.0
    %3232 = vmatpush1.xpose.msra.mxu0 0.0
    %3233 = vmatprep.mubr.f32.mxu0 0.0
    %3234 = vmatmul.mubr.f32.gmra.mrb[0].mxu0 %v3165
    %v3235 = vpop.f32.mrb[0].mxu0
    %v3236 = vadd.f32 %v50, %v3235
    %v3237 = vpop.f32.mrb[0].mxu0
    %3238 = vdwg.mxu0
    %v3239 = vsel %vm172, %v3236, -inf
    %3240 = vmax.xlane.f32.xlu0 %v3239
    %v3241 = vpop.xlane.xlu0 %3240
    %v3242 = vsub.f32 %v3236, %v3241
    %v3243 = vmul.f32 %v3242, 1.442695
    %v3244 = vpow.pop %v3243
    %v3245 = vsel %vm172, %v3244, 0.0
    %3246 = vadd.xlane.f32.xlu0 %v3245
    %v3247 = vpop.xlane.xlu0 %3246
    %v3248 = vrcp.pop %v3247
    %v3249 = vmul.f32 %v3244, %v3248
    %3250 = vrot.lane.b32.xlu0 %v2439, 40
    %v3251 = vpop.permute.xlu0 %3250
    %v3254 = vsel %vm172, %v3249, 0
    %3256 = vmatprep.subr.mxu0 0.0
    %3257 = vmatpush1.msra.mxu0 %v3251
    %3258 = vmatprep.subr.mxu0 0.0
    %3259 = vmatpush1.msra.mxu0 0.0
    %3260 = vmatprep.subr.mxu0 0.0
    %3261 = vmatpush1.msra.mxu0 0.0
    %3262 = vmatprep.subr.mxu0 0.0
    %3263 = vmatpush1.msra.mxu0 0.0
    %3264 = vmatprep.subr.mxu0 0.0
    %3265 = vmatpush1.msra.mxu0 0.0
    %3266 = vmatprep.subr.mxu0 0.0
    %3267 = vmatpush1.msra.mxu0 0.0
    %3268 = vmatprep.subr.mxu0 0.0
    %3269 = vmatpush1.msra.mxu0 0.0
    %3270 = vmatprep.subr.mxu0 0.0
    %3271 = vmatpush1.msra.mxu0 0.0
    %3272 = vmatprep.subr.mxu0 0.0
    %3273 = vmatpush1.msra.mxu0 0.0
    %3274 = vmatprep.subr.mxu0 0.0
    %3275 = vmatpush1.msra.mxu0 0.0
    %3276 = vmatprep.subr.mxu0 0.0
    %3277 = vmatpush1.msra.mxu0 0.0
    %3278 = vmatprep.subr.mxu0 0.0
    %3279 = vmatpush1.msra.mxu0 0.0
    %3280 = vmatprep.subr.mxu0 0.0
    %3281 = vmatpush1.msra.mxu0 0.0
    %3282 = vmatprep.subr.mxu0 0.0
    %3283 = vmatpush1.msra.mxu0 0.0
    %3284 = vmatprep.subr.mxu0 0.0
    %3285 = vmatpush1.msra.mxu0 0.0
    %3286 = vmatprep.subr.mxu0 0.0
    %3287 = vmatpush1.msra.mxu0 0.0
    %3288 = vmatprep.subr.mxu0 0.0
    %3289 = vmatpush1.msra.mxu0 0.0
    %3290 = vmatprep.subr.mxu0 0.0
    %3291 = vmatpush1.msra.mxu0 0.0
    %3292 = vmatprep.subr.mxu0 0.0
    %3293 = vmatpush1.msra.mxu0 0.0
    %3294 = vmatprep.subr.mxu0 0.0
    %3295 = vmatpush1.msra.mxu0 0.0
    %3296 = vmatprep.subr.mxu0 0.0
    %3297 = vmatpush1.msra.mxu0 0.0
    %3298 = vmatprep.subr.mxu0 0.0
    %3299 = vmatpush1.msra.mxu0 0.0
    %3300 = vmatprep.subr.mxu0 0.0
    %3301 = vmatpush1.msra.mxu0 0.0
    %3302 = vmatprep.subr.mxu0 0.0
    %3303 = vmatpush1.msra.mxu0 0.0
    %3304 = vmatprep.subr.mxu0 0.0
    %3305 = vmatpush1.msra.mxu0 0.0
    %3306 = vmatprep.subr.mxu0 0.0
    %3307 = vmatpush1.msra.mxu0 0.0
    %3308 = vmatprep.subr.mxu0 0.0
    %3309 = vmatpush1.msra.mxu0 0.0
    %3310 = vmatprep.subr.mxu0 0.0
    %3311 = vmatpush1.msra.mxu0 0.0
    %3312 = vmatprep.subr.mxu0 0.0
    %3313 = vmatpush1.msra.mxu0 0.0
    %3314 = vmatprep.subr.mxu0 0.0
    %3315 = vmatpush1.msra.mxu0 0.0
    %3316 = vmatprep.subr.mxu0 0.0
    %3317 = vmatpush1.msra.mxu0 0.0
    %3318 = vmatprep.subr.mxu0 0.0
    %3319 = vmatpush1.msra.mxu0 0.0
    %3320 = vmatprep.mubr.f32.mxu0 0.0
    %3321 = vmatmul.mubr.f32.gmra.mrb[0].mxu0 %v3254
    %v3322 = vpop.f32.mrb[0].mxu0
    %v3323 = vadd.f32 0.0, %v3322
    %v3324 = vpop.f32.mrb[0].mxu0
    %3325 = vdwg.mxu0
    %v3327 = vsel %vm172, %v3323, 0
    %3329 = vmatprep.subr.mxu0 0.0
    %3330 = vmatpush1.msra.mxu0 %v2345
    %3331 = vmatprep.subr.mxu0 0.0
    %3332 = vmatpush1.msra.mxu0 0.0
    %3333 = vmatprep.subr.mxu0 0.0
    %3334 = vmatpush1.msra.mxu0 0.0
    %3335 = vmatprep.subr.mxu0 0.0
    %3336 = vmatpush1.msra.mxu0 0.0
    %3337 = vmatprep.subr.mxu0 0.0
    %3338 = vmatpush1.msra.mxu0 0.0
    %3339 = vmatprep.subr.mxu0 0.0
    %3340 = vmatpush1.msra.mxu0 0.0
    %3341 = vmatprep.subr.mxu0 0.0
    %3342 = vmatpush1.msra.mxu0 0.0
    %3343 = vmatprep.subr.mxu0 0.0
    %3344 = vmatpush1.msra.mxu0 0.0
    %3345 = vmatprep.subr.mxu0 0.0
    %3346 = vmatpush1.msra.mxu0 0.0
    %3347 = vmatprep.subr.mxu0 0.0
    %3348 = vmatpush1.msra.mxu0 0.0
    %3349 = vmatprep.subr.mxu0 0.0
    %3350 = vmatpush1.msra.mxu0 0.0
    %3351 = vmatprep.subr.mxu0 0.0
    %3352 = vmatpush1.msra.mxu0 0.0
    %3353 = vmatprep.subr.mxu0 0.0
    %3354 = vmatpush1.msra.mxu0 0.0
    %3355 = vmatprep.subr.mxu0 0.0
    %3356 = vmatpush1.msra.mxu0 0.0
    %3357 = vmatprep.subr.mxu0 0.0
    %3358 = vmatpush1.msra.mxu0 0.0
    %3359 = vmatprep.subr.mxu0 0.0
    %3360 = vmatpush1.msra.mxu0 0.0
    %3361 = vmatprep.subr.mxu0 0.0
    %3362 = vmatpush1.msra.mxu0 0.0
    %3363 = vmatprep.subr.mxu0 0.0
    %3364 = vmatpush1.msra.mxu0 0.0
    %3365 = vmatprep.subr.mxu0 0.0
    %3366 = vmatpush1.msra.mxu0 0.0
    %3367 = vmatprep.subr.mxu0 0.0
    %3368 = vmatpush1.msra.mxu0 0.0
    %3369 = vmatprep.subr.mxu0 0.0
    %3370 = vmatpush1.msra.mxu0 0.0
    %3371 = vmatprep.subr.mxu0 0.0
    %3372 = vmatpush1.msra.mxu0 0.0
    %3373 = vmatprep.subr.mxu0 0.0
    %3374 = vmatpush1.msra.mxu0 0.0
    %3375 = vmatprep.subr.mxu0 0.0
    %3376 = vmatpush1.msra.mxu0 0.0
    %3377 = vmatprep.subr.mxu0 0.0
    %3378 = vmatpush1.msra.mxu0 0.0
    %3379 = vmatprep.subr.mxu0 0.0
    %3380 = vmatpush1.msra.mxu0 0.0
    %3381 = vmatprep.subr.mxu0 0.0
    %3382 = vmatpush1.msra.mxu0 0.0
    %3383 = vmatprep.subr.mxu0 0.0
    %3384 = vmatpush1.msra.mxu0 0.0
    %3385 = vmatprep.subr.mxu0 0.0
    %3386 = vmatpush1.msra.mxu0 0.0
    %3387 = vmatprep.subr.mxu0 0.0
    %3388 = vmatpush1.msra.mxu0 0.0
    %3389 = vmatprep.subr.mxu0 0.0
    %3390 = vmatpush1.msra.mxu0 0.0
    %3391 = vmatprep.subr.mxu0 0.0
    %3392 = vmatpush1.msra.mxu0 0.0
    %3393 = vmatprep.mubr.f32.mxu0 0.0
    %3394 = vmatmul.mubr.f32.gmra.mrb[0].mxu0 %v3327
    %v3395 = vpop.f32.mrb[0].mxu0
    %v3396 = vadd.f32 0.0, %v3395
    %v3397 = vpop.f32.mrb[0].mxu0
    %3398 = vdwg.mxu0
    %v3399 = vadd.f32 %v3160, %v3396
    %3401 = vrot.lane.b32.xlu0 %v2444, 96
    %v3402 = vpop.permute.xlu0 %3401
    %v3403 = vsel %vm172, %v2444, 0
    %v3405 = vsel %vm172, %v3402, 0
    %3407 = vmatprep.subr.mxu0 0.0
    %3408 = vmatpush1.xpose.msra.mxu0 %v3405
    %3409 = vmatprep.subr.mxu0 0.0
    %3410 = vmatpush1.xpose.msra.mxu0 0.0
    %3411 = vmatprep.subr.mxu0 0.0
    %3412 = vmatpush1.xpose.msra.mxu0 0.0
    %3413 = vmatprep.subr.mxu0 0.0
    %3414 = vmatpush1.xpose.msra.mxu0 0.0
    %3415 = vmatprep.subr.mxu0 0.0
    %3416 = vmatpush1.xpose.msra.mxu0 0.0
    %3417 = vmatprep.subr.mxu0 0.0
    %3418 = vmatpush1.xpose.msra.mxu0 0.0
    %3419 = vmatprep.subr.mxu0 0.0
    %3420 = vmatpush1.xpose.msra.mxu0 0.0
    %3421 = vmatprep.subr.mxu0 0.0
    %3422 = vmatpush1.xpose.msra.mxu0 0.0
    %3423 = vmatprep.subr.mxu0 0.0
    %3424 = vmatpush1.xpose.msra.mxu0 0.0
    %3425 = vmatprep.subr.mxu0 0.0
    %3426 = vmatpush1.xpose.msra.mxu0 0.0
    %3427 = vmatprep.subr.mxu0 0.0
    %3428 = vmatpush1.xpose.msra.mxu0 0.0
    %3429 = vmatprep.subr.mxu0 0.0
    %3430 = vmatpush1.xpose.msra.mxu0 0.0
    %3431 = vmatprep.subr.mxu0 0.0
    %3432 = vmatpush1.xpose.msra.mxu0 0.0
    %3433 = vmatprep.subr.mxu0 0.0
    %3434 = vmatpush1.xpose.msra.mxu0 0.0
    %3435 = vmatprep.subr.mxu0 0.0
    %3436 = vmatpush1.xpose.msra.mxu0 0.0
    %3437 = vmatprep.subr.mxu0 0.0
    %3438 = vmatpush1.xpose.msra.mxu0 0.0
    %3439 = vmatprep.subr.mxu0 0.0
    %3440 = vmatpush1.xpose.msra.mxu0 0.0
    %3441 = vmatprep.subr.mxu0 0.0
    %3442 = vmatpush1.xpose.msra.mxu0 0.0
    %3443 = vmatprep.subr.mxu0 0.0
    %3444 = vmatpush1.xpose.msra.mxu0 0.0
    %3445 = vmatprep.subr.mxu0 0.0
    %3446 = vmatpush1.xpose.msra.mxu0 0.0
    %3447 = vmatprep.subr.mxu0 0.0
    %3448 = vmatpush1.xpose.msra.mxu0 0.0
    %3449 = vmatprep.subr.mxu0 0.0
    %3450 = vmatpush1.xpose.msra.mxu0 0.0
    %3451 = vmatprep.subr.mxu0 0.0
    %3452 = vmatpush1.xpose.msra.mxu0 0.0
    %3453 = vmatprep.subr.mxu0 0.0
    %3454 = vmatpush1.xpose.msra.mxu0 0.0
    %3455 = vmatprep.subr.mxu0 0.0
    %3456 = vmatpush1.xpose.msra.mxu0 0.0
    %3457 = vmatprep.subr.mxu0 0.0
    %3458 = vmatpush1.xpose.msra.mxu0 0.0
    %3459 = vmatprep.subr.mxu0 0.0
    %3460 = vmatpush1.xpose.msra.mxu0 0.0
    %3461 = vmatprep.subr.mxu0 0.0
    %3462 = vmatpush1.xpose.msra.mxu0 0.0
    %3463 = vmatprep.subr.mxu0 0.0
    %3464 = vmatpush1.xpose.msra.mxu0 0.0
    %3465 = vmatprep.subr.mxu0 0.0
    %3466 = vmatpush1.xpose.msra.mxu0 0.0
    %3467 = vmatprep.subr.mxu0 0.0
    %3468 = vmatpush1.xpose.msra.mxu0 0.0
    %3469 = vmatprep.subr.mxu0 0.0
    %3470 = vmatpush1.xpose.msra.mxu0 0.0
    %3471 = vmatprep.mubr.f32.mxu0 0.0
    %3472 = vmatmul.mubr.f32.gmra.mrb[0].mxu0 %v3403
    %v3473 = vpop.f32.mrb[0].mxu0
    %v3474 = vadd.f32 %v60, %v3473
    %v3475 = vpop.f32.mrb[0].mxu0
    %3476 = vdwg.mxu0
    %v3477 = vsel %vm172, %v3474, -inf
    %3478 = vmax.xlane.f32.xlu0 %v3477
    %v3479 = vpop.xlane.xlu0 %3478
    %v3480 = vsub.f32 %v3474, %v3479
    %v3481 = vmul.f32 %v3480, 1.442695
    %v3482 = vpow.pop %v3481
    %v3483 = vsel %vm172, %v3482, 0.0
    %3484 = vadd.xlane.f32.xlu0 %v3483
    %v3485 = vpop.xlane.xlu0 %3484
    %v3486 = vrcp.pop %v3485
    %v3487 = vmul.f32 %v3482, %v3486
    %3488 = vrot.lane.b32.xlu0 %v2444, 64
    %v3489 = vpop.permute.xlu0 %3488
    %v3492 = vsel %vm172, %v3487, 0
    %3494 = vmatprep.subr.mxu0 0.0
    %3495 = vmatpush1.msra.mxu0 %v3489
    %3496 = vmatprep.subr.mxu0 0.0
    %3497 = vmatpush1.msra.mxu0 0.0
    %3498 = vmatprep.subr.mxu0 0.0
    %3499 = vmatpush1.msra.mxu0 0.0
    %3500 = vmatprep.subr.mxu0 0.0
    %3501 = vmatpush1.msra.mxu0 0.0
    %3502 = vmatprep.subr.mxu0 0.0
    %3503 = vmatpush1.msra.mxu0 0.0
    %3504 = vmatprep.subr.mxu0 0.0
    %3505 = vmatpush1.msra.mxu0 0.0
    %3506 = vmatprep.subr.mxu0 0.0
    %3507 = vmatpush1.msra.mxu0 0.0
    %3508 = vmatprep.subr.mxu0 0.0
    %3509 = vmatpush1.msra.mxu0 0.0
    %3510 = vmatprep.subr.mxu0 0.0
    %3511 = vmatpush1.msra.mxu0 0.0
    %3512 = vmatprep.subr.mxu0 0.0
    %3513 = vmatpush1.msra.mxu0 0.0
    %3514 = vmatprep.subr.mxu0 0.0
    %3515 = vmatpush1.msra.mxu0 0.0
    %3516 = vmatprep.subr.mxu0 0.0
    %3517 = vmatpush1.msra.mxu0 0.0
    %3518 = vmatprep.subr.mxu0 0.0
    %3519 = vmatpush1.msra.mxu0 0.0
    %3520 = vmatprep.subr.mxu0 0.0
    %3521 = vmatpush1.msra.mxu0 0.0
    %3522 = vmatprep.subr.mxu0 0.0
    %3523 = vmatpush1.msra.mxu0 0.0
    %3524 = vmatprep.subr.mxu0 0.0
    %3525 = vmatpush1.msra.mxu0 0.0
    %3526 = vmatprep.subr.mxu0 0.0
    %3527 = vmatpush1.msra.mxu0 0.0
    %3528 = vmatprep.subr.mxu0 0.0
    %3529 = vmatpush1.msra.mxu0 0.0
    %3530 = vmatprep.subr.mxu0 0.0
    %3531 = vmatpush1.msra.mxu0 0.0
    %3532 = vmatprep.subr.mxu0 0.0
    %3533 = vmatpush1.msra.mxu0 0.0
    %3534 = vmatprep.subr.mxu0 0.0
    %3535 = vmatpush1.msra.mxu0 0.0
    %3536 = vmatprep.subr.mxu0 0.0
    %3537 = vmatpush1.msra.mxu0 0.0
    %3538 = vmatprep.subr.mxu0 0.0
    %3539 = vmatpush1.msra.mxu0 0.0
    %3540 = vmatprep.subr.mxu0 0.0
    %3541 = vmatpush1.msra.mxu0 0.0
    %3542 = vmatprep.subr.mxu0 0.0
    %3543 = vmatpush1.msra.mxu0 0.0
    %3544 = vmatprep.subr.mxu0 0.0
    %3545 = vmatpush1.msra.mxu0 0.0
    %3546 = vmatprep.subr.mxu0 0.0
    %3547 = vmatpush1.msra.mxu0 0.0
    %3548 = vmatprep.subr.mxu0 0.0
    %3549 = vmatpush1.msra.mxu0 0.0
    %3550 = vmatprep.subr.mxu0 0.0
    %3551 = vmatpush1.msra.mxu0 0.0
    %3552 = vmatprep.subr.mxu0 0.0
    %3553 = vmatpush1.msra.mxu0 0.0
    %3554 = vmatprep.subr.mxu0 0.0
    %3555 = vmatpush1.msra.mxu0 0.0
    %3556 = vmatprep.subr.mxu0 0.0
    %3557 = vmatpush1.msra.mxu0 0.0
    %3558 = vmatprep.mubr.f32.mxu0 0.0
    %3559 = vmatmul.mubr.f32.gmra.mrb[0].mxu0 %v3492
    %v3560 = vpop.f32.mrb[0].mxu0
    %v3561 = vadd.f32 0.0, %v3560
    %v3562 = vpop.f32.mrb[0].mxu0
    %3563 = vdwg.mxu0
    %3564 = vrot.lane.b32.xlu0 %v2444, 120
    %v3565 = vpop.permute.xlu0 %3564
    %3566 = vrot.lane.b32.xlu0 %v2444, 88
    %v3567 = vpop.permute.xlu0 %3566
    %v3568 = vsel %vm172, %v3565, 0
    %v3570 = vsel %vm172, %v3567, 0
    %3572 = vmatprep.subr.mxu0 0.0
    %3573 = vmatpush1.xpose.msra.mxu0 %v3570
    %3574 = vmatprep.subr.mxu0 0.0
    %3575 = vmatpush1.xpose.msra.mxu0 0.0
    %3576 = vmatprep.subr.mxu0 0.0
    %3577 = vmatpush1.xpose.msra.mxu0 0.0
    %3578 = vmatprep.subr.mxu0 0.0
    %3579 = vmatpush1.xpose.msra.mxu0 0.0
    %3580 = vmatprep.subr.mxu0 0.0
    %3581 = vmatpush1.xpose.msra.mxu0 0.0
    %3582 = vmatprep.subr.mxu0 0.0
    %3583 = vmatpush1.xpose.msra.mxu0 0.0
    %3584 = vmatprep.subr.mxu0 0.0
    %3585 = vmatpush1.xpose.msra.mxu0 0.0
    %3586 = vmatprep.subr.mxu0 0.0
    %3587 = vmatpush1.xpose.msra.mxu0 0.0
    %3588 = vmatprep.subr.mxu0 0.0
    %3589 = vmatpush1.xpose.msra.mxu0 0.0
    %3590 = vmatprep.subr.mxu0 0.0
    %3591 = vmatpush1.xpose.msra.mxu0 0.0
    %3592 = vmatprep.subr.mxu0 0.0
    %3593 = vmatpush1.xpose.msra.mxu0 0.0
    %3594 = vmatprep.subr.mxu0 0.0
    %3595 = vmatpush1.xpose.msra.mxu0 0.0
    %3596 = vmatprep.subr.mxu0 0.0
    %3597 = vmatpush1.xpose.msra.mxu0 0.0
    %3598 = vmatprep.subr.mxu0 0.0
    %3599 = vmatpush1.xpose.msra.mxu0 0.0
    %3600 = vmatprep.subr.mxu0 0.0
    %3601 = vmatpush1.xpose.msra.mxu0 0.0
    %3602 = vmatprep.subr.mxu0 0.0
    %3603 = vmatpush1.xpose.msra.mxu0 0.0
    %3604 = vmatprep.subr.mxu0 0.0
    %3605 = vmatpush1.xpose.msra.mxu0 0.0
    %3606 = vmatprep.subr.mxu0 0.0
    %3607 = vmatpush1.xpose.msra.mxu0 0.0
    %3608 = vmatprep.subr.mxu0 0.0
    %3609 = vmatpush1.xpose.msra.mxu0 0.0
    %3610 = vmatprep.subr.mxu0 0.0
    %3611 = vmatpush1.xpose.msra.mxu0 0.0
    %3612 = vmatprep.subr.mxu0 0.0
    %3613 = vmatpush1.xpose.msra.mxu0 0.0
    %3614 = vmatprep.subr.mxu0 0.0
    %3615 = vmatpush1.xpose.msra.mxu0 0.0
    %3616 = vmatprep.subr.mxu0 0.0
    %3617 = vmatpush1.xpose.msra.mxu0 0.0
    %3618 = vmatprep.subr.mxu0 0.0
    %3619 = vmatpush1.xpose.msra.mxu0 0.0
    %3620 = vmatprep.subr.mxu0 0.0
    %3621 = vmatpush1.xpose.msra.mxu0 0.0
    %3622 = vmatprep.subr.mxu0 0.0
    %3623 = vmatpush1.xpose.msra.mxu0 0.0
    %3624 = vmatprep.subr.mxu0 0.0
    %3625 = vmatpush1.xpose.msra.mxu0 0.0
    %3626 = vmatprep.subr.mxu0 0.0
    %3627 = vmatpush1.xpose.msra.mxu0 0.0
    %3628 = vmatprep.subr.mxu0 0.0
    %3629 = vmatpush1.xpose.msra.mxu0 0.0
    %3630 = vmatprep.subr.mxu0 0.0
    %3631 = vmatpush1.xpose.msra.mxu0 0.0
    %3632 = vmatprep.subr.mxu0 0.0
    %3633 = vmatpush1.xpose.msra.mxu0 0.0
    %3634 = vmatprep.subr.mxu0 0.0
    %3635 = vmatpush1.xpose.msra.mxu0 0.0
    %3636 = vmatprep.mubr.f32.mxu0 0.0
    %3637 = vmatmul.mubr.f32.gmra.mrb[0].mxu0 %v3568
    %v3638 = vpop.f32.mrb[0].mxu0
    %v3639 = vadd.f32 %v60, %v3638
    %v3640 = vpop.f32.mrb[0].mxu0
    %3641 = vdwg.mxu0
    %v3642 = vsel %vm172, %v3639, -inf
    %3643 = vmax.xlane.f32.xlu0 %v3642
    %v3644 = vpop.xlane.xlu0 %3643
    %v3645 = vsub.f32 %v3639, %v3644
    %v3646 = vmul.f32 %v3645, 1.442695
    %v3647 = vpow.pop %v3646
    %v3648 = vsel %vm172, %v3647, 0.0
    %3649 = vadd.xlane.f32.xlu0 %v3648
    %v3650 = vpop.xlane.xlu0 %3649
    %v3651 = vrcp.pop %v3650
    %v3652 = vmul.f32 %v3647, %v3651
    %3653 = vrot.lane.b32.xlu0 %v2444, 56
    %v3654 = vpop.permute.xlu0 %3653
    %v3657 = vsel %vm172, %v3652, 0
    %3659 = vmatprep.subr.mxu0 0.0
    %3660 = vmatpush1.msra.mxu0 %v3654
    %3661 = vmatprep.subr.mxu0 0.0
    %3662 = vmatpush1.msra.mxu0 0.0
    %3663 = vmatprep.subr.mxu0 0.0
    %3664 = vmatpush1.msra.mxu0 0.0
    %3665 = vmatprep.subr.mxu0 0.0
    %3666 = vmatpush1.msra.mxu0 0.0
    %3667 = vmatprep.subr.mxu0 0.0
    %3668 = vmatpush1.msra.mxu0 0.0
    %3669 = vmatprep.subr.mxu0 0.0
    %3670 = vmatpush1.msra.mxu0 0.0
    %3671 = vmatprep.subr.mxu0 0.0
    %3672 = vmatpush1.msra.mxu0 0.0
    %3673 = vmatprep.subr.mxu0 0.0
    %3674 = vmatpush1.msra.mxu0 0.0
    %3675 = vmatprep.subr.mxu0 0.0
    %3676 = vmatpush1.msra.mxu0 0.0
    %3677 = vmatprep.subr.mxu0 0.0
    %3678 = vmatpush1.msra.mxu0 0.0
    %3679 = vmatprep.subr.mxu0 0.0
    %3680 = vmatpush1.msra.mxu0 0.0
    %3681 = vmatprep.subr.mxu0 0.0
    %3682 = vmatpush1.msra.mxu0 0.0
    %3683 = vmatprep.subr.mxu0 0.0
    %3684 = vmatpush1.msra.mxu0 0.0
    %3685 = vmatprep.subr.mxu0 0.0
    %3686 = vmatpush1.msra.mxu0 0.0
    %3687 = vmatprep.subr.mxu0 0.0
    %3688 = vmatpush1.msra.mxu0 0.0
    %3689 = vmatprep.subr.mxu0 0.0
    %3690 = vmatpush1.msra.mxu0 0.0
    %3691 = vmatprep.subr.mxu0 0.0
    %3692 = vmatpush1.msra.mxu0 0.0
    %3693 = vmatprep.subr.mxu0 0.0
    %3694 = vmatpush1.msra.mxu0 0.0
    %3695 = vmatprep.subr.mxu0 0.0
    %3696 = vmatpush1.msra.mxu0 0.0
    %3697 = vmatprep.subr.mxu0 0.0
    %3698 = vmatpush1.msra.mxu0 0.0
    %3699 = vmatprep.subr.mxu0 0.0
    %3700 = vmatpush1.msra.mxu0 0.0
    %3701 = vmatprep.subr.mxu0 0.0
    %3702 = vmatpush1.msra.mxu0 0.0
    %3703 = vmatprep.subr.mxu0 0.0
    %3704 = vmatpush1.msra.mxu0 0.0
    %3705 = vmatprep.subr.mxu0 0.0
    %3706 = vmatpush1.msra.mxu0 0.0
    %3707 = vmatprep.subr.mxu0 0.0
    %3708 = vmatpush1.msra.mxu0 0.0
    %3709 = vmatprep.subr.mxu0 0.0
    %3710 = vmatpush1.msra.mxu0 0.0
    %3711 = vmatprep.subr.mxu0 0.0
    %3712 = vmatpush1.msra.mxu0 0.0
    %3713 = vmatprep.subr.mxu0 0.0
    %3714 = vmatpush1.msra.mxu0 0.0
    %3715 = vmatprep.subr.mxu0 0.0
    %3716 = vmatpush1.msra.mxu0 0.0
    %3717 = vmatprep.subr.mxu0 0.0
    %3718 = vmatpush1.msra.mxu0 0.0
    %3719 = vmatprep.subr.mxu0 0.0
    %3720 = vmatpush1.msra.mxu0 0.0
    %3721 = vmatprep.subr.mxu0 0.0
    %3722 = vmatpush1.msra.mxu0 0.0
    %3723 = vmatprep.mubr.f32.mxu0 0.0
    %3724 = vmatmul.mubr.f32.gmra.mrb[0].mxu0 %v3657
    %v3725 = vpop.f32.mrb[0].mxu0
    %v3726 = vadd.f32 0.0, %v3725
    %v3727 = vpop.f32.mrb[0].mxu0
    %3728 = vdwg.mxu0
    %v3730 = vsel %vm172, %v3726, 0
    %3732 = vmatprep.subr.mxu0 0.0
    %3733 = vmatpush1.msra.mxu0 %v2343
    %3734 = vmatprep.subr.mxu0 0.0
    %3735 = vmatpush1.msra.mxu0 0.0
    %3736 = vmatprep.subr.mxu0 0.0
    %3737 = vmatpush1.msra.mxu0 0.0
    %3738 = vmatprep.subr.mxu0 0.0
    %3739 = vmatpush1.msra.mxu0 0.0
    %3740 = vmatprep.subr.mxu0 0.0
    %3741 = vmatpush1.msra.mxu0 0.0
    %3742 = vmatprep.subr.mxu0 0.0
    %3743 = vmatpush1.msra.mxu0 0.0
    %3744 = vmatprep.subr.mxu0 0.0
    %3745 = vmatpush1.msra.mxu0 0.0
    %3746 = vmatprep.subr.mxu0 0.0
    %3747 = vmatpush1.msra.mxu0 0.0
    %3748 = vmatprep.subr.mxu0 0.0
    %3749 = vmatpush1.msra.mxu0 0.0
    %3750 = vmatprep.subr.mxu0 0.0
    %3751 = vmatpush1.msra.mxu0 0.0
    %3752 = vmatprep.subr.mxu0 0.0
    %3753 = vmatpush1.msra.mxu0 0.0
    %3754 = vmatprep.subr.mxu0 0.0
    %3755 = vmatpush1.msra.mxu0 0.0
    %3756 = vmatprep.subr.mxu0 0.0
    %3757 = vmatpush1.msra.mxu0 0.0
    %3758 = vmatprep.subr.mxu0 0.0
    %3759 = vmatpush1.msra.mxu0 0.0
    %3760 = vmatprep.subr.mxu0 0.0
    %3761 = vmatpush1.msra.mxu0 0.0
    %3762 = vmatprep.subr.mxu0 0.0
    %3763 = vmatpush1.msra.mxu0 0.0
    %3764 = vmatprep.subr.mxu0 0.0
    %3765 = vmatpush1.msra.mxu0 0.0
    %3766 = vmatprep.subr.mxu0 0.0
    %3767 = vmatpush1.msra.mxu0 0.0
    %3768 = vmatprep.subr.mxu0 0.0
    %3769 = vmatpush1.msra.mxu0 0.0
    %3770 = vmatprep.subr.mxu0 0.0
    %3771 = vmatpush1.msra.mxu0 0.0
    %3772 = vmatprep.subr.mxu0 0.0
    %3773 = vmatpush1.msra.mxu0 0.0
    %3774 = vmatprep.subr.mxu0 0.0
    %3775 = vmatpush1.msra.mxu0 0.0
    %3776 = vmatprep.subr.mxu0 0.0
    %3777 = vmatpush1.msra.mxu0 0.0
    %3778 = vmatprep.subr.mxu0 0.0
    %3779 = vmatpush1.msra.mxu0 0.0
    %3780 = vmatprep.subr.mxu0 0.0
    %3781 = vmatpush1.msra.mxu0 0.0
    %3782 = vmatprep.subr.mxu0 0.0
    %3783 = vmatpush1.msra.mxu0 0.0
    %3784 = vmatprep.subr.mxu0 0.0
    %3785 = vmatpush1.msra.mxu0 0.0
    %3786 = vmatprep.subr.mxu0 0.0
    %3787 = vmatpush1.msra.mxu0 0.0
    %3788 = vmatprep.subr.mxu0 0.0
    %3789 = vmatpush1.msra.mxu0 0.0
    %3790 = vmatprep.subr.mxu0 0.0
    %3791 = vmatpush1.msra.mxu0 0.0
    %3792 = vmatprep.subr.mxu0 0.0
    %3793 = vmatpush1.msra.mxu0 0.0
    %3794 = vmatprep.subr.mxu0 0.0
    %3795 = vmatpush1.msra.mxu0 0.0
    %3796 = vmatprep.mubr.f32.mxu0 0.0
    %3797 = vmatmul.mubr.f32.gmra.mrb[0].mxu0 %v3730
    %v3798 = vpop.f32.mrb[0].mxu0
    %v3799 = vadd.f32 0.0, %v3798
    %v3800 = vpop.f32.mrb[0].mxu0
    %3801 = vdwg.mxu0
    %v3803 = vsel %vm172, %v3561, 0
    %3805 = vmatprep.subr.mxu0 0.0
    %3806 = vmatpush1.msra.mxu0 %v2342
    %3807 = vmatprep.subr.mxu0 0.0
    %3808 = vmatpush1.msra.mxu0 0.0
    %3809 = vmatprep.subr.mxu0 0.0
    %3810 = vmatpush1.msra.mxu0 0.0
    %3811 = vmatprep.subr.mxu0 0.0
    %3812 = vmatpush1.msra.mxu0 0.0
    %3813 = vmatprep.subr.mxu0 0.0
    %3814 = vmatpush1.msra.mxu0 0.0
    %3815 = vmatprep.subr.mxu0 0.0
    %3816 = vmatpush1.msra.mxu0 0.0
    %3817 = vmatprep.subr.mxu0 0.0
    %3818 = vmatpush1.msra.mxu0 0.0
    %3819 = vmatprep.subr.mxu0 0.0
    %3820 = vmatpush1.msra.mxu0 0.0
    %3821 = vmatprep.subr.mxu0 0.0
    %3822 = vmatpush1.msra.mxu0 0.0
    %3823 = vmatprep.subr.mxu0 0.0
    %3824 = vmatpush1.msra.mxu0 0.0
    %3825 = vmatprep.subr.mxu0 0.0
    %3826 = vmatpush1.msra.mxu0 0.0
    %3827 = vmatprep.subr.mxu0 0.0
    %3828 = vmatpush1.msra.mxu0 0.0
    %3829 = vmatprep.subr.mxu0 0.0
    %3830 = vmatpush1.msra.mxu0 0.0
    %3831 = vmatprep.subr.mxu0 0.0
    %3832 = vmatpush1.msra.mxu0 0.0
    %3833 = vmatprep.subr.mxu0 0.0
    %3834 = vmatpush1.msra.mxu0 0.0
    %3835 = vmatprep.subr.mxu0 0.0
    %3836 = vmatpush1.msra.mxu0 0.0
    %3837 = vmatprep.subr.mxu0 0.0
    %3838 = vmatpush1.msra.mxu0 0.0
    %3839 = vmatprep.subr.mxu0 0.0
    %3840 = vmatpush1.msra.mxu0 0.0
    %3841 = vmatprep.subr.mxu0 0.0
    %3842 = vmatpush1.msra.mxu0 0.0
    %3843 = vmatprep.subr.mxu0 0.0
    %3844 = vmatpush1.msra.mxu0 0.0
    %3845 = vmatprep.subr.mxu0 0.0
    %3846 = vmatpush1.msra.mxu0 0.0
    %3847 = vmatprep.subr.mxu0 0.0
    %3848 = vmatpush1.msra.mxu0 0.0
    %3849 = vmatprep.subr.mxu0 0.0
    %3850 = vmatpush1.msra.mxu0 0.0
    %3851 = vmatprep.subr.mxu0 0.0
    %3852 = vmatpush1.msra.mxu0 0.0
    %3853 = vmatprep.subr.mxu0 0.0
    %3854 = vmatpush1.msra.mxu0 0.0
    %3855 = vmatprep.subr.mxu0 0.0
    %3856 = vmatpush1.msra.mxu0 0.0
    %3857 = vmatprep.subr.mxu0 0.0
    %3858 = vmatpush1.msra.mxu0 0.0
    %3859 = vmatprep.subr.mxu0 0.0
    %3860 = vmatpush1.msra.mxu0 0.0
    %3861 = vmatprep.subr.mxu0 0.0
    %3862 = vmatpush1.msra.mxu0 0.0
    %3863 = vmatprep.subr.mxu0 0.0
    %3864 = vmatpush1.msra.mxu0 0.0
    %3865 = vmatprep.subr.mxu0 0.0
    %3866 = vmatpush1.msra.mxu0 0.0
    %3867 = vmatprep.subr.mxu0 0.0
    %3868 = vmatpush1.msra.mxu0 0.0
    %3869 = vmatprep.mubr.f32.mxu0 0.0
    %3870 = vmatmul.mubr.f32.gmra.mrb[0].mxu0 %v3803
    %v3871 = vpop.f32.mrb[0].mxu0
    %v3872 = vadd.f32 %v3799, %v3871
    %v3873 = vpop.f32.mrb[0].mxu0
    %3874 = vdwg.mxu0
    %3875 = vrot.lane.b32.xlu0 %v2444, 112
    %v3876 = vpop.permute.xlu0 %3875
    %3877 = vrot.lane.b32.xlu0 %v2444, 80
    %v3878 = vpop.permute.xlu0 %3877
    %v3879 = vsel %vm172, %v3876, 0
    %v3881 = vsel %vm172, %v3878, 0
    %3883 = vmatprep.subr.mxu0 0.0
    %3884 = vmatpush1.xpose.msra.mxu0 %v3881
    %3885 = vmatprep.subr.mxu0 0.0
    %3886 = vmatpush1.xpose.msra.mxu0 0.0
    %3887 = vmatprep.subr.mxu0 0.0
    %3888 = vmatpush1.xpose.msra.mxu0 0.0
    %3889 = vmatprep.subr.mxu0 0.0
    %3890 = vmatpush1.xpose.msra.mxu0 0.0
    %3891 = vmatprep.subr.mxu0 0.0
    %3892 = vmatpush1.xpose.msra.mxu0 0.0
    %3893 = vmatprep.subr.mxu0 0.0
    %3894 = vmatpush1.xpose.msra.mxu0 0.0
    %3895 = vmatprep.subr.mxu0 0.0
    %3896 = vmatpush1.xpose.msra.mxu0 0.0
    %3897 = vmatprep.subr.mxu0 0.0
    %3898 = vmatpush1.xpose.msra.mxu0 0.0
    %3899 = vmatprep.subr.mxu0 0.0
    %3900 = vmatpush1.xpose.msra.mxu0 0.0
    %3901 = vmatprep.subr.mxu0 0.0
    %3902 = vmatpush1.xpose.msra.mxu0 0.0
    %3903 = vmatprep.subr.mxu0 0.0
    %3904 = vmatpush1.xpose.msra.mxu0 0.0
    %3905 = vmatprep.subr.mxu0 0.0
    %3906 = vmatpush1.xpose.msra.mxu0 0.0
    %3907 = vmatprep.subr.mxu0 0.0
    %3908 = vmatpush1.xpose.msra.mxu0 0.0
    %3909 = vmatprep.subr.mxu0 0.0
    %3910 = vmatpush1.xpose.msra.mxu0 0.0
    %3911 = vmatprep.subr.mxu0 0.0
    %3912 = vmatpush1.xpose.msra.mxu0 0.0
    %3913 = vmatprep.subr.mxu0 0.0
    %3914 = vmatpush1.xpose.msra.mxu0 0.0
    %3915 = vmatprep.subr.mxu0 0.0
    %3916 = vmatpush1.xpose.msra.mxu0 0.0
    %3917 = vmatprep.subr.mxu0 0.0
    %3918 = vmatpush1.xpose.msra.mxu0 0.0
    %3919 = vmatprep.subr.mxu0 0.0
    %3920 = vmatpush1.xpose.msra.mxu0 0.0
    %3921 = vmatprep.subr.mxu0 0.0
    %3922 = vmatpush1.xpose.msra.mxu0 0.0
    %3923 = vmatprep.subr.mxu0 0.0
    %3924 = vmatpush1.xpose.msra.mxu0 0.0
    %3925 = vmatprep.subr.mxu0 0.0
    %3926 = vmatpush1.xpose.msra.mxu0 0.0
    %3927 = vmatprep.subr.mxu0 0.0
    %3928 = vmatpush1.xpose.msra.mxu0 0.0
    %3929 = vmatprep.subr.mxu0 0.0
    %3930 = vmatpush1.xpose.msra.mxu0 0.0
    %3931 = vmatprep.subr.mxu0 0.0
    %3932 = vmatpush1.xpose.msra.mxu0 0.0
    %3933 = vmatprep.subr.mxu0 0.0
    %3934 = vmatpush1.xpose.msra.mxu0 0.0
    %3935 = vmatprep.subr.mxu0 0.0
    %3936 = vmatpush1.xpose.msra.mxu0 0.0
    %3937 = vmatprep.subr.mxu0 0.0
    %3938 = vmatpush1.xpose.msra.mxu0 0.0
    %3939 = vmatprep.subr.mxu0 0.0
    %3940 = vmatpush1.xpose.msra.mxu0 0.0
    %3941 = vmatprep.subr.mxu0 0.0
    %3942 = vmatpush1.xpose.msra.mxu0 0.0
    %3943 = vmatprep.subr.mxu0 0.0
    %3944 = vmatpush1.xpose.msra.mxu0 0.0
    %3945 = vmatprep.subr.mxu0 0.0
    %3946 = vmatpush1.xpose.msra.mxu0 0.0
    %3947 = vmatprep.mubr.f32.mxu0 0.0
    %3948 = vmatmul.mubr.f32.gmra.mrb[0].mxu0 %v3879
    %v3949 = vpop.f32.mrb[0].mxu0
    %v3950 = vadd.f32 %v60, %v3949
    %v3951 = vpop.f32.mrb[0].mxu0
    %3952 = vdwg.mxu0
    %v3953 = vsel %vm172, %v3950, -inf
    %3954 = vmax.xlane.f32.xlu0 %v3953
    %v3955 = vpop.xlane.xlu0 %3954
    %v3956 = vsub.f32 %v3950, %v3955
    %v3957 = vmul.f32 %v3956, 1.442695
    %v3958 = vpow.pop %v3957
    %v3959 = vsel %vm172, %v3958, 0.0
    %3960 = vadd.xlane.f32.xlu0 %v3959
    %v3961 = vpop.xlane.xlu0 %3960
    %v3962 = vrcp.pop %v3961
    %v3963 = vmul.f32 %v3958, %v3962
    %3964 = vrot.lane.b32.xlu0 %v2444, 48
    %v3965 = vpop.permute.xlu0 %3964
    %v3968 = vsel %vm172, %v3963, 0
    %3970 = vmatprep.subr.mxu0 0.0
    %3971 = vmatpush1.msra.mxu0 %v3965
    %3972 = vmatprep.subr.mxu0 0.0
    %3973 = vmatpush1.msra.mxu0 0.0
    %3974 = vmatprep.subr.mxu0 0.0
    %3975 = vmatpush1.msra.mxu0 0.0
    %3976 = vmatprep.subr.mxu0 0.0
    %3977 = vmatpush1.msra.mxu0 0.0
    %3978 = vmatprep.subr.mxu0 0.0
    %3979 = vmatpush1.msra.mxu0 0.0
    %3980 = vmatprep.subr.mxu0 0.0
    %3981 = vmatpush1.msra.mxu0 0.0
    %3982 = vmatprep.subr.mxu0 0.0
    %3983 = vmatpush1.msra.mxu0 0.0
    %3984 = vmatprep.subr.mxu0 0.0
    %3985 = vmatpush1.msra.mxu0 0.0
    %3986 = vmatprep.subr.mxu0 0.0
    %3987 = vmatpush1.msra.mxu0 0.0
    %3988 = vmatprep.subr.mxu0 0.0
    %3989 = vmatpush1.msra.mxu0 0.0
    %3990 = vmatprep.subr.mxu0 0.0
    %3991 = vmatpush1.msra.mxu0 0.0
    %3992 = vmatprep.subr.mxu0 0.0
    %3993 = vmatpush1.msra.mxu0 0.0
    %3994 = vmatprep.subr.mxu0 0.0
    %3995 = vmatpush1.msra.mxu0 0.0
    %3996 = vmatprep.subr.mxu0 0.0
    %3997 = vmatpush1.msra.mxu0 0.0
    %3998 = vmatprep.subr.mxu0 0.0
    %3999 = vmatpush1.msra.mxu0 0.0
    %4000 = vmatprep.subr.mxu0 0.0
    %4001 = vmatpush1.msra.mxu0 0.0
    %4002 = vmatprep.subr.mxu0 0.0
    %4003 = vmatpush1.msra.mxu0 0.0
    %4004 = vmatprep.subr.mxu0 0.0
    %4005 = vmatpush1.msra.mxu0 0.0
    %4006 = vmatprep.subr.mxu0 0.0
    %4007 = vmatpush1.msra.mxu0 0.0
    %4008 = vmatprep.subr.mxu0 0.0
    %4009 = vmatpush1.msra.mxu0 0.0
    %4010 = vmatprep.subr.mxu0 0.0
    %4011 = vmatpush1.msra.mxu0 0.0
    %4012 = vmatprep.subr.mxu0 0.0
    %4013 = vmatpush1.msra.mxu0 0.0
    %4014 = vmatprep.subr.mxu0 0.0
    %4015 = vmatpush1.msra.mxu0 0.0
    %4016 = vmatprep.subr.mxu0 0.0
    %4017 = vmatpush1.msra.mxu0 0.0
    %4018 = vmatprep.subr.mxu0 0.0
    %4019 = vmatpush1.msra.mxu0 0.0
    %4020 = vmatprep.subr.mxu0 0.0
    %4021 = vmatpush1.msra.mxu0 0.0
    %4022 = vmatprep.subr.mxu0 0.0
    %4023 = vmatpush1.msra.mxu0 0.0
    %4024 = vmatprep.subr.mxu0 0.0
    %4025 = vmatpush1.msra.mxu0 0.0
    %4026 = vmatprep.subr.mxu0 0.0
    %4027 = vmatpush1.msra.mxu0 0.0
    %4028 = vmatprep.subr.mxu0 0.0
    %4029 = vmatpush1.msra.mxu0 0.0
    %4030 = vmatprep.subr.mxu0 0.0
    %4031 = vmatpush1.msra.mxu0 0.0
    %4032 = vmatprep.subr.mxu0 0.0
    %4033 = vmatpush1.msra.mxu0 0.0
    %4034 = vmatprep.mubr.f32.mxu0 0.0
    %4035 = vmatmul.mubr.f32.gmra.mrb[0].mxu0 %v3968
    %v4036 = vpop.f32.mrb[0].mxu0
    %v4037 = vadd.f32 0.0, %v4036
    %v4038 = vpop.f32.mrb[0].mxu0
    %4039 = vdwg.mxu0
    %v4041 = vsel %vm172, %v4037, 0
    %4043 = vmatprep.subr.mxu0 0.0
    %4044 = vmatpush1.msra.mxu0 %v2344
    %4045 = vmatprep.subr.mxu0 0.0
    %4046 = vmatpush1.msra.mxu0 0.0
    %4047 = vmatprep.subr.mxu0 0.0
    %4048 = vmatpush1.msra.mxu0 0.0
    %4049 = vmatprep.subr.mxu0 0.0
    %4050 = vmatpush1.msra.mxu0 0.0
    %4051 = vmatprep.subr.mxu0 0.0
    %4052 = vmatpush1.msra.mxu0 0.0
    %4053 = vmatprep.subr.mxu0 0.0
    %4054 = vmatpush1.msra.mxu0 0.0
    %4055 = vmatprep.subr.mxu0 0.0
    %4056 = vmatpush1.msra.mxu0 0.0
    %4057 = vmatprep.subr.mxu0 0.0
    %4058 = vmatpush1.msra.mxu0 0.0
    %4059 = vmatprep.subr.mxu0 0.0
    %4060 = vmatpush1.msra.mxu0 0.0
    %4061 = vmatprep.subr.mxu0 0.0
    %4062 = vmatpush1.msra.mxu0 0.0
    %4063 = vmatprep.subr.mxu0 0.0
    %4064 = vmatpush1.msra.mxu0 0.0
    %4065 = vmatprep.subr.mxu0 0.0
    %4066 = vmatpush1.msra.mxu0 0.0
    %4067 = vmatprep.subr.mxu0 0.0
    %4068 = vmatpush1.msra.mxu0 0.0
    %4069 = vmatprep.subr.mxu0 0.0
    %4070 = vmatpush1.msra.mxu0 0.0
    %4071 = vmatprep.subr.mxu0 0.0
    %4072 = vmatpush1.msra.mxu0 0.0
    %4073 = vmatprep.subr.mxu0 0.0
    %4074 = vmatpush1.msra.mxu0 0.0
    %4075 = vmatprep.subr.mxu0 0.0
    %4076 = vmatpush1.msra.mxu0 0.0
    %4077 = vmatprep.subr.mxu0 0.0
    %4078 = vmatpush1.msra.mxu0 0.0
    %4079 = vmatprep.subr.mxu0 0.0
    %4080 = vmatpush1.msra.mxu0 0.0
    %4081 = vmatprep.subr.mxu0 0.0
    %4082 = vmatpush1.msra.mxu0 0.0
    %4083 = vmatprep.subr.mxu0 0.0
    %4084 = vmatpush1.msra.mxu0 0.0
    %4085 = vmatprep.subr.mxu0 0.0
    %4086 = vmatpush1.msra.mxu0 0.0
    %4087 = vmatprep.subr.mxu0 0.0
    %4088 = vmatpush1.msra.mxu0 0.0
    %4089 = vmatprep.subr.mxu0 0.0
    %4090 = vmatpush1.msra.mxu0 0.0
    %4091 = vmatprep.subr.mxu0 0.0
    %4092 = vmatpush1.msra.mxu0 0.0
    %4093 = vmatprep.subr.mxu0 0.0
    %4094 = vmatpush1.msra.mxu0 0.0
    %4095 = vmatprep.subr.mxu0 0.0
    %4096 = vmatpush1.msra.mxu0 0.0
    %4097 = vmatprep.subr.mxu0 0.0
    %4098 = vmatpush1.msra.mxu0 0.0
    %4099 = vmatprep.subr.mxu0 0.0
    %4100 = vmatpush1.msra.mxu0 0.0
    %4101 = vmatprep.subr.mxu0 0.0
    %4102 = vmatpush1.msra.mxu0 0.0
    %4103 = vmatprep.subr.mxu0 0.0
    %4104 = vmatpush1.msra.mxu0 0.0
    %4105 = vmatprep.subr.mxu0 0.0
    %4106 = vmatpush1.msra.mxu0 0.0
    %4107 = vmatprep.mubr.f32.mxu0 0.0
    %4108 = vmatmul.mubr.f32.gmra.mrb[0].mxu0 %v4041
    %v4109 = vpop.f32.mrb[0].mxu0
    %v4110 = vadd.f32 0.0, %v4109
    %v4111 = vpop.f32.mrb[0].mxu0
    %4112 = vdwg.mxu0
    %v4113 = vadd.f32 %v3872, %v4110
    %4114 = vrot.lane.b32.xlu0 %v2444, 104
    %v4115 = vpop.permute.xlu0 %4114
    %4116 = vrot.lane.b32.xlu0 %v2444, 72
    %v4117 = vpop.permute.xlu0 %4116
    %v4118 = vsel %vm172, %v4115, 0
    %v4120 = vsel %vm172, %v4117, 0
    %4122 = vmatprep.subr.mxu0 0.0
    %4123 = vmatpush1.xpose.msra.mxu0 %v4120
    %4124 = vmatprep.subr.mxu0 0.0
    %4125 = vmatpush1.xpose.msra.mxu0 0.0
    %4126 = vmatprep.subr.mxu0 0.0
    %4127 = vmatpush1.xpose.msra.mxu0 0.0
    %4128 = vmatprep.subr.mxu0 0.0
    %4129 = vmatpush1.xpose.msra.mxu0 0.0
    %4130 = vmatprep.subr.mxu0 0.0
    %4131 = vmatpush1.xpose.msra.mxu0 0.0
    %4132 = vmatprep.subr.mxu0 0.0
    %4133 = vmatpush1.xpose.msra.mxu0 0.0
    %4134 = vmatprep.subr.mxu0 0.0
    %4135 = vmatpush1.xpose.msra.mxu0 0.0
    %4136 = vmatprep.subr.mxu0 0.0
    %4137 = vmatpush1.xpose.msra.mxu0 0.0
    %4138 = vmatprep.subr.mxu0 0.0
    %4139 = vmatpush1.xpose.msra.mxu0 0.0
    %4140 = vmatprep.subr.mxu0 0.0
    %4141 = vmatpush1.xpose.msra.mxu0 0.0
    %4142 = vmatprep.subr.mxu0 0.0
    %4143 = vmatpush1.xpose.msra.mxu0 0.0
    %4144 = vmatprep.subr.mxu0 0.0
    %4145 = vmatpush1.xpose.msra.mxu0 0.0
    %4146 = vmatprep.subr.mxu0 0.0
    %4147 = vmatpush1.xpose.msra.mxu0 0.0
    %4148 = vmatprep.subr.mxu0 0.0
    %4149 = vmatpush1.xpose.msra.mxu0 0.0
    %4150 = vmatprep.subr.mxu0 0.0
    %4151 = vmatpush1.xpose.msra.mxu0 0.0
    %4152 = vmatprep.subr.mxu0 0.0
    %4153 = vmatpush1.xpose.msra.mxu0 0.0
    %4154 = vmatprep.subr.mxu0 0.0
    %4155 = vmatpush1.xpose.msra.mxu0 0.0
    %4156 = vmatprep.subr.mxu0 0.0
    %4157 = vmatpush1.xpose.msra.mxu0 0.0
    %4158 = vmatprep.subr.mxu0 0.0
    %4159 = vmatpush1.xpose.msra.mxu0 0.0
    %4160 = vmatprep.subr.mxu0 0.0
    %4161 = vmatpush1.xpose.msra.mxu0 0.0
    %4162 = vmatprep.subr.mxu0 0.0
    %4163 = vmatpush1.xpose.msra.mxu0 0.0
    %4164 = vmatprep.subr.mxu0 0.0
    %4165 = vmatpush1.xpose.msra.mxu0 0.0
    %4166 = vmatprep.subr.mxu0 0.0
    %4167 = vmatpush1.xpose.msra.mxu0 0.0
    %4168 = vmatprep.subr.mxu0 0.0
    %4169 = vmatpush1.xpose.msra.mxu0 0.0
    %4170 = vmatprep.subr.mxu0 0.0
    %4171 = vmatpush1.xpose.msra.mxu0 0.0
    %4172 = vmatprep.subr.mxu0 0.0
    %4173 = vmatpush1.xpose.msra.mxu0 0.0
    %4174 = vmatprep.subr.mxu0 0.0
    %4175 = vmatpush1.xpose.msra.mxu0 0.0
    %4176 = vmatprep.subr.mxu0 0.0
    %4177 = vmatpush1.xpose.msra.mxu0 0.0
    %4178 = vmatprep.subr.mxu0 0.0
    %4179 = vmatpush1.xpose.msra.mxu0 0.0
    %4180 = vmatprep.subr.mxu0 0.0
    %4181 = vmatpush1.xpose.msra.mxu0 0.0
    %4182 = vmatprep.subr.mxu0 0.0
    %4183 = vmatpush1.xpose.msra.mxu0 0.0
    %4184 = vmatprep.subr.mxu0 0.0
    %4185 = vmatpush1.xpose.msra.mxu0 0.0
    %4186 = vmatprep.mubr.f32.mxu0 0.0
    %4187 = vmatmul.mubr.f32.gmra.mrb[0].mxu0 %v4118
    %v4188 = vpop.f32.mrb[0].mxu0
    %v4189 = vadd.f32 %v60, %v4188
    %v4190 = vpop.f32.mrb[0].mxu0
    %4191 = vdwg.mxu0
    %v4192 = vsel %vm172, %v4189, -inf
    %4193 = vmax.xlane.f32.xlu0 %v4192
    %v4194 = vpop.xlane.xlu0 %4193
    %v4195 = vsub.f32 %v4189, %v4194
    %v4196 = vmul.f32 %v4195, 1.442695
    %v4197 = vpow.pop %v4196
    %v4198 = vsel %vm172, %v4197, 0.0
    %4199 = vadd.xlane.f32.xlu0 %v4198
    %v4200 = vpop.xlane.xlu0 %4199
    %v4201 = vrcp.pop %v4200
    %v4202 = vmul.f32 %v4197, %v4201
    %4203 = vrot.lane.b32.xlu0 %v2444, 40
    %v4204 = vpop.permute.xlu0 %4203
    %v4207 = vsel %vm172, %v4202, 0
    %4209 = vmatprep.subr.mxu0 0.0
    %4210 = vmatpush1.msra.mxu0 %v4204
    %4211 = vmatprep.subr.mxu0 0.0
    %4212 = vmatpush1.msra.mxu0 0.0
    %4213 = vmatprep.subr.mxu0 0.0
    %4214 = vmatpush1.msra.mxu0 0.0
    %4215 = vmatprep.subr.mxu0 0.0
    %4216 = vmatpush1.msra.mxu0 0.0
    %4217 = vmatprep.subr.mxu0 0.0
    %4218 = vmatpush1.msra.mxu0 0.0
    %4219 = vmatprep.subr.mxu0 0.0
    %4220 = vmatpush1.msra.mxu0 0.0
    %4221 = vmatprep.subr.mxu0 0.0
    %4222 = vmatpush1.msra.mxu0 0.0
    %4223 = vmatprep.subr.mxu0 0.0
    %4224 = vmatpush1.msra.mxu0 0.0
    %4225 = vmatprep.subr.mxu0 0.0
    %4226 = vmatpush1.msra.mxu0 0.0
    %4227 = vmatprep.subr.mxu0 0.0
    %4228 = vmatpush1.msra.mxu0 0.0
    %4229 = vmatprep.subr.mxu0 0.0
    %4230 = vmatpush1.msra.mxu0 0.0
    %4231 = vmatprep.subr.mxu0 0.0
    %4232 = vmatpush1.msra.mxu0 0.0
    %4233 = vmatprep.subr.mxu0 0.0
    %4234 = vmatpush1.msra.mxu0 0.0
    %4235 = vmatprep.subr.mxu0 0.0
    %4236 = vmatpush1.msra.mxu0 0.0
    %4237 = vmatprep.subr.mxu0 0.0
    %4238 = vmatpush1.msra.mxu0 0.0
    %4239 = vmatprep.subr.mxu0 0.0
    %4240 = vmatpush1.msra.mxu0 0.0
    %4241 = vmatprep.subr.mxu0 0.0
    %4242 = vmatpush1.msra.mxu0 0.0
    %4243 = vmatprep.subr.mxu0 0.0
    %4244 = vmatpush1.msra.mxu0 0.0
    %4245 = vmatprep.subr.mxu0 0.0
    %4246 = vmatpush1.msra.mxu0 0.0
    %4247 = vmatprep.subr.mxu0 0.0
    %4248 = vmatpush1.msra.mxu0 0.0
    %4249 = vmatprep.subr.mxu0 0.0
    %4250 = vmatpush1.msra.mxu0 0.0
    %4251 = vmatprep.subr.mxu0 0.0
    %4252 = vmatpush1.msra.mxu0 0.0
    %4253 = vmatprep.subr.mxu0 0.0
    %4254 = vmatpush1.msra.mxu0 0.0
    %4255 = vmatprep.subr.mxu0 0.0
    %4256 = vmatpush1.msra.mxu0 0.0
    %4257 = vmatprep.subr.mxu0 0.0
    %4258 = vmatpush1.msra.mxu0 0.0
    %4259 = vmatprep.subr.mxu0 0.0
    %4260 = vmatpush1.msra.mxu0 0.0
    %4261 = vmatprep.subr.mxu0 0.0
    %4262 = vmatpush1.msra.mxu0 0.0
    %4263 = vmatprep.subr.mxu0 0.0
    %4264 = vmatpush1.msra.mxu0 0.0
    %4265 = vmatprep.subr.mxu0 0.0
    %4266 = vmatpush1.msra.mxu0 0.0
    %4267 = vmatprep.subr.mxu0 0.0
    %4268 = vmatpush1.msra.mxu0 0.0
    %4269 = vmatprep.subr.mxu0 0.0
    %4270 = vmatpush1.msra.mxu0 0.0
    %4271 = vmatprep.subr.mxu0 0.0
    %4272 = vmatpush1.msra.mxu0 0.0
    %4273 = vmatprep.mubr.f32.mxu0 0.0
    %4274 = vmatmul.mubr.f32.gmra.mrb[0].mxu0 %v4207
    %v4275 = vpop.f32.mrb[0].mxu0
    %v4276 = vadd.f32 0.0, %v4275
    %v4277 = vpop.f32.mrb[0].mxu0
    %4278 = vdwg.mxu0
    %v4280 = vsel %vm172, %v4276, 0
    %4282 = vmatprep.subr.mxu0 0.0
    %4283 = vmatpush1.msra.mxu0 %v2345
    %4284 = vmatprep.subr.mxu0 0.0
    %4285 = vmatpush1.msra.mxu0 0.0
    %4286 = vmatprep.subr.mxu0 0.0
    %4287 = vmatpush1.msra.mxu0 0.0
    %4288 = vmatprep.subr.mxu0 0.0
    %4289 = vmatpush1.msra.mxu0 0.0
    %4290 = vmatprep.subr.mxu0 0.0
    %4291 = vmatpush1.msra.mxu0 0.0
    %4292 = vmatprep.subr.mxu0 0.0
    %4293 = vmatpush1.msra.mxu0 0.0
    %4294 = vmatprep.subr.mxu0 0.0
    %4295 = vmatpush1.msra.mxu0 0.0
    %4296 = vmatprep.subr.mxu0 0.0
    %4297 = vmatpush1.msra.mxu0 0.0
    %4298 = vmatprep.subr.mxu0 0.0
    %4299 = vmatpush1.msra.mxu0 0.0
    %4300 = vmatprep.subr.mxu0 0.0
    %4301 = vmatpush1.msra.mxu0 0.0
    %4302 = vmatprep.subr.mxu0 0.0
    %4303 = vmatpush1.msra.mxu0 0.0
    %4304 = vmatprep.subr.mxu0 0.0
    %4305 = vmatpush1.msra.mxu0 0.0
    %4306 = vmatprep.subr.mxu0 0.0
    %4307 = vmatpush1.msra.mxu0 0.0
    %4308 = vmatprep.subr.mxu0 0.0
    %4309 = vmatpush1.msra.mxu0 0.0
    %4310 = vmatprep.subr.mxu0 0.0
    %4311 = vmatpush1.msra.mxu0 0.0
    %4312 = vmatprep.subr.mxu0 0.0
    %4313 = vmatpush1.msra.mxu0 0.0
    %4314 = vmatprep.subr.mxu0 0.0
    %4315 = vmatpush1.msra.mxu0 0.0
    %4316 = vmatprep.subr.mxu0 0.0
    %4317 = vmatpush1.msra.mxu0 0.0
    %4318 = vmatprep.subr.mxu0 0.0
    %4319 = vmatpush1.msra.mxu0 0.0
    %4320 = vmatprep.subr.mxu0 0.0
    %4321 = vmatpush1.msra.mxu0 0.0
    %4322 = vmatprep.subr.mxu0 0.0
    %4323 = vmatpush1.msra.mxu0 0.0
    %4324 = vmatprep.subr.mxu0 0.0
    %4325 = vmatpush1.msra.mxu0 0.0
    %4326 = vmatprep.subr.mxu0 0.0
    %4327 = vmatpush1.msra.mxu0 0.0
    %4328 = vmatprep.subr.mxu0 0.0
    %4329 = vmatpush1.msra.mxu0 0.0
    %4330 = vmatprep.subr.mxu0 0.0
    %4331 = vmatpush1.msra.mxu0 0.0
    %4332 = vmatprep.subr.mxu0 0.0
    %4333 = vmatpush1.msra.mxu0 0.0
    %4334 = vmatprep.subr.mxu0 0.0
    %4335 = vmatpush1.msra.mxu0 0.0
    %4336 = vmatprep.subr.mxu0 0.0
    %4337 = vmatpush1.msra.mxu0 0.0
    %4338 = vmatprep.subr.mxu0 0.0
    %4339 = vmatpush1.msra.mxu0 0.0
    %4340 = vmatprep.subr.mxu0 0.0
    %4341 = vmatpush1.msra.mxu0 0.0
    %4342 = vmatprep.subr.mxu0 0.0
    %4343 = vmatpush1.msra.mxu0 0.0
    %4344 = vmatprep.subr.mxu0 0.0
    %4345 = vmatpush1.msra.mxu0 0.0
    %4346 = vmatprep.mubr.f32.mxu0 0.0
    %4347 = vmatmul.mubr.f32.gmra.mrb[0].mxu0 %v4280
    %v4348 = vpop.f32.mrb[0].mxu0
    %v4349 = vadd.f32 0.0, %v4348
    %v4350 = vpop.f32.mrb[0].mxu0
    %4351 = vdwg.mxu0
    %v4352 = vadd.f32 %v4113, %v4349
    %v4353 = vlaneseq
    %v4354 = vshrl.u32 %v4353, 7
    %v4355 = vsub.s32 2, %v4354
    %v4356 = vrot.slane %v2361, %v4355
    %v4357 = vadd.f32 %v3399, %v4356
    %v4358 = vadd.f32 %v4352, %v4356
    %v4359 = vadd.f32 %v2334, %v4357
    %v4360 = vadd.f32 %v2335, %v4358
    %v4361 = vsel %vm87, %v4359, 0.0
    %4362 = vadd.xlane.f32.xlu0 %v4361
    %v4363 = vpop.xlane.xlu0 %4362
    %v4364 = vsel %vm87, %v4360, 0.0
    %4365 = vadd.xlane.f32.xlu0 %v4364
    %v4366 = vpop.xlane.xlu0 %4365
    %v4367 = vmul.f32 %v4363, %v2090
    %v4368 = vmul.f32 %v4366, %v2090
    %v4369 = vsub.f32 %v4359, %v4367
    %v4370 = vsub.f32 %v4360, %v4368
    %v4371 = vmul.f32 %v4369, %v4369
    %v4372 = vmul.f32 %v4370, %v4370
    %v4373 = vsel %vm87, %v4371, 0.0
    %4374 = vadd.xlane.f32.xlu0 %v4373
    %v4375 = vpop.xlane.xlu0 %4374
    %v4376 = vsel %vm87, %v4372, 0.0
    %4377 = vadd.xlane.f32.xlu0 %v4376
    %v4378 = vpop.xlane.xlu0 %4377
    %v4379 = vmul.f32 %v4375, %v2090
    %v4380 = vmul.f32 %v4378, %v2090
    %v4381 = vadd.f32 %v4379, 1e-05
    %v4382 = vadd.f32 %v4380, 1e-05
    %v4383 = vrsqrt.pop %v4381
    %v4384 = vrsqrt.pop %v4382
    %v4385 = vmul.f32 %v4369, %v4383
    %v4386 = vmul.f32 %v4370, %v4384
    %v4387 = vlaneseq
    %v4388 = vshrl.u32 %v4387, 7
    %v4389 = vsub.s32 3, %v4388
    %v4390 = vrot.slane %v2361, %v4389
    %v4391 = vmul.f32 %v4385, %v4390
    %v4392 = vmul.f32 %v4386, %v4390
    %v4393 = vlaneseq
    %v4394 = vshrl.u32 %v4393, 7
    %v4395 = vsub.s32 4, %v4394
    %v4396 = vrot.slane %v2361, %v4395
    %v4397 = vadd.f32 %v4391, %v4396
    %v4398 = vadd.f32 %v4392, %v4396
    %v4399 = vlaneseq
    %v4400 = vshrl.u32 %v4399, 7
    %v4401 = vsub.s32 1, %v4400
    %v4402 = vrot.slane %v2361, %v4401
    %v4404 = vsel %vm87, %v4397, 0
    %v4407 = vsel %vm87, %v4398, 0
    %4409 = vmatprep.subr.mxu0 0.0
    %4410 = vmatpush1.msra.mxu0 %v2347
    %4411 = vmatprep.subr.mxu0 0.0
    %4412 = vmatpush1.msra.mxu0 %v2348
    %4413 = vmatprep.subr.mxu0 0.0
    %4414 = vmatpush1.msra.mxu0 %v2349
    %4415 = vmatprep.subr.mxu0 0.0
    %4416 = vmatpush1.msra.mxu0 %v2350
    %4417 = vmatprep.subr.mxu0 0.0
    %4418 = vmatpush1.msra.mxu0 0.0
    %4419 = vmatprep.subr.mxu0 0.0
    %4420 = vmatpush1.msra.mxu0 0.0
    %4421 = vmatprep.subr.mxu0 0.0
    %4422 = vmatpush1.msra.mxu0 0.0
    %4423 = vmatprep.subr.mxu0 0.0
    %4424 = vmatpush1.msra.mxu0 0.0
    %4425 = vmatprep.subr.mxu0 0.0
    %4426 = vmatpush1.msra.mxu0 0.0
    %4427 = vmatprep.subr.mxu0 0.0
    %4428 = vmatpush1.msra.mxu0 0.0
    %4429 = vmatprep.subr.mxu0 0.0
    %4430 = vmatpush1.msra.mxu0 0.0
    %4431 = vmatprep.subr.mxu0 0.0
    %4432 = vmatpush1.msra.mxu0 0.0
    %4433 = vmatprep.subr.mxu0 0.0
    %4434 = vmatpush1.msra.mxu0 0.0
    %4435 = vmatprep.subr.mxu0 0.0
    %4436 = vmatpush1.msra.mxu0 0.0
    %4437 = vmatprep.subr.mxu0 0.0
    %4438 = vmatpush1.msra.mxu0 0.0
    %4439 = vmatprep.subr.mxu0 0.0
    %4440 = vmatpush1.msra.mxu0 0.0
    %4441 = vmatprep.subr.mxu0 0.0
    %4442 = vmatpush1.msra.mxu0 0.0
    %4443 = vmatprep.subr.mxu0 0.0
    %4444 = vmatpush1.msra.mxu0 0.0
    %4445 = vmatprep.subr.mxu0 0.0
    %4446 = vmatpush1.msra.mxu0 0.0
    %4447 = vmatprep.subr.mxu0 0.0
    %4448 = vmatpush1.msra.mxu0 0.0
    %4449 = vmatprep.subr.mxu0 0.0
    %4450 = vmatpush1.msra.mxu0 0.0
    %4451 = vmatprep.subr.mxu0 0.0
    %4452 = vmatpush1.msra.mxu0 0.0
    %4453 = vmatprep.subr.mxu0 0.0
    %4454 = vmatpush1.msra.mxu0 0.0
    %4455 = vmatprep.subr.mxu0 0.0
    %4456 = vmatpush1.msra.mxu0 0.0
    %4457 = vmatprep.subr.mxu0 0.0
    %4458 = vmatpush1.msra.mxu0 0.0
    %4459 = vmatprep.subr.mxu0 0.0
    %4460 = vmatpush1.msra.mxu0 0.0
    %4461 = vmatprep.subr.mxu0 0.0
    %4462 = vmatpush1.msra.mxu0 0.0
    %4463 = vmatprep.subr.mxu0 0.0
    %4464 = vmatpush1.msra.mxu0 0.0
    %4465 = vmatprep.subr.mxu0 0.0
    %4466 = vmatpush1.msra.mxu0 0.0
    %4467 = vmatprep.subr.mxu0 0.0
    %4468 = vmatpush1.msra.mxu0 0.0
    %4469 = vmatprep.subr.mxu0 0.0
    %4470 = vmatpush1.msra.mxu0 0.0
    %4471 = vmatprep.subr.mxu0 0.0
    %4472 = vmatpush1.msra.mxu0 0.0
    %4473 = vmatprep.mubr.f32.mxu0 0.0
    %4474 = vmatmul.mubr.f32.gmra.mrb[0].mxu0 %v4404
    %v4475 = vpop.f32.mrb[0].mxu0
    %v4476 = vadd.f32 %v4402, %v4475
    %v4477 = vpop.f32.mrb[0].mxu0
    %4478 = vmatprep.mubr.f32.mxu0 0.0
    %4479 = vmatmul.mubr.f32.gmra.mrb[0].mxu0 %v4407
    %v4480 = vpop.f32.mrb[0].mxu0
    %v4481 = vadd.f32 %v4402, %v4480
    %v4482 = vpop.f32.mrb[0].mxu0
    %4483 = vdwg.mxu0
    %v4484 = vmax.f32 %v4476, 0.0
    %v4485 = vmax.f32 %v4481, 0.0
    %v4486 = vlaneseq
    %v4487 = vshrl.u32 %v4486, 7
    %v4488 = vsub.s32 5, %v4487
    %v4489 = vrot.slane %v2361, %v4488
    %v4491 = vsel %vm2214, %v4484, 0
    %v4494 = vsel %vm2214, %v4485, 0
    %4496 = vmatprep.subr.mxu0 0.0
    %4497 = vmatpush1.msra.mxu0 %v2352
    %4498 = vmatprep.subr.mxu0 0.0
    %4499 = vmatpush1.msra.mxu0 %v2353
    %4500 = vmatprep.subr.mxu0 0.0
    %4501 = vmatpush1.msra.mxu0 %v2354
    %4502 = vmatprep.subr.mxu0 0.0
    %4503 = vmatpush1.msra.mxu0 %v2355
    %4504 = vmatprep.subr.mxu0 0.0
    %4505 = vmatpush1.msra.mxu0 %v2356
    %4506 = vmatprep.subr.mxu0 0.0
    %4507 = vmatpush1.msra.mxu0 %v2357
    %4508 = vmatprep.subr.mxu0 0.0
    %4509 = vmatpush1.msra.mxu0 %v2358
    %4510 = vmatprep.subr.mxu0 0.0
    %4511 = vmatpush1.msra.mxu0 %v2359
    %4512 = vmatprep.subr.mxu0 0.0
    %4513 = vmatpush1.msra.mxu0 0.0
    %4514 = vmatprep.subr.mxu0 0.0
    %4515 = vmatpush1.msra.mxu0 0.0
    %4516 = vmatprep.subr.mxu0 0.0
    %4517 = vmatpush1.msra.mxu0 0.0
    %4518 = vmatprep.subr.mxu0 0.0
    %4519 = vmatpush1.msra.mxu0 0.0
    %4520 = vmatprep.subr.mxu0 0.0
    %4521 = vmatpush1.msra.mxu0 0.0
    %4522 = vmatprep.subr.mxu0 0.0
    %4523 = vmatpush1.msra.mxu0 0.0
    %4524 = vmatprep.subr.mxu0 0.0
    %4525 = vmatpush1.msra.mxu0 0.0
    %4526 = vmatprep.subr.mxu0 0.0
    %4527 = vmatpush1.msra.mxu0 0.0
    %4528 = vmatprep.subr.mxu0 0.0
    %4529 = vmatpush1.msra.mxu0 0.0
    %4530 = vmatprep.subr.mxu0 0.0
    %4531 = vmatpush1.msra.mxu0 0.0
    %4532 = vmatprep.subr.mxu0 0.0
    %4533 = vmatpush1.msra.mxu0 0.0
    %4534 = vmatprep.subr.mxu0 0.0
    %4535 = vmatpush1.msra.mxu0 0.0
    %4536 = vmatprep.subr.mxu0 0.0
    %4537 = vmatpush1.msra.mxu0 0.0
    %4538 = vmatprep.subr.mxu0 0.0
    %4539 = vmatpush1.msra.mxu0 0.0
    %4540 = vmatprep.subr.mxu0 0.0
    %4541 = vmatpush1.msra.mxu0 0.0
    %4542 = vmatprep.subr.mxu0 0.0
    %4543 = vmatpush1.msra.mxu0 0.0
    %4544 = vmatprep.subr.mxu0 0.0
    %4545 = vmatpush1.msra.mxu0 0.0
    %4546 = vmatprep.subr.mxu0 0.0
    %4547 = vmatpush1.msra.mxu0 0.0
    %4548 = vmatprep.subr.mxu0 0.0
    %4549 = vmatpush1.msra.mxu0 0.0
    %4550 = vmatprep.subr.mxu0 0.0
    %4551 = vmatpush1.msra.mxu0 0.0
    %4552 = vmatprep.subr.mxu0 0.0
    %4553 = vmatpush1.msra.mxu0 0.0
    %4554 = vmatprep.subr.mxu0 0.0
    %4555 = vmatpush1.msra.mxu0 0.0
    %4556 = vmatprep.subr.mxu0 0.0
    %4557 = vmatpush1.msra.mxu0 0.0
    %4558 = vmatprep.subr.mxu0 0.0
    %4559 = vmatpush1.msra.mxu0 0.0
    %4560 = vmatprep.mubr.f32.mxu0 0.0
    %4561 = vmatmul.mubr.f32.gmra.mrb[0].mxu0 %v4491
    %v4562 = vpop.f32.mrb[0].mxu0
    %v4563 = vadd.f32 %v4489, %v4562
    %v4564 = vpop.f32.mrb[0].mxu0
    %4565 = vmatprep.mubr.f32.mxu0 0.0
    %4566 = vmatmul.mubr.f32.gmra.mrb[0].mxu0 %v4494
    %v4567 = vpop.f32.mrb[0].mxu0
    %v4568 = vadd.f32 %v4489, %v4567
    %v4569 = vpop.f32.mrb[0].mxu0
    %4570 = vdwg.mxu0
    %v4571 = vadd.f32 %v4397, %v4563
    %v4572 = vadd.f32 %v4398, %v4568
    %v4573 = vsel %vm87, %v4571, 0.0
    %4574 = vadd.xlane.f32.xlu0 %v4573
    %v4575 = vpop.xlane.xlu0 %4574
    %v4576 = vsel %vm87, %v4572, 0.0
    %4577 = vadd.xlane.f32.xlu0 %v4576
    %v4578 = vpop.xlane.xlu0 %4577
    %v4579 = vmul.f32 %v4575, %v2090
    %v4580 = vmul.f32 %v4578, %v2090
    %v4581 = vsub.f32 %v4571, %v4579
    %v4582 = vsub.f32 %v4572, %v4580
    %v4583 = vmul.f32 %v4581, %v4581
    %v4584 = vmul.f32 %v4582, %v4582
    %v4585 = vsel %vm87, %v4583, 0.0
    %4586 = vadd.xlane.f32.xlu0 %v4585
    %v4587 = vpop.xlane.xlu0 %4586
    %v4588 = vsel %vm87, %v4584, 0.0
    %4589 = vadd.xlane.f32.xlu0 %v4588
    %v4590 = vpop.xlane.xlu0 %4589
    %v4591 = vmul.f32 %v4587, %v2090
    %v4592 = vmul.f32 %v4590, %v2090
    %v4593 = vadd.f32 %v4591, 1e-05
    %v4594 = vadd.f32 %v4592, 1e-05
    %v4595 = vrsqrt.pop %v4593
    %v4596 = vrsqrt.pop %v4594
    %v4597 = vmul.f32 %v4581, %v4595
    %v4598 = vmul.f32 %v4582, %v4596
    %v4599 = vlaneseq
    %v4600 = vshrl.u32 %v4599, 7
    %v4601 = vsub.s32 6, %v4600
    %v4602 = vrot.slane %v2361, %v4601
    %v4603 = vmul.f32 %v4597, %v4602
    %v4604 = vmul.f32 %v4598, %v4602
    %v4605 = vlaneseq
    %v4606 = vshrl.u32 %v4605, 7
    %v4607 = vsub.s32 7, %v4606
    %v4608 = vrot.slane %v2361, %v4607
    %v4609 = vadd.f32 %v4603, %v4608
    %v4610 = vadd.f32 %v4604, %v4608
    %4611 = vst.msk [vmem:[#allocation5] sm:$0xff] %vm87, %v4609
    %4612 = vst.msk [vmem:[#allocation5 + $0x8] sm:$0xff] %vm87, %v4610
    // Predicated region
    $region34: #{tpu_custom_call.1} parent=1 // pred_check
      _
    $region35: #{tpu_custom_call.1} parent=1 // pred_check_branch
      %4614 = sbr.rel (0) target = $region37
    $region36: #{tpu_custom_call.1} parent=1 // pred_region
      %s4616 = ssub.s32 256, 256
      %4617 = vsyncadd [#allocation4], %s4616
      %s4618 = sshll.u32 [#allocation5], 4
      %s4619 = int_to_ptr.vmem [resolvable:$true] %s4618
      %4624 = dma.vmem_to_hbm [thread:$0]  %s4619, 256, %s7, [#allocation4], 128, 128, 8
    $region37: #{tpu_custom_call.1} parent=1 // pred_fallthru
      _
    // Predicated region
    $region38: #{tpu_custom_call.1} parent=1 // pred_check
      _
    $region39: #{tpu_custom_call.1} parent=1 // pred_check_branch
      %4626 = sbr.rel (0) target = $region41
    $region40: #{tpu_custom_call.1} parent=1 // pred_region
      %4627 = dma.done [#allocation4], 256
    $region41: #{tpu_custom_call.1} parent=1 // pred_fallthru
      _
    %4628 = vsyncpa [#allocation3], 1
    %4629 = vsyncpa [#allocation4], 1

</llo_original>
